<compile_context>
chip_gen: v5e
topology: v5e:2x2
jax: 0.10.0
libtpu: 0.0.40
codegen_flags: <defaults>
</compile_context>

<pallas_src>
import functools
import math

import jax
import jax.numpy as jnp
from jax.experimental import pallas as pl
from jax.experimental.pallas import tpu as pltpu

# Set to jnp.bfloat16 on v6e / v7x for higher MXU throughput; accumulation stays f32.
COMPUTE_DTYPE = jnp.float32

_DIMSEM = pltpu.CompilerParams(dimension_semantics=("parallel", "parallel"))


# ---------------------------------------------------------------------------
# Helpers
# ---------------------------------------------------------------------------
def _pick_block(L, target=1024):
    """Largest row-tile (multiple of 8) dividing L, capped at `target`."""
    if L <= target or L % 8 != 0:
        return L
    bl = target - (target % 8)
    while bl >= 8:
        if L % bl == 0:
            return bl
        bl -= 8
    return L


def _const_spec(a):
    """BlockSpec that keeps a small array fully resident (constant index_map)."""
    n = a.ndim
    return pl.BlockSpec(a.shape, lambda bb, j, _n=n: (0,) * _n)


def _taps(xp_ref, bl, nl, num_taps=3):
    """Return `num_taps` shifted (bl, C) views of the padded activation for the
    current row-tile, built in-kernel (no HBM im2col)."""
    if nl == 1:                      # whole sequence in one tile: fully static path
        return [xp_ref[0, k:k + bl, :] for k in range(num_taps)]
    off = pl.multiple_of(pl.program_id(1) * bl, 8)
    win = xp_ref[0, pl.ds(off, bl + num_taps - 1), :]
    return [win[k:k + bl, :] for k in range(num_taps)]


# ---------------------------------------------------------------------------
# Kernels
# ---------------------------------------------------------------------------
def _conv3_kernel(xp_ref, w_ref, b_ref, o_ref, *, bl, nl):
    """Conv1d(k=3, pad=1) as ONE matmul: [x[q-1]|x[q]|x[q+1]] @ W(3*Cin,Cout) + b."""
    t0, t1, t2 = _taps(xp_ref, bl, nl)
    lhs = jnp.concatenate([t0, t1, t2], axis=-1)          # (bl, 3*Cin) im2col row
    acc = jnp.dot(lhs, w_ref[...], preferred_element_type=jnp.float32) + b_ref[...]
    o_ref[0, :, :] = acc.astype(o_ref.dtype)


def _resblock_kernel(xp_ref, w1_ref, b1_ref, w2_ref, b2_ref, o_ref, *, bl, nl):
    """ResidualBlock1D fully fused: out = conv1(relu(conv3(relu(x)))) + x."""
    t0, t1, t2 = _taps(xp_ref, bl, nl)
    lhs = jnp.maximum(jnp.concatenate([t0, t1, t2], axis=-1), 0.0)   # relu(x) taps
    h = jnp.dot(lhs, w1_ref[...], preferred_element_type=jnp.float32) + b1_ref[...]
    h = jnp.maximum(h, 0.0)
    out = (jnp.dot(h.astype(w2_ref.dtype), w2_ref[...],
                   preferred_element_type=jnp.float32)
           + b2_ref[...]
           + t1)                      # identity skip (in_channels == out_channels)
    o_ref[0, :, :] = out.astype(o_ref.dtype)


def _convt_kernel(xp_ref, w_ref, b_ref, o_ref, *, bl, nl, relu_out):
    """ConvTranspose1d(k=4, s=2, p=1), both phases in ONE matmul.

    w_ref is the host-built block matrix (3*Cin, 2*Cout):
        [[W3, 0 ],
         [W1, W2],
         [0 , W0]]
    so  [x[q-1]|x[q]|x[q+1]] @ w_ref = [even[q] | odd[q]]  (lane-dense output).
    """
    t_prev, t_cur, t_next = _taps(xp_ref, bl, nl)
    lhs = jnp.concatenate([t_prev, t_cur, t_next], axis=-1)
    out = jnp.dot(lhs, w_ref[...], preferred_element_type=jnp.float32) + b_ref[...]
    if relu_out:
        out = jnp.maximum(out, 0.0)
    o_ref[0, :, :] = out.astype(o_ref.dtype)


# ---------------------------------------------------------------------------
# Layer wrappers (pallas_call with row-tiled grid, resident weights)
# ---------------------------------------------------------------------------
def conv1d_k3(x, layer):
    W, b = layer                      # W: (3*Cin, Cout), b: (1, Cout)
    B, L, Cin = x.shape
    Cout = W.shape[-1]
    xp = jnp.pad(x, ((0, 0), (1, 1), (0, 0))).astype(COMPUTE_DTYPE)
    bl = _pick_block(L)
    nl = L // bl
    return pl.pallas_call(
        functools.partial(_conv3_kernel, bl=bl, nl=nl),
        grid=(B, nl),
        in_specs=[pl.BlockSpec((1, L + 2, Cin), lambda bb, j: (bb, 0, 0)),
                  _const_spec(W), _const_spec(b)],
        out_specs=pl.BlockSpec((1, bl, Cout), lambda bb, j: (bb, j, 0)),
        out_shape=jax.ShapeDtypeStruct((B, L, Cout), jnp.float32),
        compiler_params=_DIMSEM,
    )(xp, W, b)


def residual_block(x, rp):
    B, L, H = x.shape
    xp = jnp.pad(x, ((0, 0), (1, 1), (0, 0))).astype(COMPUTE_DTYPE)
    bl = _pick_block(L)
    nl = L // bl
    return pl.pallas_call(
        functools.partial(_resblock_kernel, bl=bl, nl=nl),
        grid=(B, nl),
        in_specs=[pl.BlockSpec((1, L + 2, H), lambda bb, j: (bb, 0, 0)),
                  _const_spec(rp["w1"]), _const_spec(rp["b1"]),
                  _const_spec(rp["w2"]), _const_spec(rp["b2"])],
        out_specs=pl.BlockSpec((1, bl, H), lambda bb, j: (bb, j, 0)),
        out_shape=jax.ShapeDtypeStruct((B, L, H), jnp.float32),
        compiler_params=_DIMSEM,
    )(xp, rp["w1"], rp["b1"], rp["w2"], rp["b2"])


def conv_transpose1d_k4s2p1(x, layer, relu_out=False):
    W, b = layer                      # W: (3*Cin, 2*Cout), b: (1, 2*Cout)
    B, L, Cin = x.shape
    Cout = W.shape[-1] // 2
    xp = jnp.pad(x, ((0, 0), (1, 1), (0, 0))).astype(COMPUTE_DTYPE)
    bl = _pick_block(L)
    nl = L // bl
    out = pl.pallas_call(
        functools.partial(_convt_kernel, bl=bl, nl=nl, relu_out=relu_out),
        grid=(B, nl),
        in_specs=[pl.BlockSpec((1, L + 2, Cin), lambda bb, j: (bb, 0, 0)),
                  _const_spec(W), _const_spec(b)],
        out_specs=pl.BlockSpec((1, bl, 2 * Cout), lambda bb, j: (bb, j, 0)),
        out_shape=jax.ShapeDtypeStruct((B, L, 2 * Cout), jnp.float32),
        compiler_params=_DIMSEM,
    )(xp, W, b)
    # (B, L, 2*Cout) -> (B, 2L, Cout): contiguous phase interleave, free reshape.
    return out.reshape(B, 2 * L, Cout)


# ---------------------------------------------------------------------------
# Parameter init (PyTorch-style uniform, stored in matmul-ready fused layouts)
# ---------------------------------------------------------------------------
def init_params(key, out_channels, hidden, num_res, res_ch, emb, num_up_top=2):
    keys = iter(jax.random.split(key, 64))

    def conv3(cin, cout):
        kw, kb = jax.random.split(next(keys))
        bound = 1.0 / math.sqrt(cin * 3)
        w = jax.random.uniform(kw, (cout, cin, 3), jnp.float32, -bound, bound)
        b = jax.random.uniform(kb, (cout,), jnp.float32, -bound, bound)
        # (Cout, Cin, 3) -> (3, Cin, Cout) -> (3*Cin, Cout); row order matches the
        # in-kernel im2col row [x[q-1] | x[q] | x[q+1]].
        wf = jnp.transpose(w, (2, 1, 0)).reshape(3 * cin, cout)
        return wf.astype(COMPUTE_DTYPE), b.reshape(1, cout)

    def conv1(cin, cout):
        kw, kb = jax.random.split(next(keys))
        bound = 1.0 / math.sqrt(cin)
        w = jax.random.uniform(kw, (cout, cin, 1), jnp.float32, -bound, bound)
        b = jax.random.uniform(kb, (cout,), jnp.float32, -bound, bound)
        return w[:, :, 0].T.astype(COMPUTE_DTYPE), b.reshape(1, cout)

    def convT(cin, cout):
        kw, kb = jax.random.split(next(keys))
        bound = 1.0 / math.sqrt(cin * 4)
        w = jax.random.uniform(kw, (cin, cout, 4), jnp.float32, -bound, bound)
        b = jax.random.uniform(kb, (cout,), jnp.float32, -bound, bound)
        # Block matrix so a single matmul emits both output phases:
        #   even[q] = x[q-1] @ W[:,:,3] + x[q]   @ W[:,:,1] + b
        #   odd[q]  = x[q]   @ W[:,:,2] + x[q+1] @ W[:,:,0] + b
        w0, w1, w2, w3 = (w[:, :, k] for k in range(4))
        zero = jnp.zeros((cin, cout), jnp.float32)
        wf = jnp.concatenate(
            [jnp.concatenate([w3, zero], axis=1),
             jnp.concatenate([w1, w2], axis=1),
             jnp.concatenate([zero, w0], axis=1)], axis=0)     # (3*Cin, 2*Cout)
        bf = jnp.concatenate([b, b]).reshape(1, 2 * cout)
        return wf.astype(COMPUTE_DTYPE), bf

    p = {"t_conv0": conv3(emb, hidden), "t_res": [], "b_res": []}
    for _ in range(num_res):
        w1, b1 = conv3(hidden, res_ch)
        w2, b2 = conv1(res_ch, hidden)
        p["t_res"].append({"w1": w1, "b1": b1, "w2": w2, "b2": b2})
    p["t_up"] = [convT(hidden, hidden) for _ in range(num_up_top)]
    p["b_conv0"] = conv3(emb + hidden, hidden)
    for _ in range(num_res):
        w1, b1 = conv3(hidden, res_ch)
        w2, b2 = conv1(res_ch, hidden)
        p["b_res"].append({"w1": w1, "b1": b1, "w2": w2, "b2": b2})
    p["b_up0"] = convT(hidden, hidden // 2)
    p["b_up1"] = convT(hidden // 2, out_channels)
    return p


# ---------------------------------------------------------------------------
# Decoder1D forward (inputs/outputs in PyTorch NCL layout)
# ---------------------------------------------------------------------------
def decoder1d_forward(params, z_q_b, z_q_t):
    xt = jnp.transpose(z_q_t, (0, 2, 1))   # (B, L_t, E)
    xb = jnp.transpose(z_q_b, (0, 2, 1))   # (B, L_b, E)

    # ---- decoder_t ----
    h = conv1d_k3(xt, params["t_conv0"])
    for rp in params["t_res"]:
        h = residual_block(h, rp)
    n_up = len(params["t_up"])
    for i, up in enumerate(params["t_up"]):
        h = conv_transpose1d_k4s2p1(h, up, relu_out=(i < n_up - 1))

    # Nearest-neighbour length matching (F.interpolate 'nearest'); pure indexing,
    # left to XLA (not exercised at the default config where lengths already match).
    # TODO(synk): implement as a gather kernel if a config with mismatched lengths
    # ever becomes hot.
    L_b = xb.shape[1]
    if h.shape[1] != L_b:
        idx = (jnp.arange(L_b) * h.shape[1]) // L_b
        h = jnp.take(h, idx, axis=1)

    combined = jnp.concatenate([xb, h], axis=-1)   # (B, L_b, E + H)

    # ---- decoder_b ----
    g = conv1d_k3(combined, params["b_conv0"])
    for rp in params["b_res"]:
        g = residual_block(g, rp)
    g = conv_transpose1d_k4s2p1(g, params["b_up0"], relu_out=True)
    g = conv_transpose1d_k4s2p1(g, params["b_up1"], relu_out=False)

    return jnp.transpose(g, (0, 2, 1))   # (B, out_channels, 4 * L_b)


# ---------------------------------------------------------------------------
if __name__ == "__main__":
    B = 2
    out_channels = 4
    hidden_channels = 32
    num_res_blocks = 2
    res_channels = 16
    embedding_dim = 8
    L_t = 4
    L_b = 16   # = 4 * L_t, so decoder_t output length matches z_q_b (no interp)

    key = jax.random.PRNGKey(0)
    kp, kb_in, kt_in = jax.random.split(key, 3)
    params = init_params(kp, out_channels, hidden_channels,
                         num_res_blocks, res_channels, embedding_dim)
    z_q_t = jax.random.normal(kt_in, (B, embedding_dim, L_t), jnp.float32)
    z_q_b = jax.random.normal(kb_in, (B, embedding_dim, L_b), jnp.float32)

    fwd = jax.jit(decoder1d_forward)
    out = jax.block_until_ready(fwd(params, z_q_b, z_q_t))

    assert out.shape == (B, out_channels, 4 * L_b), out.shape
    assert out.dtype == jnp.float32
    assert bool(jnp.all(jnp.isfinite(out)))
    print("KERNEL_OK")
</pallas_src>

<mosaic_0001>
module attributes {stable_mosaic.version = 11 : i64} {
  func.func @_conv3_kernel(%arg0: i32, %arg1: i32, %arg2: memref<1x6x8xf32, #tpu.memory_space<vmem>>, %arg3: memref<24x32xf32, #tpu.memory_space<vmem>>, %arg4: memref<1x32xf32, #tpu.memory_space<vmem>>, %arg5: memref<1x4x32xf32, #tpu.memory_space<vmem>>) attributes {dimension_semantics = [#tpu.dimension_semantics<parallel>, #tpu.dimension_semantics<parallel>], iteration_bounds = array<i64: 2, 1>, scalar_prefetch = 0 : i64, scratch_operands = 0 : i64, tpu.core_type = #tpu.core_type<tc>, window_params = [{transform_indices = @transform_0, window_bounds = array<i64: 1, 6, 8>}, {pipeline_mode = #tpu.pipeline_mode<synchronous>, transform_indices = @transform_1, window_bounds = array<i64: 24, 32>}, {pipeline_mode = #tpu.pipeline_mode<synchronous>, transform_indices = @transform_2, window_bounds = array<i64: 1, 32>}, {transform_indices = @transform_3, window_bounds = array<i64: 1, 4, 32>}]} {
    %c0 = arith.constant 0 : index
    %c0_0 = arith.constant 0 : index
    %c0_1 = arith.constant 0 : index
    %0 = vector.load %arg2[%c0, %c0_0, %c0_1] : memref<1x6x8xf32, #tpu.memory_space<vmem>>, vector<1x4x8xf32>
    %1 = vector.shape_cast %0 : vector<1x4x8xf32> to vector<4x8xf32>
    %c0_2 = arith.constant 0 : index
    %c1 = arith.constant 1 : index
    %c0_3 = arith.constant 0 : index
    %2 = vector.load %arg2[%c0_2, %c1, %c0_3] : memref<1x6x8xf32, #tpu.memory_space<vmem>>, vector<1x4x8xf32>
    %3 = vector.shape_cast %2 : vector<1x4x8xf32> to vector<4x8xf32>
    %c0_4 = arith.constant 0 : index
    %c2 = arith.constant 2 : index
    %c0_5 = arith.constant 0 : index
    %4 = vector.load %arg2[%c0_4, %c2, %c0_5] : memref<1x6x8xf32, #tpu.memory_space<vmem>>, vector<1x4x8xf32>
    %5 = vector.shape_cast %4 : vector<1x4x8xf32> to vector<4x8xf32>
    %6 = tpu.concatenate %1, %3, %5 in 1 : vector<4x8xf32>, vector<4x8xf32>, vector<4x8xf32> -> vector<4x24xf32>
    %c0_6 = arith.constant 0 : index
    %c0_7 = arith.constant 0 : index
    %7 = vector.load %arg3[%c0_6, %c0_7] : memref<24x32xf32, #tpu.memory_space<vmem>>, vector<24x32xf32>
    %cst = arith.constant dense<0.000000e+00> : vector<4x32xf32>
    %8 = tpu.matmul %6, %7, %cst {dimension_numbers = #tpu.dot_dimension_numbers<[1], [0], [0], [1], [0, 0, 1, 1], [], []>} : vector<4x24xf32>, vector<24x32xf32>, vector<4x32xf32> -> vector<4x32xf32>
    %c0_8 = arith.constant 0 : index
    %c0_9 = arith.constant 0 : index
    %9 = vector.load %arg4[%c0_8, %c0_9] : memref<1x32xf32, #tpu.memory_space<vmem>>, vector<1x32xf32>
    %10 = vector.broadcast %9 : vector<1x32xf32> to vector<4x32xf32>
    %11 = arith.addf %8, %10 : vector<4x32xf32>
    %c0_10 = arith.constant 0 : index
    %c0_11 = arith.constant 0 : index
    %c0_12 = arith.constant 0 : index
    %12 = vector.load %arg5[%c0_10, %c0_11, %c0_12] : memref<1x4x32xf32, #tpu.memory_space<vmem>>, vector<1x4x32xf32>
    %13 = vector.shape_cast %12 : vector<1x4x32xf32> to vector<4x32xf32>
    %14 = vector.shape_cast %11 : vector<4x32xf32> to vector<1x4x32xf32>
    tpu.vector_store %arg5[%c0_10, %c0_11, %c0_12], %14 {strides = array<i32>} : memref<1x4x32xf32, #tpu.memory_space<vmem>>, vector<1x4x32xf32>,
    return
  }
  func.func @transform_0(%arg0: i32, %arg1: i32) -> (i32, i32, i32) {
    %c0_i32 = arith.constant 0 : i32
    %c0_i32_0 = arith.constant 0 : i32
    %c0_i32_1 = arith.constant 0 : i32
    return %arg0, %c0_i32, %c0_i32_0 : i32, i32, i32
  }
  func.func @transform_1(%arg0: i32, %arg1: i32) -> (i32, i32) {
    %c0_i32 = arith.constant 0 : i32
    %c0_i32_0 = arith.constant 0 : i32
    %c0_i32_1 = arith.constant 0 : i32
    return %c0_i32, %c0_i32_0 : i32, i32
  }
  func.func @transform_2(%arg0: i32, %arg1: i32) -> (i32, i32) {
    %c0_i32 = arith.constant 0 : i32
    %c0_i32_0 = arith.constant 0 : i32
    %c0_i32_1 = arith.constant 0 : i32
    return %c0_i32, %c0_i32_0 : i32, i32
  }
  func.func @transform_3(%arg0: i32, %arg1: i32) -> (i32, i32, i32) {
    %c0_i32 = arith.constant 0 : i32
    %c0_i32_0 = arith.constant 0 : i32
    return %arg0, %arg1, %c0_i32 : i32, i32, i32
  }
}

module attributes {stable_mosaic.version = 11 : i64} {
  func.func @_resblock_kernel(%arg0: i32, %arg1: i32, %arg2: memref<1x6x32xf32, #tpu.memory_space<vmem>>, %arg3: memref<96x16xf32, #tpu.memory_space<vmem>>, %arg4: memref<1x16xf32, #tpu.memory_space<vmem>>, %arg5: memref<16x32xf32, #tpu.memory_space<vmem>>, %arg6: memref<1x32xf32, #tpu.memory_space<vmem>>, %arg7: memref<1x4x32xf32, #tpu.memory_space<vmem>>) attributes {dimension_semantics = [#tpu.dimension_semantics<parallel>, #tpu.dimension_semantics<parallel>], iteration_bounds = array<i64: 2, 1>, scalar_prefetch = 0 : i64, scratch_operands = 0 : i64, tpu.core_type = #tpu.core_type<tc>, window_params = [{transform_indices = @transform_0, window_bounds = array<i64: 1, 6, 32>}, {pipeline_mode = #tpu.pipeline_mode<synchronous>, transform_indices = @transform_1, window_bounds = array<i64: 96, 16>}, {pipeline_mode = #tpu.pipeline_mode<synchronous>, transform_indices = @transform_2, window_bounds = array<i64: 1, 16>}, {pipeline_mode = #tpu.pipeline_mode<synchronous>, transform_indices = @transform_3, window_bounds = array<i64: 16, 32>}, {pipeline_mode = #tpu.pipeline_mode<synchronous>, transform_indices = @transform_4, window_bounds = array<i64: 1, 32>}, {transform_indices = @transform_5, window_bounds = array<i64: 1, 4, 32>}]} {
    %c0 = arith.constant 0 : index
    %c0_0 = arith.constant 0 : index
    %c0_1 = arith.constant 0 : index
    %0 = vector.load %arg2[%c0, %c0_0, %c0_1] : memref<1x6x32xf32, #tpu.memory_space<vmem>>, vector<1x4x32xf32>
    %1 = vector.shape_cast %0 : vector<1x4x32xf32> to vector<4x32xf32>
    %c0_2 = arith.constant 0 : index
    %c1 = arith.constant 1 : index
    %c0_3 = arith.constant 0 : index
    %2 = vector.load %arg2[%c0_2, %c1, %c0_3] : memref<1x6x32xf32, #tpu.memory_space<vmem>>, vector<1x4x32xf32>
    %3 = vector.shape_cast %2 : vector<1x4x32xf32> to vector<4x32xf32>
    %c0_4 = arith.constant 0 : index
    %c2 = arith.constant 2 : index
    %c0_5 = arith.constant 0 : index
    %4 = vector.load %arg2[%c0_4, %c2, %c0_5] : memref<1x6x32xf32, #tpu.memory_space<vmem>>, vector<1x4x32xf32>
    %5 = vector.shape_cast %4 : vector<1x4x32xf32> to vector<4x32xf32>
    %6 = tpu.concatenate %1, %3, %5 in 1 : vector<4x32xf32>, vector<4x32xf32>, vector<4x32xf32> -> vector<4x96xf32>
    %cst = arith.constant 0.000000e+00 : f32
    %7 = vector.broadcast %cst : f32 to vector<4x96xf32>
    %8 = arith.maximumf %6, %7 : vector<4x96xf32>
    %c0_6 = arith.constant 0 : index
    %c0_7 = arith.constant 0 : index
    %9 = vector.load %arg3[%c0_6, %c0_7] : memref<96x16xf32, #tpu.memory_space<vmem>>, vector<96x16xf32>
    %cst_8 = arith.constant dense<0.000000e+00> : vector<4x16xf32>
    %10 = tpu.matmul %8, %9, %cst_8 {dimension_numbers = #tpu.dot_dimension_numbers<[1], [0], [0], [1], [0, 0, 1, 1], [], []>} : vector<4x96xf32>, vector<96x16xf32>, vector<4x16xf32> -> vector<4x16xf32>
    %c0_9 = arith.constant 0 : index
    %c0_10 = arith.constant 0 : index
    %11 = vector.load %arg4[%c0_9, %c0_10] : memref<1x16xf32, #tpu.memory_space<vmem>>, vector<1x16xf32>
    %12 = vector.broadcast %11 : vector<1x16xf32> to vector<4x16xf32>
    %13 = arith.addf %10, %12 : vector<4x16xf32>
    %cst_11 = arith.constant 0.000000e+00 : f32
    %14 = vector.broadcast %cst_11 : f32 to vector<4x16xf32>
    %15 = arith.maximumf %13, %14 : vector<4x16xf32>
    %c0_12 = arith.constant 0 : index
    %c0_13 = arith.constant 0 : index
    %16 = vector.load %arg5[%c0_12, %c0_13] : memref<16x32xf32, #tpu.memory_space<vmem>>, vector<16x32xf32>
    %cst_14 = arith.constant dense<0.000000e+00> : vector<4x32xf32>
    %17 = tpu.matmul %15, %16, %cst_14 {dimension_numbers = #tpu.dot_dimension_numbers<[1], [0], [0], [1], [0, 0, 1, 1], [], []>} : vector<4x16xf32>, vector<16x32xf32>, vector<4x32xf32> -> vector<4x32xf32>
    %c0_15 = arith.constant 0 : index
    %c0_16 = arith.constant 0 : index
    %18 = vector.load %arg6[%c0_15, %c0_16] : memref<1x32xf32, #tpu.memory_space<vmem>>, vector<1x32xf32>
    %19 = vector.broadcast %18 : vector<1x32xf32> to vector<4x32xf32>
    %20 = arith.addf %17, %19 : vector<4x32xf32>
    %21 = arith.addf %20, %3 : vector<4x32xf32>
    %c0_17 = arith.constant 0 : index
    %c0_18 = arith.constant 0 : index
    %c0_19 = arith.constant 0 : index
    %22 = vector.load %arg7[%c0_17, %c0_18, %c0_19] : memref<1x4x32xf32, #tpu.memory_space<vmem>>, vector<1x4x32xf32>
    %23 = vector.shape_cast %22 : vector<1x4x32xf32> to vector<4x32xf32>
    %24 = vector.shape_cast %21 : vector<4x32xf32> to vector<1x4x32xf32>
    tpu.vector_store %arg7[%c0_17, %c0_18, %c0_19], %24 {strides = array<i32>} : memref<1x4x32xf32, #tpu.memory_space<vmem>>, vector<1x4x32xf32>,
    return
  }
  func.func @transform_0(%arg0: i32, %arg1: i32) -> (i32, i32, i32) {
    %c0_i32 = arith.constant 0 : i32
    %c0_i32_0 = arith.constant 0 : i32
    %c0_i32_1 = arith.constant 0 : i32
    return %arg0, %c0_i32, %c0_i32_0 : i32, i32, i32
  }
  func.func @transform_1(%arg0: i32, %arg1: i32) -> (i32, i32) {
    %c0_i32 = arith.constant 0 : i32
    %c0_i32_0 = arith.constant 0 : i32
    %c0_i32_1 = arith.constant 0 : i32
    return %c0_i32, %c0_i32_0 : i32, i32
  }
  func.func @transform_2(%arg0: i32, %arg1: i32) -> (i32, i32) {
    %c0_i32 = arith.constant 0 : i32
    %c0_i32_0 = arith.constant 0 : i32
    %c0_i32_1 = arith.constant 0 : i32
    return %c0_i32, %c0_i32_0 : i32, i32
  }
  func.func @transform_3(%arg0: i32, %arg1: i32) -> (i32, i32) {
    %c0_i32 = arith.constant 0 : i32
    %c0_i32_0 = arith.constant 0 : i32
    %c0_i32_1 = arith.constant 0 : i32
    return %c0_i32, %c0_i32_0 : i32, i32
  }
  func.func @transform_4(%arg0: i32, %arg1: i32) -> (i32, i32) {
    %c0_i32 = arith.constant 0 : i32
    %c0_i32_0 = arith.constant 0 : i32
    %c0_i32_1 = arith.constant 0 : i32
    return %c0_i32, %c0_i32_0 : i32, i32
  }
  func.func @transform_5(%arg0: i32, %arg1: i32) -> (i32, i32, i32) {
    %c0_i32 = arith.constant 0 : i32
    %c0_i32_0 = arith.constant 0 : i32
    return %arg0, %arg1, %c0_i32 : i32, i32, i32
  }
}

module attributes {stable_mosaic.version = 11 : i64} {
  func.func @_convt_kernel(%arg0: i32, %arg1: i32, %arg2: memref<1x6x32xf32, #tpu.memory_space<vmem>>, %arg3: memref<96x64xf32, #tpu.memory_space<vmem>>, %arg4: memref<1x64xf32, #tpu.memory_space<vmem>>, %arg5: memref<1x4x64xf32, #tpu.memory_space<vmem>>) attributes {dimension_semantics = [#tpu.dimension_semantics<parallel>, #tpu.dimension_semantics<parallel>], iteration_bounds = array<i64: 2, 1>, scalar_prefetch = 0 : i64, scratch_operands = 0 : i64, tpu.core_type = #tpu.core_type<tc>, window_params = [{transform_indices = @transform_0, window_bounds = array<i64: 1, 6, 32>}, {pipeline_mode = #tpu.pipeline_mode<synchronous>, transform_indices = @transform_1, window_bounds = array<i64: 96, 64>}, {pipeline_mode = #tpu.pipeline_mode<synchronous>, transform_indices = @transform_2, window_bounds = array<i64: 1, 64>}, {transform_indices = @transform_3, window_bounds = array<i64: 1, 4, 64>}]} {
    %c0 = arith.constant 0 : index
    %c0_0 = arith.constant 0 : index
    %c0_1 = arith.constant 0 : index
    %0 = vector.load %arg2[%c0, %c0_0, %c0_1] : memref<1x6x32xf32, #tpu.memory_space<vmem>>, vector<1x4x32xf32>
    %1 = vector.shape_cast %0 : vector<1x4x32xf32> to vector<4x32xf32>
    %c0_2 = arith.constant 0 : index
    %c1 = arith.constant 1 : index
    %c0_3 = arith.constant 0 : index
    %2 = vector.load %arg2[%c0_2, %c1, %c0_3] : memref<1x6x32xf32, #tpu.memory_space<vmem>>, vector<1x4x32xf32>
    %3 = vector.shape_cast %2 : vector<1x4x32xf32> to vector<4x32xf32>
    %c0_4 = arith.constant 0 : index
    %c2 = arith.constant 2 : index
    %c0_5 = arith.constant 0 : index
    %4 = vector.load %arg2[%c0_4, %c2, %c0_5] : memref<1x6x32xf32, #tpu.memory_space<vmem>>, vector<1x4x32xf32>
    %5 = vector.shape_cast %4 : vector<1x4x32xf32> to vector<4x32xf32>
    %6 = tpu.concatenate %1, %3, %5 in 1 : vector<4x32xf32>, vector<4x32xf32>, vector<4x32xf32> -> vector<4x96xf32>
    %c0_6 = arith.constant 0 : index
    %c0_7 = arith.constant 0 : index
    %7 = vector.load %arg3[%c0_6, %c0_7] : memref<96x64xf32, #tpu.memory_space<vmem>>, vector<96x64xf32>
    %cst = arith.constant dense<0.000000e+00> : vector<4x64xf32>
    %8 = tpu.matmul %6, %7, %cst {dimension_numbers = #tpu.dot_dimension_numbers<[1], [0], [0], [1], [0, 0, 1, 1], [], []>} : vector<4x96xf32>, vector<96x64xf32>, vector<4x64xf32> -> vector<4x64xf32>
    %c0_8 = arith.constant 0 : index
    %c0_9 = arith.constant 0 : index
    %9 = vector.load %arg4[%c0_8, %c0_9] : memref<1x64xf32, #tpu.memory_space<vmem>>, vector<1x64xf32>
    %10 = vector.broadcast %9 : vector<1x64xf32> to vector<4x64xf32>
    %11 = arith.addf %8, %10 : vector<4x64xf32>
    %cst_10 = arith.constant 0.000000e+00 : f32
    %12 = vector.broadcast %cst_10 : f32 to vector<4x64xf32>
    %13 = arith.maximumf %11, %12 : vector<4x64xf32>
    %c0_11 = arith.constant 0 : index
    %c0_12 = arith.constant 0 : index
    %c0_13 = arith.constant 0 : index
    %14 = vector.load %arg5[%c0_11, %c0_12, %c0_13] : memref<1x4x64xf32, #tpu.memory_space<vmem>>, vector<1x4x64xf32>
    %15 = vector.shape_cast %14 : vector<1x4x64xf32> to vector<4x64xf32>
    %16 = vector.shape_cast %13 : vector<4x64xf32> to vector<1x4x64xf32>
    tpu.vector_store %arg5[%c0_11, %c0_12, %c0_13], %16 {strides = array<i32>} : memref<1x4x64xf32, #tpu.memory_space<vmem>>, vector<1x4x64xf32>,
    return
  }
  func.func @transform_0(%arg0: i32, %arg1: i32) -> (i32, i32, i32) {
    %c0_i32 = arith.constant 0 : i32
    %c0_i32_0 = arith.constant 0 : i32
    %c0_i32_1 = arith.constant 0 : i32
    return %arg0, %c0_i32, %c0_i32_0 : i32, i32, i32
  }
  func.func @transform_1(%arg0: i32, %arg1: i32) -> (i32, i32) {
    %c0_i32 = arith.constant 0 : i32
    %c0_i32_0 = arith.constant 0 : i32
    %c0_i32_1 = arith.constant 0 : i32
    return %c0_i32, %c0_i32_0 : i32, i32
  }
  func.func @transform_2(%arg0: i32, %arg1: i32) -> (i32, i32) {
    %c0_i32 = arith.constant 0 : i32
    %c0_i32_0 = arith.constant 0 : i32
    %c0_i32_1 = arith.constant 0 : i32
    return %c0_i32, %c0_i32_0 : i32, i32
  }
  func.func @transform_3(%arg0: i32, %arg1: i32) -> (i32, i32, i32) {
    %c0_i32 = arith.constant 0 : i32
    %c0_i32_0 = arith.constant 0 : i32
    return %arg0, %arg1, %c0_i32 : i32, i32, i32
  }
}

module attributes {stable_mosaic.version = 11 : i64} {
  func.func @_convt_kernel(%arg0: i32, %arg1: i32, %arg2: memref<1x10x32xf32, #tpu.memory_space<vmem>>, %arg3: memref<96x64xf32, #tpu.memory_space<vmem>>, %arg4: memref<1x64xf32, #tpu.memory_space<vmem>>, %arg5: memref<1x8x64xf32, #tpu.memory_space<vmem>>) attributes {dimension_semantics = [#tpu.dimension_semantics<parallel>, #tpu.dimension_semantics<parallel>], iteration_bounds = array<i64: 2, 1>, scalar_prefetch = 0 : i64, scratch_operands = 0 : i64, tpu.core_type = #tpu.core_type<tc>, window_params = [{transform_indices = @transform_0, window_bounds = array<i64: 1, 10, 32>}, {pipeline_mode = #tpu.pipeline_mode<synchronous>, transform_indices = @transform_1, window_bounds = array<i64: 96, 64>}, {pipeline_mode = #tpu.pipeline_mode<synchronous>, transform_indices = @transform_2, window_bounds = array<i64: 1, 64>}, {transform_indices = @transform_3, window_bounds = array<i64: 1, 8, 64>}]} {
    %c0 = arith.constant 0 : index
    %c0_0 = arith.constant 0 : index
    %c0_1 = arith.constant 0 : index
    %0 = vector.load %arg2[%c0, %c0_0, %c0_1] : memref<1x10x32xf32, #tpu.memory_space<vmem>>, vector<1x8x32xf32>
    %1 = vector.shape_cast %0 : vector<1x8x32xf32> to vector<8x32xf32>
    %c0_2 = arith.constant 0 : index
    %c1 = arith.constant 1 : index
    %c0_3 = arith.constant 0 : index
    %2 = vector.load %arg2[%c0_2, %c1, %c0_3] : memref<1x10x32xf32, #tpu.memory_space<vmem>>, vector<1x8x32xf32>
    %3 = vector.shape_cast %2 : vector<1x8x32xf32> to vector<8x32xf32>
    %c0_4 = arith.constant 0 : index
    %c2 = arith.constant 2 : index
    %c0_5 = arith.constant 0 : index
    %4 = vector.load %arg2[%c0_4, %c2, %c0_5] : memref<1x10x32xf32, #tpu.memory_space<vmem>>, vector<1x8x32xf32>
    %5 = vector.shape_cast %4 : vector<1x8x32xf32> to vector<8x32xf32>
    %6 = tpu.concatenate %1, %3, %5 in 1 : vector<8x32xf32>, vector<8x32xf32>, vector<8x32xf32> -> vector<8x96xf32>
    %c0_6 = arith.constant 0 : index
    %c0_7 = arith.constant 0 : index
    %7 = vector.load %arg3[%c0_6, %c0_7] : memref<96x64xf32, #tpu.memory_space<vmem>>, vector<96x64xf32>
    %cst = arith.constant dense<0.000000e+00> : vector<8x64xf32>
    %8 = tpu.matmul %6, %7, %cst {dimension_numbers = #tpu.dot_dimension_numbers<[1], [0], [0], [1], [0, 0, 1, 1], [], []>} : vector<8x96xf32>, vector<96x64xf32>, vector<8x64xf32> -> vector<8x64xf32>
    %c0_8 = arith.constant 0 : index
    %c0_9 = arith.constant 0 : index
    %9 = vector.load %arg4[%c0_8, %c0_9] : memref<1x64xf32, #tpu.memory_space<vmem>>, vector<1x64xf32>
    %10 = vector.broadcast %9 : vector<1x64xf32> to vector<8x64xf32>
    %11 = arith.addf %8, %10 : vector<8x64xf32>
    %c0_10 = arith.constant 0 : index
    %c0_11 = arith.constant 0 : index
    %c0_12 = arith.constant 0 : index
    %12 = vector.load %arg5[%c0_10, %c0_11, %c0_12] : memref<1x8x64xf32, #tpu.memory_space<vmem>>, vector<1x8x64xf32>
    %13 = vector.shape_cast %12 : vector<1x8x64xf32> to vector<8x64xf32>
    %14 = vector.shape_cast %11 : vector<8x64xf32> to vector<1x8x64xf32>
    tpu.vector_store %arg5[%c0_10, %c0_11, %c0_12], %14 {strides = array<i32>} : memref<1x8x64xf32, #tpu.memory_space<vmem>>, vector<1x8x64xf32>,
    return
  }
  func.func @transform_0(%arg0: i32, %arg1: i32) -> (i32, i32, i32) {
    %c0_i32 = arith.constant 0 : i32
    %c0_i32_0 = arith.constant 0 : i32
    %c0_i32_1 = arith.constant 0 : i32
    return %arg0, %c0_i32, %c0_i32_0 : i32, i32, i32
  }
  func.func @transform_1(%arg0: i32, %arg1: i32) -> (i32, i32) {
    %c0_i32 = arith.constant 0 : i32
    %c0_i32_0 = arith.constant 0 : i32
    %c0_i32_1 = arith.constant 0 : i32
    return %c0_i32, %c0_i32_0 : i32, i32
  }
  func.func @transform_2(%arg0: i32, %arg1: i32) -> (i32, i32) {
    %c0_i32 = arith.constant 0 : i32
    %c0_i32_0 = arith.constant 0 : i32
    %c0_i32_1 = arith.constant 0 : i32
    return %c0_i32, %c0_i32_0 : i32, i32
  }
  func.func @transform_3(%arg0: i32, %arg1: i32) -> (i32, i32, i32) {
    %c0_i32 = arith.constant 0 : i32
    %c0_i32_0 = arith.constant 0 : i32
    return %arg0, %arg1, %c0_i32 : i32, i32, i32
  }
}

module attributes {stable_mosaic.version = 11 : i64} {
  func.func @_resblock_kernel(%arg0: i32, %arg1: i32, %arg2: memref<1x18x32xf32, #tpu.memory_space<vmem>>, %arg3: memref<96x16xf32, #tpu.memory_space<vmem>>, %arg4: memref<1x16xf32, #tpu.memory_space<vmem>>, %arg5: memref<16x32xf32, #tpu.memory_space<vmem>>, %arg6: memref<1x32xf32, #tpu.memory_space<vmem>>, %arg7: memref<1x16x32xf32, #tpu.memory_space<vmem>>) attributes {dimension_semantics = [#tpu.dimension_semantics<parallel>, #tpu.dimension_semantics<parallel>], iteration_bounds = array<i64: 2, 1>, scalar_prefetch = 0 : i64, scratch_operands = 0 : i64, tpu.core_type = #tpu.core_type<tc>, window_params = [{transform_indices = @transform_0, window_bounds = array<i64: 1, 18, 32>}, {pipeline_mode = #tpu.pipeline_mode<synchronous>, transform_indices = @transform_1, window_bounds = array<i64: 96, 16>}, {pipeline_mode = #tpu.pipeline_mode<synchronous>, transform_indices = @transform_2, window_bounds = array<i64: 1, 16>}, {pipeline_mode = #tpu.pipeline_mode<synchronous>, transform_indices = @transform_3, window_bounds = array<i64: 16, 32>}, {pipeline_mode = #tpu.pipeline_mode<synchronous>, transform_indices = @transform_4, window_bounds = array<i64: 1, 32>}, {transform_indices = @transform_5, window_bounds = array<i64: 1, 16, 32>}]} {
    %c0 = arith.constant 0 : index
    %c0_0 = arith.constant 0 : index
    %c0_1 = arith.constant 0 : index
    %0 = vector.load %arg2[%c0, %c0_0, %c0_1] : memref<1x18x32xf32, #tpu.memory_space<vmem>>, vector<1x16x32xf32>
    %1 = vector.shape_cast %0 : vector<1x16x32xf32> to vector<16x32xf32>
    %c0_2 = arith.constant 0 : index
    %c1 = arith.constant 1 : index
    %c0_3 = arith.constant 0 : index
    %2 = vector.load %arg2[%c0_2, %c1, %c0_3] : memref<1x18x32xf32, #tpu.memory_space<vmem>>, vector<1x16x32xf32>
    %3 = vector.shape_cast %2 : vector<1x16x32xf32> to vector<16x32xf32>
    %c0_4 = arith.constant 0 : index
    %c2 = arith.constant 2 : index
    %c0_5 = arith.constant 0 : index
    %4 = vector.load %arg2[%c0_4, %c2, %c0_5] : memref<1x18x32xf32, #tpu.memory_space<vmem>>, vector<1x16x32xf32>
    %5 = vector.shape_cast %4 : vector<1x16x32xf32> to vector<16x32xf32>
    %6 = tpu.concatenate %1, %3, %5 in 1 : vector<16x32xf32>, vector<16x32xf32>, vector<16x32xf32> -> vector<16x96xf32>
    %cst = arith.constant 0.000000e+00 : f32
    %7 = vector.broadcast %cst : f32 to vector<16x96xf32>
    %8 = arith.maximumf %6, %7 : vector<16x96xf32>
    %c0_6 = arith.constant 0 : index
    %c0_7 = arith.constant 0 : index
    %9 = vector.load %arg3[%c0_6, %c0_7] : memref<96x16xf32, #tpu.memory_space<vmem>>, vector<96x16xf32>
    %cst_8 = arith.constant dense<0.000000e+00> : vector<16x16xf32>
    %10 = tpu.matmul %8, %9, %cst_8 {dimension_numbers = #tpu.dot_dimension_numbers<[1], [0], [0], [1], [0, 0, 1, 1], [], []>} : vector<16x96xf32>, vector<96x16xf32>, vector<16x16xf32> -> vector<16x16xf32>
    %c0_9 = arith.constant 0 : index
    %c0_10 = arith.constant 0 : index
    %11 = vector.load %arg4[%c0_9, %c0_10] : memref<1x16xf32, #tpu.memory_space<vmem>>, vector<1x16xf32>
    %12 = vector.broadcast %11 : vector<1x16xf32> to vector<16x16xf32>
    %13 = arith.addf %10, %12 : vector<16x16xf32>
    %cst_11 = arith.constant 0.000000e+00 : f32
    %14 = vector.broadcast %cst_11 : f32 to vector<16x16xf32>
    %15 = arith.maximumf %13, %14 : vector<16x16xf32>
    %c0_12 = arith.constant 0 : index
    %c0_13 = arith.constant 0 : index
    %16 = vector.load %arg5[%c0_12, %c0_13] : memref<16x32xf32, #tpu.memory_space<vmem>>, vector<16x32xf32>
    %cst_14 = arith.constant dense<0.000000e+00> : vector<16x32xf32>
    %17 = tpu.matmul %15, %16, %cst_14 {dimension_numbers = #tpu.dot_dimension_numbers<[1], [0], [0], [1], [0, 0, 1, 1], [], []>} : vector<16x16xf32>, vector<16x32xf32>, vector<16x32xf32> -> vector<16x32xf32>
    %c0_15 = arith.constant 0 : index
    %c0_16 = arith.constant 0 : index
    %18 = vector.load %arg6[%c0_15, %c0_16] : memref<1x32xf32, #tpu.memory_space<vmem>>, vector<1x32xf32>
    %19 = vector.broadcast %18 : vector<1x32xf32> to vector<16x32xf32>
    %20 = arith.addf %17, %19 : vector<16x32xf32>
    %21 = arith.addf %20, %3 : vector<16x32xf32>
    %c0_17 = arith.constant 0 : index
    %c0_18 = arith.constant 0 : index
    %c0_19 = arith.constant 0 : index
    %22 = vector.load %arg7[%c0_17, %c0_18, %c0_19] : memref<1x16x32xf32, #tpu.memory_space<vmem>>, vector<1x16x32xf32>
    %23 = vector.shape_cast %22 : vector<1x16x32xf32> to vector<16x32xf32>
    %24 = vector.shape_cast %21 : vector<16x32xf32> to vector<1x16x32xf32>
    tpu.vector_store %arg7[%c0_17, %c0_18, %c0_19], %24 {strides = array<i32>} : memref<1x16x32xf32, #tpu.memory_space<vmem>>, vector<1x16x32xf32>,
    return
  }
  func.func @transform_0(%arg0: i32, %arg1: i32) -> (i32, i32, i32) {
    %c0_i32 = arith.constant 0 : i32
    %c0_i32_0 = arith.constant 0 : i32
    %c0_i32_1 = arith.constant 0 : i32
    return %arg0, %c0_i32, %c0_i32_0 : i32, i32, i32
  }
  func.func @transform_1(%arg0: i32, %arg1: i32) -> (i32, i32) {
    %c0_i32 = arith.constant 0 : i32
    %c0_i32_0 = arith.constant 0 : i32
    %c0_i32_1 = arith.constant 0 : i32
    return %c0_i32, %c0_i32_0 : i32, i32
  }
  func.func @transform_2(%arg0: i32, %arg1: i32) -> (i32, i32) {
    %c0_i32 = arith.constant 0 : i32
    %c0_i32_0 = arith.constant 0 : i32
    %c0_i32_1 = arith.constant 0 : i32
    return %c0_i32, %c0_i32_0 : i32, i32
  }
  func.func @transform_3(%arg0: i32, %arg1: i32) -> (i32, i32) {
    %c0_i32 = arith.constant 0 : i32
    %c0_i32_0 = arith.constant 0 : i32
    %c0_i32_1 = arith.constant 0 : i32
    return %c0_i32, %c0_i32_0 : i32, i32
  }
  func.func @transform_4(%arg0: i32, %arg1: i32) -> (i32, i32) {
    %c0_i32 = arith.constant 0 : i32
    %c0_i32_0 = arith.constant 0 : i32
    %c0_i32_1 = arith.constant 0 : i32
    return %c0_i32, %c0_i32_0 : i32, i32
  }
  func.func @transform_5(%arg0: i32, %arg1: i32) -> (i32, i32, i32) {
    %c0_i32 = arith.constant 0 : i32
    %c0_i32_0 = arith.constant 0 : i32
    return %arg0, %arg1, %c0_i32 : i32, i32, i32
  }
}

module attributes {stable_mosaic.version = 11 : i64} {
  func.func @_conv3_kernel(%arg0: i32, %arg1: i32, %arg2: memref<1x18x40xf32, #tpu.memory_space<vmem>>, %arg3: memref<120x32xf32, #tpu.memory_space<vmem>>, %arg4: memref<1x32xf32, #tpu.memory_space<vmem>>, %arg5: memref<1x16x32xf32, #tpu.memory_space<vmem>>) attributes {dimension_semantics = [#tpu.dimension_semantics<parallel>, #tpu.dimension_semantics<parallel>], iteration_bounds = array<i64: 2, 1>, scalar_prefetch = 0 : i64, scratch_operands = 0 : i64, tpu.core_type = #tpu.core_type<tc>, window_params = [{transform_indices = @transform_0, window_bounds = array<i64: 1, 18, 40>}, {pipeline_mode = #tpu.pipeline_mode<synchronous>, transform_indices = @transform_1, window_bounds = array<i64: 120, 32>}, {pipeline_mode = #tpu.pipeline_mode<synchronous>, transform_indices = @transform_2, window_bounds = array<i64: 1, 32>}, {transform_indices = @transform_3, window_bounds = array<i64: 1, 16, 32>}]} {
    %c0 = arith.constant 0 : index
    %c0_0 = arith.constant 0 : index
    %c0_1 = arith.constant 0 : index
    %0 = vector.load %arg2[%c0, %c0_0, %c0_1] : memref<1x18x40xf32, #tpu.memory_space<vmem>>, vector<1x16x40xf32>
    %1 = vector.shape_cast %0 : vector<1x16x40xf32> to vector<16x40xf32>
    %c0_2 = arith.constant 0 : index
    %c1 = arith.constant 1 : index
    %c0_3 = arith.constant 0 : index
    %2 = vector.load %arg2[%c0_2, %c1, %c0_3] : memref<1x18x40xf32, #tpu.memory_space<vmem>>, vector<1x16x40xf32>
    %3 = vector.shape_cast %2 : vector<1x16x40xf32> to vector<16x40xf32>
    %c0_4 = arith.constant 0 : index
    %c2 = arith.constant 2 : index
    %c0_5 = arith.constant 0 : index
    %4 = vector.load %arg2[%c0_4, %c2, %c0_5] : memref<1x18x40xf32, #tpu.memory_space<vmem>>, vector<1x16x40xf32>
    %5 = vector.shape_cast %4 : vector<1x16x40xf32> to vector<16x40xf32>
    %6 = tpu.concatenate %1, %3, %5 in 1 : vector<16x40xf32>, vector<16x40xf32>, vector<16x40xf32> -> vector<16x120xf32>
    %c0_6 = arith.constant 0 : index
    %c0_7 = arith.constant 0 : index
    %7 = vector.load %arg3[%c0_6, %c0_7] : memref<120x32xf32, #tpu.memory_space<vmem>>, vector<120x32xf32>
    %cst = arith.constant dense<0.000000e+00> : vector<16x32xf32>
    %8 = tpu.matmul %6, %7, %cst {dimension_numbers = #tpu.dot_dimension_numbers<[1], [0], [0], [1], [0, 0, 1, 1], [], []>} : vector<16x120xf32>, vector<120x32xf32>, vector<16x32xf32> -> vector<16x32xf32>
    %c0_8 = arith.constant 0 : index
    %c0_9 = arith.constant 0 : index
    %9 = vector.load %arg4[%c0_8, %c0_9] : memref<1x32xf32, #tpu.memory_space<vmem>>, vector<1x32xf32>
    %10 = vector.broadcast %9 : vector<1x32xf32> to vector<16x32xf32>
    %11 = arith.addf %8, %10 : vector<16x32xf32>
    %c0_10 = arith.constant 0 : index
    %c0_11 = arith.constant 0 : index
    %c0_12 = arith.constant 0 : index
    %12 = vector.load %arg5[%c0_10, %c0_11, %c0_12] : memref<1x16x32xf32, #tpu.memory_space<vmem>>, vector<1x16x32xf32>
    %13 = vector.shape_cast %12 : vector<1x16x32xf32> to vector<16x32xf32>
    %14 = vector.shape_cast %11 : vector<16x32xf32> to vector<1x16x32xf32>
    tpu.vector_store %arg5[%c0_10, %c0_11, %c0_12], %14 {strides = array<i32>} : memref<1x16x32xf32, #tpu.memory_space<vmem>>, vector<1x16x32xf32>,
    return
  }
  func.func @transform_0(%arg0: i32, %arg1: i32) -> (i32, i32, i32) {
    %c0_i32 = arith.constant 0 : i32
    %c0_i32_0 = arith.constant 0 : i32
    %c0_i32_1 = arith.constant 0 : i32
    return %arg0, %c0_i32, %c0_i32_0 : i32, i32, i32
  }
  func.func @transform_1(%arg0: i32, %arg1: i32) -> (i32, i32) {
    %c0_i32 = arith.constant 0 : i32
    %c0_i32_0 = arith.constant 0 : i32
    %c0_i32_1 = arith.constant 0 : i32
    return %c0_i32, %c0_i32_0 : i32, i32
  }
  func.func @transform_2(%arg0: i32, %arg1: i32) -> (i32, i32) {
    %c0_i32 = arith.constant 0 : i32
    %c0_i32_0 = arith.constant 0 : i32
    %c0_i32_1 = arith.constant 0 : i32
    return %c0_i32, %c0_i32_0 : i32, i32
  }
  func.func @transform_3(%arg0: i32, %arg1: i32) -> (i32, i32, i32) {
    %c0_i32 = arith.constant 0 : i32
    %c0_i32_0 = arith.constant 0 : i32
    return %arg0, %arg1, %c0_i32 : i32, i32, i32
  }
}

module attributes {stable_mosaic.version = 11 : i64} {
  func.func @_convt_kernel(%arg0: i32, %arg1: i32, %arg2: memref<1x18x32xf32, #tpu.memory_space<vmem>>, %arg3: memref<96x32xf32, #tpu.memory_space<vmem>>, %arg4: memref<1x32xf32, #tpu.memory_space<vmem>>, %arg5: memref<1x16x32xf32, #tpu.memory_space<vmem>>) attributes {dimension_semantics = [#tpu.dimension_semantics<parallel>, #tpu.dimension_semantics<parallel>], iteration_bounds = array<i64: 2, 1>, scalar_prefetch = 0 : i64, scratch_operands = 0 : i64, tpu.core_type = #tpu.core_type<tc>, window_params = [{transform_indices = @transform_0, window_bounds = array<i64: 1, 18, 32>}, {pipeline_mode = #tpu.pipeline_mode<synchronous>, transform_indices = @transform_1, window_bounds = array<i64: 96, 32>}, {pipeline_mode = #tpu.pipeline_mode<synchronous>, transform_indices = @transform_2, window_bounds = array<i64: 1, 32>}, {transform_indices = @transform_3, window_bounds = array<i64: 1, 16, 32>}]} {
    %c0 = arith.constant 0 : index
    %c0_0 = arith.constant 0 : index
    %c0_1 = arith.constant 0 : index
    %0 = vector.load %arg2[%c0, %c0_0, %c0_1] : memref<1x18x32xf32, #tpu.memory_space<vmem>>, vector<1x16x32xf32>
    %1 = vector.shape_cast %0 : vector<1x16x32xf32> to vector<16x32xf32>
    %c0_2 = arith.constant 0 : index
    %c1 = arith.constant 1 : index
    %c0_3 = arith.constant 0 : index
    %2 = vector.load %arg2[%c0_2, %c1, %c0_3] : memref<1x18x32xf32, #tpu.memory_space<vmem>>, vector<1x16x32xf32>
    %3 = vector.shape_cast %2 : vector<1x16x32xf32> to vector<16x32xf32>
    %c0_4 = arith.constant 0 : index
    %c2 = arith.constant 2 : index
    %c0_5 = arith.constant 0 : index
    %4 = vector.load %arg2[%c0_4, %c2, %c0_5] : memref<1x18x32xf32, #tpu.memory_space<vmem>>, vector<1x16x32xf32>
    %5 = vector.shape_cast %4 : vector<1x16x32xf32> to vector<16x32xf32>
    %6 = tpu.concatenate %1, %3, %5 in 1 : vector<16x32xf32>, vector<16x32xf32>, vector<16x32xf32> -> vector<16x96xf32>
    %c0_6 = arith.constant 0 : index
    %c0_7 = arith.constant 0 : index
    %7 = vector.load %arg3[%c0_6, %c0_7] : memref<96x32xf32, #tpu.memory_space<vmem>>, vector<96x32xf32>
    %cst = arith.constant dense<0.000000e+00> : vector<16x32xf32>
    %8 = tpu.matmul %6, %7, %cst {dimension_numbers = #tpu.dot_dimension_numbers<[1], [0], [0], [1], [0, 0, 1, 1], [], []>} : vector<16x96xf32>, vector<96x32xf32>, vector<16x32xf32> -> vector<16x32xf32>
    %c0_8 = arith.constant 0 : index
    %c0_9 = arith.constant 0 : index
    %9 = vector.load %arg4[%c0_8, %c0_9] : memref<1x32xf32, #tpu.memory_space<vmem>>, vector<1x32xf32>
    %10 = vector.broadcast %9 : vector<1x32xf32> to vector<16x32xf32>
    %11 = arith.addf %8, %10 : vector<16x32xf32>
    %cst_10 = arith.constant 0.000000e+00 : f32
    %12 = vector.broadcast %cst_10 : f32 to vector<16x32xf32>
    %13 = arith.maximumf %11, %12 : vector<16x32xf32>
    %c0_11 = arith.constant 0 : index
    %c0_12 = arith.constant 0 : index
    %c0_13 = arith.constant 0 : index
    %14 = vector.load %arg5[%c0_11, %c0_12, %c0_13] : memref<1x16x32xf32, #tpu.memory_space<vmem>>, vector<1x16x32xf32>
    %15 = vector.shape_cast %14 : vector<1x16x32xf32> to vector<16x32xf32>
    %16 = vector.shape_cast %13 : vector<16x32xf32> to vector<1x16x32xf32>
    tpu.vector_store %arg5[%c0_11, %c0_12, %c0_13], %16 {strides = array<i32>} : memref<1x16x32xf32, #tpu.memory_space<vmem>>, vector<1x16x32xf32>,
    return
  }
  func.func @transform_0(%arg0: i32, %arg1: i32) -> (i32, i32, i32) {
    %c0_i32 = arith.constant 0 : i32
    %c0_i32_0 = arith.constant 0 : i32
    %c0_i32_1 = arith.constant 0 : i32
    return %arg0, %c0_i32, %c0_i32_0 : i32, i32, i32
  }
  func.func @transform_1(%arg0: i32, %arg1: i32) -> (i32, i32) {
    %c0_i32 = arith.constant 0 : i32
    %c0_i32_0 = arith.constant 0 : i32
    %c0_i32_1 = arith.constant 0 : i32
    return %c0_i32, %c0_i32_0 : i32, i32
  }
  func.func @transform_2(%arg0: i32, %arg1: i32) -> (i32, i32) {
    %c0_i32 = arith.constant 0 : i32
    %c0_i32_0 = arith.constant 0 : i32
    %c0_i32_1 = arith.constant 0 : i32
    return %c0_i32, %c0_i32_0 : i32, i32
  }
  func.func @transform_3(%arg0: i32, %arg1: i32) -> (i32, i32, i32) {
    %c0_i32 = arith.constant 0 : i32
    %c0_i32_0 = arith.constant 0 : i32
    return %arg0, %arg1, %c0_i32 : i32, i32, i32
  }
}

module attributes {stable_mosaic.version = 11 : i64} {
  func.func @_convt_kernel(%arg0: i32, %arg1: i32, %arg2: memref<1x34x16xf32, #tpu.memory_space<vmem>>, %arg3: memref<48x8xf32, #tpu.memory_space<vmem>>, %arg4: memref<1x8xf32, #tpu.memory_space<vmem>>, %arg5: memref<1x32x8xf32, #tpu.memory_space<vmem>>) attributes {dimension_semantics = [#tpu.dimension_semantics<parallel>, #tpu.dimension_semantics<parallel>], iteration_bounds = array<i64: 2, 1>, scalar_prefetch = 0 : i64, scratch_operands = 0 : i64, tpu.core_type = #tpu.core_type<tc>, window_params = [{transform_indices = @transform_0, window_bounds = array<i64: 1, 34, 16>}, {pipeline_mode = #tpu.pipeline_mode<synchronous>, transform_indices = @transform_1, window_bounds = array<i64: 48, 8>}, {pipeline_mode = #tpu.pipeline_mode<synchronous>, transform_indices = @transform_2, window_bounds = array<i64: 1, 8>}, {transform_indices = @transform_3, window_bounds = array<i64: 1, 32, 8>}]} {
    %c0 = arith.constant 0 : index
    %c0_0 = arith.constant 0 : index
    %c0_1 = arith.constant 0 : index
    %0 = vector.load %arg2[%c0, %c0_0, %c0_1] : memref<1x34x16xf32, #tpu.memory_space<vmem>>, vector<1x32x16xf32>
    %1 = vector.shape_cast %0 : vector<1x32x16xf32> to vector<32x16xf32>
    %c0_2 = arith.constant 0 : index
    %c1 = arith.constant 1 : index
    %c0_3 = arith.constant 0 : index
    %2 = vector.load %arg2[%c0_2, %c1, %c0_3] : memref<1x34x16xf32, #tpu.memory_space<vmem>>, vector<1x32x16xf32>
    %3 = vector.shape_cast %2 : vector<1x32x16xf32> to vector<32x16xf32>
    %c0_4 = arith.constant 0 : index
    %c2 = arith.constant 2 : index
    %c0_5 = arith.constant 0 : index
    %4 = vector.load %arg2[%c0_4, %c2, %c0_5] : memref<1x34x16xf32, #tpu.memory_space<vmem>>, vector<1x32x16xf32>
    %5 = vector.shape_cast %4 : vector<1x32x16xf32> to vector<32x16xf32>
    %6 = tpu.concatenate %1, %3, %5 in 1 : vector<32x16xf32>, vector<32x16xf32>, vector<32x16xf32> -> vector<32x48xf32>
    %c0_6 = arith.constant 0 : index
    %c0_7 = arith.constant 0 : index
    %7 = vector.load %arg3[%c0_6, %c0_7] : memref<48x8xf32, #tpu.memory_space<vmem>>, vector<48x8xf32>
    %cst = arith.constant dense<0.000000e+00> : vector<32x8xf32>
    %8 = tpu.matmul %6, %7, %cst {dimension_numbers = #tpu.dot_dimension_numbers<[1], [0], [0], [1], [0, 0, 1, 1], [], []>} : vector<32x48xf32>, vector<48x8xf32>, vector<32x8xf32> -> vector<32x8xf32>
    %c0_8 = arith.constant 0 : index
    %c0_9 = arith.constant 0 : index
    %9 = vector.load %arg4[%c0_8, %c0_9] : memref<1x8xf32, #tpu.memory_space<vmem>>, vector<1x8xf32>
    %10 = vector.broadcast %9 : vector<1x8xf32> to vector<32x8xf32>
    %11 = arith.addf %8, %10 : vector<32x8xf32>
    %c0_10 = arith.constant 0 : index
    %c0_11 = arith.constant 0 : index
    %c0_12 = arith.constant 0 : index
    %12 = vector.load %arg5[%c0_10, %c0_11, %c0_12] : memref<1x32x8xf32, #tpu.memory_space<vmem>>, vector<1x32x8xf32>
    %13 = vector.shape_cast %12 : vector<1x32x8xf32> to vector<32x8xf32>
    %14 = vector.shape_cast %11 : vector<32x8xf32> to vector<1x32x8xf32>
    tpu.vector_store %arg5[%c0_10, %c0_11, %c0_12], %14 {strides = array<i32>} : memref<1x32x8xf32, #tpu.memory_space<vmem>>, vector<1x32x8xf32>,
    return
  }
  func.func @transform_0(%arg0: i32, %arg1: i32) -> (i32, i32, i32) {
    %c0_i32 = arith.constant 0 : i32
    %c0_i32_0 = arith.constant 0 : i32
    %c0_i32_1 = arith.constant 0 : i32
    return %arg0, %c0_i32, %c0_i32_0 : i32, i32, i32
  }
  func.func @transform_1(%arg0: i32, %arg1: i32) -> (i32, i32) {
    %c0_i32 = arith.constant 0 : i32
    %c0_i32_0 = arith.constant 0 : i32
    %c0_i32_1 = arith.constant 0 : i32
    return %c0_i32, %c0_i32_0 : i32, i32
  }
  func.func @transform_2(%arg0: i32, %arg1: i32) -> (i32, i32) {
    %c0_i32 = arith.constant 0 : i32
    %c0_i32_0 = arith.constant 0 : i32
    %c0_i32_1 = arith.constant 0 : i32
    return %c0_i32, %c0_i32_0 : i32, i32
  }
  func.func @transform_3(%arg0: i32, %arg1: i32) -> (i32, i32, i32) {
    %c0_i32 = arith.constant 0 : i32
    %c0_i32_0 = arith.constant 0 : i32
    return %arg0, %arg1, %c0_i32 : i32, i32, i32
  }
}

</mosaic_0001>

<llo_original>
// kernel: decoder1d_forward.10
$region0: #{decoder1d_forward.10}
  #allocation0 [shape = 'u32[]', space=smem, size = 0x4, offset = 0x4, fixed_abs, tag = 'smem constant byte address 0x4 - core index']
  #allocation1 [shape = 'u32[72,128]{1,0:T(1,128)}', space=vmem, size = 0x9000, scoped, tag = 'internal scratch']
  %s0 = inlined_call_operand.vmem [shape: f32[2,6,8], index: 0, kind: input, shape index: {}]
  %s1 = inlined_call_operand.vmem [shape: f32[24,32], index: 1, kind: input, shape index: {}]
  %s2 = inlined_call_operand.vmem [shape: f32[1,32], index: 2, kind: input, shape index: {}]
  %s3 = inlined_call_operand.vmem [shape: f32[2,4,32], index: 3, kind: output, shape index: {}]
  %s4 = sld [smem:[#allocation0]]
  $region45: #{decoder1d_forward.10} parent=0
    _
  %s6 = ssub.s32 1, %s4
  %s7 = scalar_select 0, %s6, %s4
  loop: start=0, step=1, limit=4
  $region2: #{decoder1d_forward.10} parent=0 // loop_pre_header
    _
  $region3: #{decoder1d_forward.10} parent=0 // loop_header
    %s9 = sphi 0, %s13
    %p10 = scmp.ge.s32.totalorder %s9, 4
    %s16 = sphi 0, %s28
    %s17 = sphi 0, %s24
    %s18 = sphi 0, %s16
    %s19 = sphi 0, %s17
    %s20 = sphi 0, %s18
    %s21 = sphi 0, %s19
    %s31 = sphi 0, %s33
    %s34 = sphi 0, %s31
    %s35 = sphi 0, %s34
    %s51 = sphi 0, %s35
    %s55 = sphi 0, %s55
    %s57 = sphi 0, %s55
    %s58 = sphi 0, %s57
    %s72 = sphi 0, %s58
    %s76 = sphi 0, %s76
    %s78 = sphi 0, %s76
    %s79 = sphi 0, %s78
    %s93 = sphi 0, %s79
    %s101 = sphi 0, %s103
    %s104 = sphi 0, %s101
    %s105 = sphi 0, %s104
    %s121 = sphi 0, %s105
  $region4: #{decoder1d_forward.10} parent=0 // loop_header_branch
    %12 = sbr.rel (%p10) target = $region8
  $region5: #{decoder1d_forward.10} parent=0 // loop_body
    %s14 = ssub.s32 %s9, 1
    %s15 = ssub.s32 %s9, 2
    %s22 = sadd.s32 1, %s17
    %p23 = scmp.ge.s32.totalorder %s22, 1
    %s24 = scalar_select %p23, 0, %s22
    %s25 = sadd.s32 1, %s16
    %s26 = scalar_select %p23, %s25, %s16
    %p27 = scmp.ge.s32.totalorder %s26, 2
    %s28 = scalar_select %p27, 0, %s26
    %s29 = ssub.s32 %s16, %s28
    %p30 = scmp.eq.s32.totalorder %s29, 0
    %s32 = sadd.s32 %s31, 1
    %s33 = scalar_select %p30, %s31, %s32
    %p36 = pneg %p30
    %p37 = scmp.eq.s32.totalorder %s9, 1
    %p38 = por %p36, %p37
    %p39 = scmp.ne.s32.totalorder %s31, %s34
    %p40 = scmp.eq.s32.totalorder %s9, 0
    %p41 = por %p39, %p40
    %p42 = scmp.ne.s32.totalorder %s31, %s34
    %p43 = scmp.eq.s32.totalorder %s14, 1
    %p44 = por %p42, %p43
    %p45 = scmp.ne.s32.totalorder %s34, %s35
    %p46 = scmp.eq.s32.totalorder %s14, 0
    %p47 = por %p45, %p46
    %p48 = scmp.ne.s32.totalorder %s34, %s35
    %p49 = scmp.eq.s32.totalorder %s15, 1
    %p50 = por %p48, %p49
    %p52 = scmp.ne.s32.totalorder %s35, %s51
    %p53 = scmp.eq.s32.totalorder %s15, 0
    %p54 = por %p52, %p53
    %s56 = sadd.s32 %s55, 1
    %p59 = scmp.eq.s32.totalorder %s9, 1
    %p60 = scmp.ne.s32.totalorder %s55, %s57
    %p61 = scmp.eq.s32.totalorder %s9, 0
    %p62 = por %p60, %p61
    %p63 = scmp.ne.s32.totalorder %s55, %s57
    %p64 = scmp.eq.s32.totalorder %s14, 1
    %p65 = por %p63, %p64
    %p66 = scmp.ne.s32.totalorder %s57, %s58
    %p67 = scmp.eq.s32.totalorder %s14, 0
    %p68 = por %p66, %p67
    %p69 = scmp.ne.s32.totalorder %s57, %s58
    %p70 = scmp.eq.s32.totalorder %s15, 1
    %p71 = por %p69, %p70
    %p73 = scmp.ne.s32.totalorder %s58, %s72
    %p74 = scmp.eq.s32.totalorder %s15, 0
    %p75 = por %p73, %p74
    %s77 = sadd.s32 %s76, 1
    %p80 = scmp.eq.s32.totalorder %s9, 1
    %p81 = scmp.ne.s32.totalorder %s76, %s78
    %p82 = scmp.eq.s32.totalorder %s9, 0
    %p83 = por %p81, %p82
    %p84 = scmp.ne.s32.totalorder %s76, %s78
    %p85 = scmp.eq.s32.totalorder %s14, 1
    %p86 = por %p84, %p85
    %p87 = scmp.ne.s32.totalorder %s78, %s79
    %p88 = scmp.eq.s32.totalorder %s14, 0
    %p89 = por %p87, %p88
    %p90 = scmp.ne.s32.totalorder %s78, %s79
    %p91 = scmp.eq.s32.totalorder %s15, 1
    %p92 = por %p90, %p91
    %p94 = scmp.ne.s32.totalorder %s79, %s93
    %p95 = scmp.eq.s32.totalorder %s15, 0
    %p96 = por %p94, %p95
    %s97 = ssub.s32 %s16, %s28
    %s98 = ssub.s32 %s17, %s24
    %s99 = sor.u32 %s97, %s98
    %p100 = scmp.eq.s32.totalorder %s99, 0
    %s102 = sadd.s32 %s101, 1
    %s103 = scalar_select %p100, %s101, %s102
    %p106 = pneg %p100
    %p107 = scmp.eq.s32.totalorder %s9, 1
    %p108 = por %p106, %p107
    %p109 = scmp.ne.s32.totalorder %s101, %s104
    %p110 = scmp.eq.s32.totalorder %s9, 0
    %p111 = por %p109, %p110
    %p112 = scmp.ne.s32.totalorder %s101, %s104
    %p113 = scmp.eq.s32.totalorder %s14, 1
    %p114 = por %p112, %p113
    %p115 = scmp.ne.s32.totalorder %s104, %s105
    %p116 = scmp.eq.s32.totalorder %s14, 0
    %p117 = por %p115, %p116
    %p118 = scmp.ne.s32.totalorder %s104, %s105
    %p119 = scmp.eq.s32.totalorder %s15, 1
    %p120 = por %p118, %p119
    %p122 = scmp.ne.s32.totalorder %s105, %s121
    %p123 = scmp.eq.s32.totalorder %s15, 0
    %p124 = por %p122, %p123
    %p125 = scmp.le.s32.totalorder 1, %s9
    %p126 = scmp.lt.s32.totalorder %s9, 3
    %p127 = pnand %p125, %p126
    %p128 = pneg %p127
    // Predicated region
    $region9: #{decoder1d_forward.10} parent=5 // pred_check
      _
    $region10: #{decoder1d_forward.10} parent=5 // pred_check_branch
      %130 = sbr.rel (%p127) target = $region12
    $region11: #{decoder1d_forward.10} parent=5 // pred_region
      %s131 = ssub.s32 %s9, 1
      // Predicated region
      $region13: #{decoder1d_forward.10} parent=11 // pred_check
        %p132 = pneg %p68
      $region14: #{decoder1d_forward.10} parent=11 // pred_check_branch
        %134 = sbr.rel (%p132) target = $region16
      $region15: #{decoder1d_forward.10} parent=11 // pred_region
        _
      $region16: #{decoder1d_forward.10} parent=11 // pred_fallthru
        _
      // Predicated region
      $region17: #{decoder1d_forward.10} parent=11 // pred_check
        %p135 = pneg %p89
      $region18: #{decoder1d_forward.10} parent=11 // pred_check_branch
        %137 = sbr.rel (%p135) target = $region20
      $region19: #{decoder1d_forward.10} parent=11 // pred_region
        _
      $region20: #{decoder1d_forward.10} parent=11 // pred_fallthru
        _
    $region12: #{decoder1d_forward.10} parent=5 // pred_fallthru
      _
    %p138 = scmp.lt.s32.totalorder %s9, 2
    // Predicated region
    $region21: #{decoder1d_forward.10} parent=5 // pred_check
      %p139 = pneg %p138
    $region22: #{decoder1d_forward.10} parent=5 // pred_check_branch
      %141 = sbr.rel (%p139) target = $region24
    $region23: #{decoder1d_forward.10} parent=5 // pred_region
      // Predicated region
      $region25: #{decoder1d_forward.10} parent=23 // pred_check
        %p142 = pneg %p41
      $region26: #{decoder1d_forward.10} parent=23 // pred_check_branch
        %144 = sbr.rel (%p142) target = $region28
      $region27: #{decoder1d_forward.10} parent=23 // pred_region
        %p145 = scmp.lt.s32.totalorder %s16, 1
        %s146 = scalar_select %p145, %s16, 1
        %s147 = smul.addr %s146, 8
        %s148 = scalar_lea.vmem %s0, %s147
      $region28: #{decoder1d_forward.10} parent=23 // pred_fallthru
        _
    $region24: #{decoder1d_forward.10} parent=5 // pred_fallthru
      _
    %p149 = scmp.le.s32.totalorder 1, %s9
    %p150 = scmp.lt.s32.totalorder %s9, 3
    %p151 = pnand %p149, %p150
    %p152 = pneg %p151
    // Predicated region
    $region29: #{decoder1d_forward.10} parent=5 // pred_check
      _
    $region30: #{decoder1d_forward.10} parent=5 // pred_check_branch
      %154 = sbr.rel (%p151) target = $region32
    $region31: #{decoder1d_forward.10} parent=5 // pred_region
      %s155 = ssub.s32 %s9, 1
      %p156 = scmp.lt.s32.totalorder %s18, 1
      %s157 = scalar_select %p156, %s18, 1
      %s158 = smul.addr %s157, 8
      %s159 = scalar_lea.vmem %s0, %s158
      %p160 = pneg %p47
      %p161 = pneg %p44
      %p162 = pneg %p68
      %p163 = pneg %p65
      %p164 = pneg %p89
      %p165 = pneg %p86
      %p166 = pneg %p117
      %p167 = pneg %p114
      %p168 = scmp.lt.s32.totalorder %s18, 1
      %s169 = scalar_select %p168, %s18, 1
      %p170 = scmp.lt.s32.totalorder %s19, 0
      %s171 = scalar_select %p170, %s19, 0
      %s172 = sadd.s32 %s171, %s169
      %s173 = smul.addr %s172, 4
      %s174 = scalar_lea.vmem %s3, %s173
      %p175 = scmp.lt.s32.totalorder %s18, 1
      %s176 = scalar_select %p175, %s18, 1
      %s177 = smul.addr %s176, 8
      %s178 = scalar_lea.vmem %s0, %s177
      %p179 = scmp.lt.s32.totalorder %s18, 1
      %s180 = scalar_select %p179, %s18, 1
      %p181 = scmp.lt.s32.totalorder %s19, 0
      %s182 = scalar_select %p181, %s19, 0
      %s183 = sadd.s32 %s182, %s180
      %s184 = smul.addr %s183, 4
      %s185 = scalar_lea.vmem %s3, %s184
      %v186 = vld [vmem:[%s178] sm:$0xf]
      %v187 = vld [vmem:[%s178 + $0x1] sm:$0xf]
      %v188 = vld [vmem:[%s178 + $0x2] sm:$0xf]
      %190 = vrot.lane.b32.xlu0 %v187, 8
      %v191 = vpop.permute.xlu0 %190
      %194 = vrot.lane.b32.xlu0 %v188, 16
      %v195 = vpop.permute.xlu0 %194
      %vm197 = vcmask 64512
      %v198 = vsel %vm197, %v186, %v191
      %vm199 = vcmask 130048
      %v200 = vsel %vm199, %v198, %v195
      %v201 = vld [vmem:[%s1] sm:$0xff]
      %v202 = vld [vmem:[%s1 + $0x8] sm:$0xff]
      %v203 = vld [vmem:[%s1 + $0x10] sm:$0xff]
      %v204 = vld [vmem:[%s2] sm:$0x1]
      %v206 = vperm.slane %v204, 0
      %vm208 = vcmask 195584
      %v210 = vsel %vm208, %v200, 0
      %212 = vmatpush.msra.mxu0 0.0
      %213 = vmatpush.msra.mxu0 0.0
      %214 = vmatpush.msra.mxu0 0.0
      %215 = vmatpush.msra.mxu0 0.0
      %216 = vmatpush.msra.mxu0 0.0
      %217 = vmatpush.msra.mxu0 0.0
      %218 = vmatpush.msra.mxu0 0.0
      %219 = vmatpush.msra.mxu0 0.0
      %220 = vmatpush.msra.mxu0 0.0
      %221 = vmatpush.msra.mxu0 0.0
      %222 = vmatpush.msra.mxu0 0.0
      %223 = vmatpush.msra.mxu0 0.0
      %224 = vmatpush.msra.mxu0 0.0
      %225 = vmatpush.msra.mxu0 %v203
      %226 = vmatpush.msra.mxu0 %v202
      %227 = vmatpush.msra.mxu0 %v201
      %228 = vmatmul.f32.gmra.mxu0 %v210
      %v229 = vpop.f32.mrf.mxu0
      %v230 = vadd.f32 %v206, %v229
      %231 = vdwg.mxu0
      %vm232 = vcmask 257024
      %233 = vst.msk [vmem:[%s185] sm:$0xf] %vm232, %v230
      %p234 = scmp.lt.s32.totalorder %s18, 1
      %s235 = scalar_select %p234, %s18, 1
      %p236 = scmp.lt.s32.totalorder %s19, 0
      %s237 = scalar_select %p236, %s19, 0
      %s238 = sadd.s32 %s237, %s235
      %s239 = smul.addr %s238, 4
      %s240 = scalar_lea.vmem %s3, %s239
      // Predicated region
      $region33: #{decoder1d_forward.10} parent=31 // pred_check
        %p241 = pneg %p114
      $region34: #{decoder1d_forward.10} parent=31 // pred_check_branch
        %243 = sbr.rel (%p241) target = $region36
      $region35: #{decoder1d_forward.10} parent=31 // pred_region
        _
      $region36: #{decoder1d_forward.10} parent=31 // pred_fallthru
        _
    $region32: #{decoder1d_forward.10} parent=5 // pred_fallthru
      _
    %p244 = scmp.le.s32.totalorder 2, %s9
    // Predicated region
    $region37: #{decoder1d_forward.10} parent=5 // pred_check
      %p245 = pneg %p244
    $region38: #{decoder1d_forward.10} parent=5 // pred_check_branch
      %247 = sbr.rel (%p245) target = $region40
    $region39: #{decoder1d_forward.10} parent=5 // pred_region
      %s248 = ssub.s32 %s9, 2
      // Predicated region
      $region41: #{decoder1d_forward.10} parent=39 // pred_check
        %p249 = pneg %p120
      $region42: #{decoder1d_forward.10} parent=39 // pred_check_branch
        %251 = sbr.rel (%p249) target = $region44
      $region43: #{decoder1d_forward.10} parent=39 // pred_region
        %p252 = scmp.lt.s32.totalorder %s20, 1
        %s253 = scalar_select %p252, %s20, 1
        %p254 = scmp.lt.s32.totalorder %s21, 0
        %s255 = scalar_select %p254, %s21, 0
        %s256 = sadd.s32 %s255, %s253
        %s257 = smul.addr %s256, 4
        %s258 = scalar_lea.vmem %s3, %s257
      $region44: #{decoder1d_forward.10} parent=39 // pred_fallthru
        _
    $region40: #{decoder1d_forward.10} parent=5 // pred_fallthru
      _
  $region6: #{decoder1d_forward.10} parent=0 // loop_footer
    %s13 = sadd.s32 1, %s9
  $region7: #{decoder1d_forward.10} parent=0 // loop_footer_branch
    %8 = sbr.rel target = $region3
  $region8: #{decoder1d_forward.10} parent=0 // loop_exit
    _

// kernel: decoder1d_forward.11
$region0: #{decoder1d_forward.11}
  #allocation0 [shape = 'u32[]', space=smem, size = 0x4, offset = 0x4, fixed_abs, tag = 'smem constant byte address 0x4 - core index']
  #allocation1 [shape = 'u32[72,128]{1,0:T(1,128)}', space=vmem, size = 0x9000, scoped, tag = 'internal scratch']
  %s0 = inlined_call_operand.vmem [shape: f32[2,6,32], index: 0, kind: input, shape index: {}]
  %s1 = inlined_call_operand.vmem [shape: f32[96,16], index: 1, kind: input, shape index: {}]
  %s2 = inlined_call_operand.vmem [shape: f32[1,16], index: 2, kind: input, shape index: {}]
  %s3 = inlined_call_operand.vmem [shape: f32[16,32], index: 3, kind: input, shape index: {}]
  %s4 = inlined_call_operand.vmem [shape: f32[1,32], index: 4, kind: input, shape index: {}]
  %s5 = inlined_call_operand.vmem [shape: f32[2,4,32], index: 5, kind: output, shape index: {}]
  %s6 = sld [smem:[#allocation0]]
  $region53: #{decoder1d_forward.11} parent=0
    _
  %s8 = ssub.s32 1, %s6
  %s9 = scalar_select 0, %s8, %s6
  loop: start=0, step=1, limit=4
  $region2: #{decoder1d_forward.11} parent=0 // loop_pre_header
    _
  $region3: #{decoder1d_forward.11} parent=0 // loop_header
    %s11 = sphi 0, %s15
    %p12 = scmp.ge.s32.totalorder %s11, 4
    %s18 = sphi 0, %s30
    %s19 = sphi 0, %s26
    %s20 = sphi 0, %s18
    %s21 = sphi 0, %s19
    %s22 = sphi 0, %s20
    %s23 = sphi 0, %s21
    %s33 = sphi 0, %s35
    %s36 = sphi 0, %s33
    %s37 = sphi 0, %s36
    %s53 = sphi 0, %s37
    %s57 = sphi 0, %s57
    %s59 = sphi 0, %s57
    %s60 = sphi 0, %s59
    %s74 = sphi 0, %s60
    %s78 = sphi 0, %s78
    %s80 = sphi 0, %s78
    %s81 = sphi 0, %s80
    %s95 = sphi 0, %s81
    %s99 = sphi 0, %s99
    %s101 = sphi 0, %s99
    %s102 = sphi 0, %s101
    %s116 = sphi 0, %s102
    %s120 = sphi 0, %s120
    %s122 = sphi 0, %s120
    %s123 = sphi 0, %s122
    %s137 = sphi 0, %s123
    %s145 = sphi 0, %s147
    %s148 = sphi 0, %s145
    %s149 = sphi 0, %s148
    %s165 = sphi 0, %s149
  $region4: #{decoder1d_forward.11} parent=0 // loop_header_branch
    %14 = sbr.rel (%p12) target = $region8
  $region5: #{decoder1d_forward.11} parent=0 // loop_body
    %s16 = ssub.s32 %s11, 1
    %s17 = ssub.s32 %s11, 2
    %s24 = sadd.s32 1, %s19
    %p25 = scmp.ge.s32.totalorder %s24, 1
    %s26 = scalar_select %p25, 0, %s24
    %s27 = sadd.s32 1, %s18
    %s28 = scalar_select %p25, %s27, %s18
    %p29 = scmp.ge.s32.totalorder %s28, 2
    %s30 = scalar_select %p29, 0, %s28
    %s31 = ssub.s32 %s18, %s30
    %p32 = scmp.eq.s32.totalorder %s31, 0
    %s34 = sadd.s32 %s33, 1
    %s35 = scalar_select %p32, %s33, %s34
    %p38 = pneg %p32
    %p39 = scmp.eq.s32.totalorder %s11, 1
    %p40 = por %p38, %p39
    %p41 = scmp.ne.s32.totalorder %s33, %s36
    %p42 = scmp.eq.s32.totalorder %s11, 0
    %p43 = por %p41, %p42
    %p44 = scmp.ne.s32.totalorder %s33, %s36
    %p45 = scmp.eq.s32.totalorder %s16, 1
    %p46 = por %p44, %p45
    %p47 = scmp.ne.s32.totalorder %s36, %s37
    %p48 = scmp.eq.s32.totalorder %s16, 0
    %p49 = por %p47, %p48
    %p50 = scmp.ne.s32.totalorder %s36, %s37
    %p51 = scmp.eq.s32.totalorder %s17, 1
    %p52 = por %p50, %p51
    %p54 = scmp.ne.s32.totalorder %s37, %s53
    %p55 = scmp.eq.s32.totalorder %s17, 0
    %p56 = por %p54, %p55
    %s58 = sadd.s32 %s57, 1
    %p61 = scmp.eq.s32.totalorder %s11, 1
    %p62 = scmp.ne.s32.totalorder %s57, %s59
    %p63 = scmp.eq.s32.totalorder %s11, 0
    %p64 = por %p62, %p63
    %p65 = scmp.ne.s32.totalorder %s57, %s59
    %p66 = scmp.eq.s32.totalorder %s16, 1
    %p67 = por %p65, %p66
    %p68 = scmp.ne.s32.totalorder %s59, %s60
    %p69 = scmp.eq.s32.totalorder %s16, 0
    %p70 = por %p68, %p69
    %p71 = scmp.ne.s32.totalorder %s59, %s60
    %p72 = scmp.eq.s32.totalorder %s17, 1
    %p73 = por %p71, %p72
    %p75 = scmp.ne.s32.totalorder %s60, %s74
    %p76 = scmp.eq.s32.totalorder %s17, 0
    %p77 = por %p75, %p76
    %s79 = sadd.s32 %s78, 1
    %p82 = scmp.eq.s32.totalorder %s11, 1
    %p83 = scmp.ne.s32.totalorder %s78, %s80
    %p84 = scmp.eq.s32.totalorder %s11, 0
    %p85 = por %p83, %p84
    %p86 = scmp.ne.s32.totalorder %s78, %s80
    %p87 = scmp.eq.s32.totalorder %s16, 1
    %p88 = por %p86, %p87
    %p89 = scmp.ne.s32.totalorder %s80, %s81
    %p90 = scmp.eq.s32.totalorder %s16, 0
    %p91 = por %p89, %p90
    %p92 = scmp.ne.s32.totalorder %s80, %s81
    %p93 = scmp.eq.s32.totalorder %s17, 1
    %p94 = por %p92, %p93
    %p96 = scmp.ne.s32.totalorder %s81, %s95
    %p97 = scmp.eq.s32.totalorder %s17, 0
    %p98 = por %p96, %p97
    %s100 = sadd.s32 %s99, 1
    %p103 = scmp.eq.s32.totalorder %s11, 1
    %p104 = scmp.ne.s32.totalorder %s99, %s101
    %p105 = scmp.eq.s32.totalorder %s11, 0
    %p106 = por %p104, %p105
    %p107 = scmp.ne.s32.totalorder %s99, %s101
    %p108 = scmp.eq.s32.totalorder %s16, 1
    %p109 = por %p107, %p108
    %p110 = scmp.ne.s32.totalorder %s101, %s102
    %p111 = scmp.eq.s32.totalorder %s16, 0
    %p112 = por %p110, %p111
    %p113 = scmp.ne.s32.totalorder %s101, %s102
    %p114 = scmp.eq.s32.totalorder %s17, 1
    %p115 = por %p113, %p114
    %p117 = scmp.ne.s32.totalorder %s102, %s116
    %p118 = scmp.eq.s32.totalorder %s17, 0
    %p119 = por %p117, %p118
    %s121 = sadd.s32 %s120, 1
    %p124 = scmp.eq.s32.totalorder %s11, 1
    %p125 = scmp.ne.s32.totalorder %s120, %s122
    %p126 = scmp.eq.s32.totalorder %s11, 0
    %p127 = por %p125, %p126
    %p128 = scmp.ne.s32.totalorder %s120, %s122
    %p129 = scmp.eq.s32.totalorder %s16, 1
    %p130 = por %p128, %p129
    %p131 = scmp.ne.s32.totalorder %s122, %s123
    %p132 = scmp.eq.s32.totalorder %s16, 0
    %p133 = por %p131, %p132
    %p134 = scmp.ne.s32.totalorder %s122, %s123
    %p135 = scmp.eq.s32.totalorder %s17, 1
    %p136 = por %p134, %p135
    %p138 = scmp.ne.s32.totalorder %s123, %s137
    %p139 = scmp.eq.s32.totalorder %s17, 0
    %p140 = por %p138, %p139
    %s141 = ssub.s32 %s18, %s30
    %s142 = ssub.s32 %s19, %s26
    %s143 = sor.u32 %s141, %s142
    %p144 = scmp.eq.s32.totalorder %s143, 0
    %s146 = sadd.s32 %s145, 1
    %s147 = scalar_select %p144, %s145, %s146
    %p150 = pneg %p144
    %p151 = scmp.eq.s32.totalorder %s11, 1
    %p152 = por %p150, %p151
    %p153 = scmp.ne.s32.totalorder %s145, %s148
    %p154 = scmp.eq.s32.totalorder %s11, 0
    %p155 = por %p153, %p154
    %p156 = scmp.ne.s32.totalorder %s145, %s148
    %p157 = scmp.eq.s32.totalorder %s16, 1
    %p158 = por %p156, %p157
    %p159 = scmp.ne.s32.totalorder %s148, %s149
    %p160 = scmp.eq.s32.totalorder %s16, 0
    %p161 = por %p159, %p160
    %p162 = scmp.ne.s32.totalorder %s148, %s149
    %p163 = scmp.eq.s32.totalorder %s17, 1
    %p164 = por %p162, %p163
    %p166 = scmp.ne.s32.totalorder %s149, %s165
    %p167 = scmp.eq.s32.totalorder %s17, 0
    %p168 = por %p166, %p167
    %p169 = scmp.le.s32.totalorder 1, %s11
    %p170 = scmp.lt.s32.totalorder %s11, 3
    %p171 = pnand %p169, %p170
    %p172 = pneg %p171
    // Predicated region
    $region9: #{decoder1d_forward.11} parent=5 // pred_check
      _
    $region10: #{decoder1d_forward.11} parent=5 // pred_check_branch
      %174 = sbr.rel (%p171) target = $region12
    $region11: #{decoder1d_forward.11} parent=5 // pred_region
      %s175 = ssub.s32 %s11, 1
      // Predicated region
      $region13: #{decoder1d_forward.11} parent=11 // pred_check
        %p176 = pneg %p70
      $region14: #{decoder1d_forward.11} parent=11 // pred_check_branch
        %178 = sbr.rel (%p176) target = $region16
      $region15: #{decoder1d_forward.11} parent=11 // pred_region
        _
      $region16: #{decoder1d_forward.11} parent=11 // pred_fallthru
        _
      // Predicated region
      $region17: #{decoder1d_forward.11} parent=11 // pred_check
        %p179 = pneg %p91
      $region18: #{decoder1d_forward.11} parent=11 // pred_check_branch
        %181 = sbr.rel (%p179) target = $region20
      $region19: #{decoder1d_forward.11} parent=11 // pred_region
        _
      $region20: #{decoder1d_forward.11} parent=11 // pred_fallthru
        _
      // Predicated region
      $region21: #{decoder1d_forward.11} parent=11 // pred_check
        %p182 = pneg %p112
      $region22: #{decoder1d_forward.11} parent=11 // pred_check_branch
        %184 = sbr.rel (%p182) target = $region24
      $region23: #{decoder1d_forward.11} parent=11 // pred_region
        _
      $region24: #{decoder1d_forward.11} parent=11 // pred_fallthru
        _
      // Predicated region
      $region25: #{decoder1d_forward.11} parent=11 // pred_check
        %p185 = pneg %p133
      $region26: #{decoder1d_forward.11} parent=11 // pred_check_branch
        %187 = sbr.rel (%p185) target = $region28
      $region27: #{decoder1d_forward.11} parent=11 // pred_region
        _
      $region28: #{decoder1d_forward.11} parent=11 // pred_fallthru
        _
    $region12: #{decoder1d_forward.11} parent=5 // pred_fallthru
      _
    %p188 = scmp.lt.s32.totalorder %s11, 2
    // Predicated region
    $region29: #{decoder1d_forward.11} parent=5 // pred_check
      %p189 = pneg %p188
    $region30: #{decoder1d_forward.11} parent=5 // pred_check_branch
      %191 = sbr.rel (%p189) target = $region32
    $region31: #{decoder1d_forward.11} parent=5 // pred_region
      // Predicated region
      $region33: #{decoder1d_forward.11} parent=31 // pred_check
        %p192 = pneg %p43
      $region34: #{decoder1d_forward.11} parent=31 // pred_check_branch
        %194 = sbr.rel (%p192) target = $region36
      $region35: #{decoder1d_forward.11} parent=31 // pred_region
        %p195 = scmp.lt.s32.totalorder %s18, 1
        %s196 = scalar_select %p195, %s18, 1
        %s197 = smul.addr %s196, 8
        %s198 = scalar_lea.vmem %s0, %s197
      $region36: #{decoder1d_forward.11} parent=31 // pred_fallthru
        _
    $region32: #{decoder1d_forward.11} parent=5 // pred_fallthru
      _
    %p199 = scmp.le.s32.totalorder 1, %s11
    %p200 = scmp.lt.s32.totalorder %s11, 3
    %p201 = pnand %p199, %p200
    %p202 = pneg %p201
    // Predicated region
    $region37: #{decoder1d_forward.11} parent=5 // pred_check
      _
    $region38: #{decoder1d_forward.11} parent=5 // pred_check_branch
      %204 = sbr.rel (%p201) target = $region40
    $region39: #{decoder1d_forward.11} parent=5 // pred_region
      %s205 = ssub.s32 %s11, 1
      %p206 = scmp.lt.s32.totalorder %s20, 1
      %s207 = scalar_select %p206, %s20, 1
      %s208 = smul.addr %s207, 8
      %s209 = scalar_lea.vmem %s0, %s208
      %p210 = pneg %p49
      %p211 = pneg %p46
      %p212 = pneg %p70
      %p213 = pneg %p67
      %p214 = pneg %p91
      %p215 = pneg %p88
      %p216 = pneg %p112
      %p217 = pneg %p109
      %p218 = pneg %p133
      %p219 = pneg %p130
      %p220 = pneg %p161
      %p221 = pneg %p158
      %p222 = scmp.lt.s32.totalorder %s20, 1
      %s223 = scalar_select %p222, %s20, 1
      %p224 = scmp.lt.s32.totalorder %s21, 0
      %s225 = scalar_select %p224, %s21, 0
      %s226 = sadd.s32 %s225, %s223
      %s227 = smul.addr %s226, 4
      %s228 = scalar_lea.vmem %s5, %s227
      %p229 = scmp.lt.s32.totalorder %s20, 1
      %s230 = scalar_select %p229, %s20, 1
      %s231 = smul.addr %s230, 8
      %s232 = scalar_lea.vmem %s0, %s231
      %p233 = scmp.lt.s32.totalorder %s20, 1
      %s234 = scalar_select %p233, %s20, 1
      %p235 = scmp.lt.s32.totalorder %s21, 0
      %s236 = scalar_select %p235, %s21, 0
      %s237 = sadd.s32 %s236, %s234
      %s238 = smul.addr %s237, 4
      %s239 = scalar_lea.vmem %s5, %s238
      %v240 = vld [vmem:[%s232] sm:$0xf]
      %v241 = vld [vmem:[%s232 + $0x1] sm:$0xf]
      %v242 = vld [vmem:[%s232 + $0x2] sm:$0xf]
      %244 = vrot.lane.b32.xlu0 %v241, 32
      %v245 = vpop.permute.xlu0 %244
      %248 = vrot.lane.b32.xlu0 %v242, 64
      %v249 = vpop.permute.xlu0 %248
      %vm251 = vcmask 261120
      %v252 = vsel %vm251, %v240, %v245
      %vm253 = vcmask 523264
      %v254 = vsel %vm253, %v252, %v249
      %v255 = vmax.f32 %v254, 0.0
      %v256 = vld [vmem:[%s1] sm:$0xff]
      %v257 = vld [vmem:[%s1 + $0x8] sm:$0xff]
      %v258 = vld [vmem:[%s1 + $0x10] sm:$0xff]
      %v259 = vld [vmem:[%s1 + $0x18] sm:$0xff]
      %v260 = vld [vmem:[%s1 + $0x20] sm:$0xff]
      %v261 = vld [vmem:[%s1 + $0x28] sm:$0xff]
      %v262 = vld [vmem:[%s1 + $0x30] sm:$0xff]
      %v263 = vld [vmem:[%s1 + $0x38] sm:$0xff]
      %v264 = vld [vmem:[%s1 + $0x40] sm:$0xff]
      %v265 = vld [vmem:[%s1 + $0x48] sm:$0xff]
      %v266 = vld [vmem:[%s1 + $0x50] sm:$0xff]
      %v267 = vld [vmem:[%s1 + $0x58] sm:$0xff]
      %v268 = vld [vmem:[%s2] sm:$0x1]
      %v270 = vperm.slane %v268, 0
      %vm272 = vcmask 785408
      %v274 = vsel %vm272, %v255, 0
      %276 = vmatpush.msra.mxu0 0.0
      %277 = vmatpush.msra.mxu0 0.0
      %278 = vmatpush.msra.mxu0 0.0
      %279 = vmatpush.msra.mxu0 0.0
      %280 = vmatpush.msra.mxu0 %v267
      %281 = vmatpush.msra.mxu0 %v266
      %282 = vmatpush.msra.mxu0 %v265
      %283 = vmatpush.msra.mxu0 %v264
      %284 = vmatpush.msra.mxu0 %v263
      %285 = vmatpush.msra.mxu0 %v262
      %286 = vmatpush.msra.mxu0 %v261
      %287 = vmatpush.msra.mxu0 %v260
      %288 = vmatpush.msra.mxu0 %v259
      %289 = vmatpush.msra.mxu0 %v258
      %290 = vmatpush.msra.mxu0 %v257
      %291 = vmatpush.msra.mxu0 %v256
      %292 = vmatmul.f32.gmra.mxu0 %v274
      %v293 = vpop.f32.mrf.mxu0
      %v294 = vadd.f32 %v270, %v293
      %295 = vdwg.mxu0
      %v296 = vmax.f32 %v294, 0.0
      %v297 = vld [vmem:[%s3] sm:$0xff]
      %v298 = vld [vmem:[%s3 + $0x8] sm:$0xff]
      %v299 = vld [vmem:[%s4] sm:$0x1]
      %v301 = vperm.slane %v299, 0
      %vm303 = vcmask 130048
      %v305 = vsel %vm303, %v296, 0
      %307 = vmatpush.msra.mxu0 0.0
      %308 = vmatpush.msra.mxu0 0.0
      %309 = vmatpush.msra.mxu0 0.0
      %310 = vmatpush.msra.mxu0 0.0
      %311 = vmatpush.msra.mxu0 0.0
      %312 = vmatpush.msra.mxu0 0.0
      %313 = vmatpush.msra.mxu0 0.0
      %314 = vmatpush.msra.mxu0 0.0
      %315 = vmatpush.msra.mxu0 0.0
      %316 = vmatpush.msra.mxu0 0.0
      %317 = vmatpush.msra.mxu0 0.0
      %318 = vmatpush.msra.mxu0 0.0
      %319 = vmatpush.msra.mxu0 0.0
      %320 = vmatpush.msra.mxu0 0.0
      %321 = vmatpush.msra.mxu0 %v298
      %322 = vmatpush.msra.mxu0 %v297
      %323 = vmatmul.f32.gmra.mxu0 %v305
      %v324 = vpop.f32.mrf.mxu0
      %v325 = vadd.f32 %v301, %v324
      %326 = vdwg.mxu0
      %v327 = vadd.f32 %v325, %v241
      %vm328 = vcmask 257024
      %329 = vst.msk [vmem:[%s239] sm:$0xf] %vm328, %v327
      %p330 = scmp.lt.s32.totalorder %s20, 1
      %s331 = scalar_select %p330, %s20, 1
      %p332 = scmp.lt.s32.totalorder %s21, 0
      %s333 = scalar_select %p332, %s21, 0
      %s334 = sadd.s32 %s333, %s331
      %s335 = smul.addr %s334, 4
      %s336 = scalar_lea.vmem %s5, %s335
      // Predicated region
      $region41: #{decoder1d_forward.11} parent=39 // pred_check
        %p337 = pneg %p158
      $region42: #{decoder1d_forward.11} parent=39 // pred_check_branch
        %339 = sbr.rel (%p337) target = $region44
      $region43: #{decoder1d_forward.11} parent=39 // pred_region
        _
      $region44: #{decoder1d_forward.11} parent=39 // pred_fallthru
        _
    $region40: #{decoder1d_forward.11} parent=5 // pred_fallthru
      _
    %p340 = scmp.le.s32.totalorder 2, %s11
    // Predicated region
    $region45: #{decoder1d_forward.11} parent=5 // pred_check
      %p341 = pneg %p340
    $region46: #{decoder1d_forward.11} parent=5 // pred_check_branch
      %343 = sbr.rel (%p341) target = $region48
    $region47: #{decoder1d_forward.11} parent=5 // pred_region
      %s344 = ssub.s32 %s11, 2
      // Predicated region
      $region49: #{decoder1d_forward.11} parent=47 // pred_check
        %p345 = pneg %p164
      $region50: #{decoder1d_forward.11} parent=47 // pred_check_branch
        %347 = sbr.rel (%p345) target = $region52
      $region51: #{decoder1d_forward.11} parent=47 // pred_region
        %p348 = scmp.lt.s32.totalorder %s22, 1
        %s349 = scalar_select %p348, %s22, 1
        %p350 = scmp.lt.s32.totalorder %s23, 0
        %s351 = scalar_select %p350, %s23, 0
        %s352 = sadd.s32 %s351, %s349
        %s353 = smul.addr %s352, 4
        %s354 = scalar_lea.vmem %s5, %s353
      $region52: #{decoder1d_forward.11} parent=47 // pred_fallthru
        _
    $region48: #{decoder1d_forward.11} parent=5 // pred_fallthru
      _
  $region6: #{decoder1d_forward.11} parent=0 // loop_footer
    %s15 = sadd.s32 1, %s11
  $region7: #{decoder1d_forward.11} parent=0 // loop_footer_branch
    %10 = sbr.rel target = $region3
  $region8: #{decoder1d_forward.11} parent=0 // loop_exit
    _

// kernel: decoder1d_forward.13
$region0: #{decoder1d_forward.13}
  #allocation0 [shape = 'u32[]', space=smem, size = 0x4, offset = 0x4, fixed_abs, tag = 'smem constant byte address 0x4 - core index']
  #allocation1 [shape = 'u32[72,128]{1,0:T(1,128)}', space=vmem, size = 0x9000, scoped, tag = 'internal scratch']
  %s0 = inlined_call_operand.vmem [shape: f32[2,6,32], index: 0, kind: input, shape index: {}]
  %s1 = inlined_call_operand.vmem [shape: f32[96,64], index: 1, kind: input, shape index: {}]
  %s2 = inlined_call_operand.vmem [shape: f32[1,64], index: 2, kind: input, shape index: {}]
  %s3 = inlined_call_operand.vmem [shape: f32[2,4,64], index: 3, kind: output, shape index: {}]
  %s4 = sld [smem:[#allocation0]]
  $region45: #{decoder1d_forward.13} parent=0
    _
  %s6 = ssub.s32 1, %s4
  %s7 = scalar_select 0, %s6, %s4
  loop: start=0, step=1, limit=4
  $region2: #{decoder1d_forward.13} parent=0 // loop_pre_header
    _
  $region3: #{decoder1d_forward.13} parent=0 // loop_header
    %s9 = sphi 0, %s13
    %p10 = scmp.ge.s32.totalorder %s9, 4
    %s16 = sphi 0, %s28
    %s17 = sphi 0, %s24
    %s18 = sphi 0, %s16
    %s19 = sphi 0, %s17
    %s20 = sphi 0, %s18
    %s21 = sphi 0, %s19
    %s31 = sphi 0, %s33
    %s34 = sphi 0, %s31
    %s35 = sphi 0, %s34
    %s51 = sphi 0, %s35
    %s55 = sphi 0, %s55
    %s57 = sphi 0, %s55
    %s58 = sphi 0, %s57
    %s72 = sphi 0, %s58
    %s76 = sphi 0, %s76
    %s78 = sphi 0, %s76
    %s79 = sphi 0, %s78
    %s93 = sphi 0, %s79
    %s101 = sphi 0, %s103
    %s104 = sphi 0, %s101
    %s105 = sphi 0, %s104
    %s121 = sphi 0, %s105
  $region4: #{decoder1d_forward.13} parent=0 // loop_header_branch
    %12 = sbr.rel (%p10) target = $region8
  $region5: #{decoder1d_forward.13} parent=0 // loop_body
    %s14 = ssub.s32 %s9, 1
    %s15 = ssub.s32 %s9, 2
    %s22 = sadd.s32 1, %s17
    %p23 = scmp.ge.s32.totalorder %s22, 1
    %s24 = scalar_select %p23, 0, %s22
    %s25 = sadd.s32 1, %s16
    %s26 = scalar_select %p23, %s25, %s16
    %p27 = scmp.ge.s32.totalorder %s26, 2
    %s28 = scalar_select %p27, 0, %s26
    %s29 = ssub.s32 %s16, %s28
    %p30 = scmp.eq.s32.totalorder %s29, 0
    %s32 = sadd.s32 %s31, 1
    %s33 = scalar_select %p30, %s31, %s32
    %p36 = pneg %p30
    %p37 = scmp.eq.s32.totalorder %s9, 1
    %p38 = por %p36, %p37
    %p39 = scmp.ne.s32.totalorder %s31, %s34
    %p40 = scmp.eq.s32.totalorder %s9, 0
    %p41 = por %p39, %p40
    %p42 = scmp.ne.s32.totalorder %s31, %s34
    %p43 = scmp.eq.s32.totalorder %s14, 1
    %p44 = por %p42, %p43
    %p45 = scmp.ne.s32.totalorder %s34, %s35
    %p46 = scmp.eq.s32.totalorder %s14, 0
    %p47 = por %p45, %p46
    %p48 = scmp.ne.s32.totalorder %s34, %s35
    %p49 = scmp.eq.s32.totalorder %s15, 1
    %p50 = por %p48, %p49
    %p52 = scmp.ne.s32.totalorder %s35, %s51
    %p53 = scmp.eq.s32.totalorder %s15, 0
    %p54 = por %p52, %p53
    %s56 = sadd.s32 %s55, 1
    %p59 = scmp.eq.s32.totalorder %s9, 1
    %p60 = scmp.ne.s32.totalorder %s55, %s57
    %p61 = scmp.eq.s32.totalorder %s9, 0
    %p62 = por %p60, %p61
    %p63 = scmp.ne.s32.totalorder %s55, %s57
    %p64 = scmp.eq.s32.totalorder %s14, 1
    %p65 = por %p63, %p64
    %p66 = scmp.ne.s32.totalorder %s57, %s58
    %p67 = scmp.eq.s32.totalorder %s14, 0
    %p68 = por %p66, %p67
    %p69 = scmp.ne.s32.totalorder %s57, %s58
    %p70 = scmp.eq.s32.totalorder %s15, 1
    %p71 = por %p69, %p70
    %p73 = scmp.ne.s32.totalorder %s58, %s72
    %p74 = scmp.eq.s32.totalorder %s15, 0
    %p75 = por %p73, %p74
    %s77 = sadd.s32 %s76, 1
    %p80 = scmp.eq.s32.totalorder %s9, 1
    %p81 = scmp.ne.s32.totalorder %s76, %s78
    %p82 = scmp.eq.s32.totalorder %s9, 0
    %p83 = por %p81, %p82
    %p84 = scmp.ne.s32.totalorder %s76, %s78
    %p85 = scmp.eq.s32.totalorder %s14, 1
    %p86 = por %p84, %p85
    %p87 = scmp.ne.s32.totalorder %s78, %s79
    %p88 = scmp.eq.s32.totalorder %s14, 0
    %p89 = por %p87, %p88
    %p90 = scmp.ne.s32.totalorder %s78, %s79
    %p91 = scmp.eq.s32.totalorder %s15, 1
    %p92 = por %p90, %p91
    %p94 = scmp.ne.s32.totalorder %s79, %s93
    %p95 = scmp.eq.s32.totalorder %s15, 0
    %p96 = por %p94, %p95
    %s97 = ssub.s32 %s16, %s28
    %s98 = ssub.s32 %s17, %s24
    %s99 = sor.u32 %s97, %s98
    %p100 = scmp.eq.s32.totalorder %s99, 0
    %s102 = sadd.s32 %s101, 1
    %s103 = scalar_select %p100, %s101, %s102
    %p106 = pneg %p100
    %p107 = scmp.eq.s32.totalorder %s9, 1
    %p108 = por %p106, %p107
    %p109 = scmp.ne.s32.totalorder %s101, %s104
    %p110 = scmp.eq.s32.totalorder %s9, 0
    %p111 = por %p109, %p110
    %p112 = scmp.ne.s32.totalorder %s101, %s104
    %p113 = scmp.eq.s32.totalorder %s14, 1
    %p114 = por %p112, %p113
    %p115 = scmp.ne.s32.totalorder %s104, %s105
    %p116 = scmp.eq.s32.totalorder %s14, 0
    %p117 = por %p115, %p116
    %p118 = scmp.ne.s32.totalorder %s104, %s105
    %p119 = scmp.eq.s32.totalorder %s15, 1
    %p120 = por %p118, %p119
    %p122 = scmp.ne.s32.totalorder %s105, %s121
    %p123 = scmp.eq.s32.totalorder %s15, 0
    %p124 = por %p122, %p123
    %p125 = scmp.le.s32.totalorder 1, %s9
    %p126 = scmp.lt.s32.totalorder %s9, 3
    %p127 = pnand %p125, %p126
    %p128 = pneg %p127
    // Predicated region
    $region9: #{decoder1d_forward.13} parent=5 // pred_check
      _
    $region10: #{decoder1d_forward.13} parent=5 // pred_check_branch
      %130 = sbr.rel (%p127) target = $region12
    $region11: #{decoder1d_forward.13} parent=5 // pred_region
      %s131 = ssub.s32 %s9, 1
      // Predicated region
      $region13: #{decoder1d_forward.13} parent=11 // pred_check
        %p132 = pneg %p68
      $region14: #{decoder1d_forward.13} parent=11 // pred_check_branch
        %134 = sbr.rel (%p132) target = $region16
      $region15: #{decoder1d_forward.13} parent=11 // pred_region
        _
      $region16: #{decoder1d_forward.13} parent=11 // pred_fallthru
        _
      // Predicated region
      $region17: #{decoder1d_forward.13} parent=11 // pred_check
        %p135 = pneg %p89
      $region18: #{decoder1d_forward.13} parent=11 // pred_check_branch
        %137 = sbr.rel (%p135) target = $region20
      $region19: #{decoder1d_forward.13} parent=11 // pred_region
        _
      $region20: #{decoder1d_forward.13} parent=11 // pred_fallthru
        _
    $region12: #{decoder1d_forward.13} parent=5 // pred_fallthru
      _
    %p138 = scmp.lt.s32.totalorder %s9, 2
    // Predicated region
    $region21: #{decoder1d_forward.13} parent=5 // pred_check
      %p139 = pneg %p138
    $region22: #{decoder1d_forward.13} parent=5 // pred_check_branch
      %141 = sbr.rel (%p139) target = $region24
    $region23: #{decoder1d_forward.13} parent=5 // pred_region
      // Predicated region
      $region25: #{decoder1d_forward.13} parent=23 // pred_check
        %p142 = pneg %p41
      $region26: #{decoder1d_forward.13} parent=23 // pred_check_branch
        %144 = sbr.rel (%p142) target = $region28
      $region27: #{decoder1d_forward.13} parent=23 // pred_region
        %p145 = scmp.lt.s32.totalorder %s16, 1
        %s146 = scalar_select %p145, %s16, 1
        %s147 = smul.addr %s146, 8
        %s148 = scalar_lea.vmem %s0, %s147
      $region28: #{decoder1d_forward.13} parent=23 // pred_fallthru
        _
    $region24: #{decoder1d_forward.13} parent=5 // pred_fallthru
      _
    %p149 = scmp.le.s32.totalorder 1, %s9
    %p150 = scmp.lt.s32.totalorder %s9, 3
    %p151 = pnand %p149, %p150
    %p152 = pneg %p151
    // Predicated region
    $region29: #{decoder1d_forward.13} parent=5 // pred_check
      _
    $region30: #{decoder1d_forward.13} parent=5 // pred_check_branch
      %154 = sbr.rel (%p151) target = $region32
    $region31: #{decoder1d_forward.13} parent=5 // pred_region
      %s155 = ssub.s32 %s9, 1
      %p156 = scmp.lt.s32.totalorder %s18, 1
      %s157 = scalar_select %p156, %s18, 1
      %s158 = smul.addr %s157, 8
      %s159 = scalar_lea.vmem %s0, %s158
      %p160 = pneg %p47
      %p161 = pneg %p44
      %p162 = pneg %p68
      %p163 = pneg %p65
      %p164 = pneg %p89
      %p165 = pneg %p86
      %p166 = pneg %p117
      %p167 = pneg %p114
      %p168 = scmp.lt.s32.totalorder %s18, 1
      %s169 = scalar_select %p168, %s18, 1
      %p170 = scmp.lt.s32.totalorder %s19, 0
      %s171 = scalar_select %p170, %s19, 0
      %s172 = sadd.s32 %s171, %s169
      %s173 = smul.addr %s172, 4
      %s174 = scalar_lea.vmem %s3, %s173
      %p175 = scmp.lt.s32.totalorder %s18, 1
      %s176 = scalar_select %p175, %s18, 1
      %s177 = smul.addr %s176, 8
      %s178 = scalar_lea.vmem %s0, %s177
      %p179 = scmp.lt.s32.totalorder %s18, 1
      %s180 = scalar_select %p179, %s18, 1
      %p181 = scmp.lt.s32.totalorder %s19, 0
      %s182 = scalar_select %p181, %s19, 0
      %s183 = sadd.s32 %s182, %s180
      %s184 = smul.addr %s183, 4
      %s185 = scalar_lea.vmem %s3, %s184
      %v186 = vld [vmem:[%s178] sm:$0xf]
      %v187 = vld [vmem:[%s178 + $0x1] sm:$0xf]
      %v188 = vld [vmem:[%s178 + $0x2] sm:$0xf]
      %190 = vrot.lane.b32.xlu0 %v187, 32
      %v191 = vpop.permute.xlu0 %190
      %194 = vrot.lane.b32.xlu0 %v188, 64
      %v195 = vpop.permute.xlu0 %194
      %vm197 = vcmask 261120
      %v198 = vsel %vm197, %v186, %v191
      %vm199 = vcmask 523264
      %v200 = vsel %vm199, %v198, %v195
      %v201 = vld [vmem:[%s1] sm:$0xff]
      %v202 = vld [vmem:[%s1 + $0x8] sm:$0xff]
      %v203 = vld [vmem:[%s1 + $0x10] sm:$0xff]
      %v204 = vld [vmem:[%s1 + $0x18] sm:$0xff]
      %v205 = vld [vmem:[%s1 + $0x20] sm:$0xff]
      %v206 = vld [vmem:[%s1 + $0x28] sm:$0xff]
      %v207 = vld [vmem:[%s1 + $0x30] sm:$0xff]
      %v208 = vld [vmem:[%s1 + $0x38] sm:$0xff]
      %v209 = vld [vmem:[%s1 + $0x40] sm:$0xff]
      %v210 = vld [vmem:[%s1 + $0x48] sm:$0xff]
      %v211 = vld [vmem:[%s1 + $0x50] sm:$0xff]
      %v212 = vld [vmem:[%s1 + $0x58] sm:$0xff]
      %v213 = vld [vmem:[%s2] sm:$0x1]
      %v215 = vperm.slane %v213, 0
      %vm217 = vcmask 785408
      %v219 = vsel %vm217, %v200, 0
      %221 = vmatpush.msra.mxu0 0.0
      %222 = vmatpush.msra.mxu0 0.0
      %223 = vmatpush.msra.mxu0 0.0
      %224 = vmatpush.msra.mxu0 0.0
      %225 = vmatpush.msra.mxu0 %v212
      %226 = vmatpush.msra.mxu0 %v211
      %227 = vmatpush.msra.mxu0 %v210
      %228 = vmatpush.msra.mxu0 %v209
      %229 = vmatpush.msra.mxu0 %v208
      %230 = vmatpush.msra.mxu0 %v207
      %231 = vmatpush.msra.mxu0 %v206
      %232 = vmatpush.msra.mxu0 %v205
      %233 = vmatpush.msra.mxu0 %v204
      %234 = vmatpush.msra.mxu0 %v203
      %235 = vmatpush.msra.mxu0 %v202
      %236 = vmatpush.msra.mxu0 %v201
      %237 = vmatmul.f32.gmra.mxu0 %v219
      %v238 = vpop.f32.mrf.mxu0
      %v239 = vadd.f32 %v215, %v238
      %240 = vdwg.mxu0
      %v241 = vmax.f32 %v239, 0.0
      %vm242 = vcmask 519168
      %243 = vst.msk [vmem:[%s185] sm:$0xf] %vm242, %v241
      %p244 = scmp.lt.s32.totalorder %s18, 1
      %s245 = scalar_select %p244, %s18, 1
      %p246 = scmp.lt.s32.totalorder %s19, 0
      %s247 = scalar_select %p246, %s19, 0
      %s248 = sadd.s32 %s247, %s245
      %s249 = smul.addr %s248, 4
      %s250 = scalar_lea.vmem %s3, %s249
      // Predicated region
      $region33: #{decoder1d_forward.13} parent=31 // pred_check
        %p251 = pneg %p114
      $region34: #{decoder1d_forward.13} parent=31 // pred_check_branch
        %253 = sbr.rel (%p251) target = $region36
      $region35: #{decoder1d_forward.13} parent=31 // pred_region
        _
      $region36: #{decoder1d_forward.13} parent=31 // pred_fallthru
        _
    $region32: #{decoder1d_forward.13} parent=5 // pred_fallthru
      _
    %p254 = scmp.le.s32.totalorder 2, %s9
    // Predicated region
    $region37: #{decoder1d_forward.13} parent=5 // pred_check
      %p255 = pneg %p254
    $region38: #{decoder1d_forward.13} parent=5 // pred_check_branch
      %257 = sbr.rel (%p255) target = $region40
    $region39: #{decoder1d_forward.13} parent=5 // pred_region
      %s258 = ssub.s32 %s9, 2
      // Predicated region
      $region41: #{decoder1d_forward.13} parent=39 // pred_check
        %p259 = pneg %p120
      $region42: #{decoder1d_forward.13} parent=39 // pred_check_branch
        %261 = sbr.rel (%p259) target = $region44
      $region43: #{decoder1d_forward.13} parent=39 // pred_region
        %p262 = scmp.lt.s32.totalorder %s20, 1
        %s263 = scalar_select %p262, %s20, 1
        %p264 = scmp.lt.s32.totalorder %s21, 0
        %s265 = scalar_select %p264, %s21, 0
        %s266 = sadd.s32 %s265, %s263
        %s267 = smul.addr %s266, 4
        %s268 = scalar_lea.vmem %s3, %s267
      $region44: #{decoder1d_forward.13} parent=39 // pred_fallthru
        _
    $region40: #{decoder1d_forward.13} parent=5 // pred_fallthru
      _
  $region6: #{decoder1d_forward.13} parent=0 // loop_footer
    %s13 = sadd.s32 1, %s9
  $region7: #{decoder1d_forward.13} parent=0 // loop_footer_branch
    %8 = sbr.rel target = $region3
  $region8: #{decoder1d_forward.13} parent=0 // loop_exit
    _

// kernel: decoder1d_forward.14
$region0: #{decoder1d_forward.14}
  #allocation0 [shape = 'u32[]', space=smem, size = 0x4, offset = 0x4, fixed_abs, tag = 'smem constant byte address 0x4 - core index']
  #allocation1 [shape = 'u32[72,128]{1,0:T(1,128)}', space=vmem, size = 0x9000, scoped, tag = 'internal scratch']
  %s0 = inlined_call_operand.vmem [shape: f32[2,10,32], index: 0, kind: input, shape index: {}]
  %s1 = inlined_call_operand.vmem [shape: f32[96,64], index: 1, kind: input, shape index: {}]
  %s2 = inlined_call_operand.vmem [shape: f32[1,64], index: 2, kind: input, shape index: {}]
  %s3 = inlined_call_operand.vmem [shape: f32[2,8,64], index: 3, kind: output, shape index: {}]
  %s4 = sld [smem:[#allocation0]]
  $region45: #{decoder1d_forward.14} parent=0
    _
  %s6 = ssub.s32 1, %s4
  %s7 = scalar_select 0, %s6, %s4
  loop: start=0, step=1, limit=4
  $region2: #{decoder1d_forward.14} parent=0 // loop_pre_header
    _
  $region3: #{decoder1d_forward.14} parent=0 // loop_header
    %s9 = sphi 0, %s13
    %p10 = scmp.ge.s32.totalorder %s9, 4
    %s16 = sphi 0, %s28
    %s17 = sphi 0, %s24
    %s18 = sphi 0, %s16
    %s19 = sphi 0, %s17
    %s20 = sphi 0, %s18
    %s21 = sphi 0, %s19
    %s31 = sphi 0, %s33
    %s34 = sphi 0, %s31
    %s35 = sphi 0, %s34
    %s51 = sphi 0, %s35
    %s55 = sphi 0, %s55
    %s57 = sphi 0, %s55
    %s58 = sphi 0, %s57
    %s72 = sphi 0, %s58
    %s76 = sphi 0, %s76
    %s78 = sphi 0, %s76
    %s79 = sphi 0, %s78
    %s93 = sphi 0, %s79
    %s101 = sphi 0, %s103
    %s104 = sphi 0, %s101
    %s105 = sphi 0, %s104
    %s121 = sphi 0, %s105
  $region4: #{decoder1d_forward.14} parent=0 // loop_header_branch
    %12 = sbr.rel (%p10) target = $region8
  $region5: #{decoder1d_forward.14} parent=0 // loop_body
    %s14 = ssub.s32 %s9, 1
    %s15 = ssub.s32 %s9, 2
    %s22 = sadd.s32 1, %s17
    %p23 = scmp.ge.s32.totalorder %s22, 1
    %s24 = scalar_select %p23, 0, %s22
    %s25 = sadd.s32 1, %s16
    %s26 = scalar_select %p23, %s25, %s16
    %p27 = scmp.ge.s32.totalorder %s26, 2
    %s28 = scalar_select %p27, 0, %s26
    %s29 = ssub.s32 %s16, %s28
    %p30 = scmp.eq.s32.totalorder %s29, 0
    %s32 = sadd.s32 %s31, 1
    %s33 = scalar_select %p30, %s31, %s32
    %p36 = pneg %p30
    %p37 = scmp.eq.s32.totalorder %s9, 1
    %p38 = por %p36, %p37
    %p39 = scmp.ne.s32.totalorder %s31, %s34
    %p40 = scmp.eq.s32.totalorder %s9, 0
    %p41 = por %p39, %p40
    %p42 = scmp.ne.s32.totalorder %s31, %s34
    %p43 = scmp.eq.s32.totalorder %s14, 1
    %p44 = por %p42, %p43
    %p45 = scmp.ne.s32.totalorder %s34, %s35
    %p46 = scmp.eq.s32.totalorder %s14, 0
    %p47 = por %p45, %p46
    %p48 = scmp.ne.s32.totalorder %s34, %s35
    %p49 = scmp.eq.s32.totalorder %s15, 1
    %p50 = por %p48, %p49
    %p52 = scmp.ne.s32.totalorder %s35, %s51
    %p53 = scmp.eq.s32.totalorder %s15, 0
    %p54 = por %p52, %p53
    %s56 = sadd.s32 %s55, 1
    %p59 = scmp.eq.s32.totalorder %s9, 1
    %p60 = scmp.ne.s32.totalorder %s55, %s57
    %p61 = scmp.eq.s32.totalorder %s9, 0
    %p62 = por %p60, %p61
    %p63 = scmp.ne.s32.totalorder %s55, %s57
    %p64 = scmp.eq.s32.totalorder %s14, 1
    %p65 = por %p63, %p64
    %p66 = scmp.ne.s32.totalorder %s57, %s58
    %p67 = scmp.eq.s32.totalorder %s14, 0
    %p68 = por %p66, %p67
    %p69 = scmp.ne.s32.totalorder %s57, %s58
    %p70 = scmp.eq.s32.totalorder %s15, 1
    %p71 = por %p69, %p70
    %p73 = scmp.ne.s32.totalorder %s58, %s72
    %p74 = scmp.eq.s32.totalorder %s15, 0
    %p75 = por %p73, %p74
    %s77 = sadd.s32 %s76, 1
    %p80 = scmp.eq.s32.totalorder %s9, 1
    %p81 = scmp.ne.s32.totalorder %s76, %s78
    %p82 = scmp.eq.s32.totalorder %s9, 0
    %p83 = por %p81, %p82
    %p84 = scmp.ne.s32.totalorder %s76, %s78
    %p85 = scmp.eq.s32.totalorder %s14, 1
    %p86 = por %p84, %p85
    %p87 = scmp.ne.s32.totalorder %s78, %s79
    %p88 = scmp.eq.s32.totalorder %s14, 0
    %p89 = por %p87, %p88
    %p90 = scmp.ne.s32.totalorder %s78, %s79
    %p91 = scmp.eq.s32.totalorder %s15, 1
    %p92 = por %p90, %p91
    %p94 = scmp.ne.s32.totalorder %s79, %s93
    %p95 = scmp.eq.s32.totalorder %s15, 0
    %p96 = por %p94, %p95
    %s97 = ssub.s32 %s16, %s28
    %s98 = ssub.s32 %s17, %s24
    %s99 = sor.u32 %s97, %s98
    %p100 = scmp.eq.s32.totalorder %s99, 0
    %s102 = sadd.s32 %s101, 1
    %s103 = scalar_select %p100, %s101, %s102
    %p106 = pneg %p100
    %p107 = scmp.eq.s32.totalorder %s9, 1
    %p108 = por %p106, %p107
    %p109 = scmp.ne.s32.totalorder %s101, %s104
    %p110 = scmp.eq.s32.totalorder %s9, 0
    %p111 = por %p109, %p110
    %p112 = scmp.ne.s32.totalorder %s101, %s104
    %p113 = scmp.eq.s32.totalorder %s14, 1
    %p114 = por %p112, %p113
    %p115 = scmp.ne.s32.totalorder %s104, %s105
    %p116 = scmp.eq.s32.totalorder %s14, 0
    %p117 = por %p115, %p116
    %p118 = scmp.ne.s32.totalorder %s104, %s105
    %p119 = scmp.eq.s32.totalorder %s15, 1
    %p120 = por %p118, %p119
    %p122 = scmp.ne.s32.totalorder %s105, %s121
    %p123 = scmp.eq.s32.totalorder %s15, 0
    %p124 = por %p122, %p123
    %p125 = scmp.le.s32.totalorder 1, %s9
    %p126 = scmp.lt.s32.totalorder %s9, 3
    %p127 = pnand %p125, %p126
    %p128 = pneg %p127
    // Predicated region
    $region9: #{decoder1d_forward.14} parent=5 // pred_check
      _
    $region10: #{decoder1d_forward.14} parent=5 // pred_check_branch
      %130 = sbr.rel (%p127) target = $region12
    $region11: #{decoder1d_forward.14} parent=5 // pred_region
      %s131 = ssub.s32 %s9, 1
      // Predicated region
      $region13: #{decoder1d_forward.14} parent=11 // pred_check
        %p132 = pneg %p68
      $region14: #{decoder1d_forward.14} parent=11 // pred_check_branch
        %134 = sbr.rel (%p132) target = $region16
      $region15: #{decoder1d_forward.14} parent=11 // pred_region
        _
      $region16: #{decoder1d_forward.14} parent=11 // pred_fallthru
        _
      // Predicated region
      $region17: #{decoder1d_forward.14} parent=11 // pred_check
        %p135 = pneg %p89
      $region18: #{decoder1d_forward.14} parent=11 // pred_check_branch
        %137 = sbr.rel (%p135) target = $region20
      $region19: #{decoder1d_forward.14} parent=11 // pred_region
        _
      $region20: #{decoder1d_forward.14} parent=11 // pred_fallthru
        _
    $region12: #{decoder1d_forward.14} parent=5 // pred_fallthru
      _
    %p138 = scmp.lt.s32.totalorder %s9, 2
    // Predicated region
    $region21: #{decoder1d_forward.14} parent=5 // pred_check
      %p139 = pneg %p138
    $region22: #{decoder1d_forward.14} parent=5 // pred_check_branch
      %141 = sbr.rel (%p139) target = $region24
    $region23: #{decoder1d_forward.14} parent=5 // pred_region
      // Predicated region
      $region25: #{decoder1d_forward.14} parent=23 // pred_check
        %p142 = pneg %p41
      $region26: #{decoder1d_forward.14} parent=23 // pred_check_branch
        %144 = sbr.rel (%p142) target = $region28
      $region27: #{decoder1d_forward.14} parent=23 // pred_region
        %p145 = scmp.lt.s32.totalorder %s16, 1
        %s146 = scalar_select %p145, %s16, 1
        %s147 = smul.addr %s146, 2
        %s148 = smul.addr %s147, 8
        %s149 = scalar_lea.vmem %s0, %s148
      $region28: #{decoder1d_forward.14} parent=23 // pred_fallthru
        _
    $region24: #{decoder1d_forward.14} parent=5 // pred_fallthru
      _
    %p150 = scmp.le.s32.totalorder 1, %s9
    %p151 = scmp.lt.s32.totalorder %s9, 3
    %p152 = pnand %p150, %p151
    %p153 = pneg %p152
    // Predicated region
    $region29: #{decoder1d_forward.14} parent=5 // pred_check
      _
    $region30: #{decoder1d_forward.14} parent=5 // pred_check_branch
      %155 = sbr.rel (%p152) target = $region32
    $region31: #{decoder1d_forward.14} parent=5 // pred_region
      %s156 = ssub.s32 %s9, 1
      %p157 = scmp.lt.s32.totalorder %s18, 1
      %s158 = scalar_select %p157, %s18, 1
      %s159 = smul.addr %s158, 2
      %s160 = smul.addr %s159, 8
      %s161 = scalar_lea.vmem %s0, %s160
      %p162 = pneg %p47
      %p163 = pneg %p44
      %p164 = pneg %p68
      %p165 = pneg %p65
      %p166 = pneg %p89
      %p167 = pneg %p86
      %p168 = pneg %p117
      %p169 = pneg %p114
      %p170 = scmp.lt.s32.totalorder %s18, 1
      %s171 = scalar_select %p170, %s18, 1
      %p172 = scmp.lt.s32.totalorder %s19, 0
      %s173 = scalar_select %p172, %s19, 0
      %s174 = sadd.s32 %s173, %s171
      %s175 = smul.addr %s174, 8
      %s176 = scalar_lea.vmem %s3, %s175
      %p177 = scmp.lt.s32.totalorder %s18, 1
      %s178 = scalar_select %p177, %s18, 1
      %s179 = smul.addr %s178, 2
      %s180 = smul.addr %s179, 8
      %s181 = scalar_lea.vmem %s0, %s180
      %p182 = scmp.lt.s32.totalorder %s18, 1
      %s183 = scalar_select %p182, %s18, 1
      %p184 = scmp.lt.s32.totalorder %s19, 0
      %s185 = scalar_select %p184, %s19, 0
      %s186 = sadd.s32 %s185, %s183
      %s187 = smul.addr %s186, 8
      %s188 = scalar_lea.vmem %s3, %s187
      %v189 = vld [vmem:[%s181] sm:$0xff]
      %v190 = vld [vmem:[%s181 + $0x1] sm:$0xff]
      %v191 = vld [vmem:[%s181 + $0x2] sm:$0xff]
      %193 = vrot.lane.b32.xlu0 %v190, 32
      %v194 = vpop.permute.xlu0 %193
      %197 = vrot.lane.b32.xlu0 %v191, 64
      %v198 = vpop.permute.xlu0 %197
      %vm200 = vcmask 261120
      %v201 = vsel %vm200, %v189, %v194
      %vm202 = vcmask 523264
      %v203 = vsel %vm202, %v201, %v198
      %v204 = vld [vmem:[%s1] sm:$0xff]
      %v205 = vld [vmem:[%s1 + $0x8] sm:$0xff]
      %v206 = vld [vmem:[%s1 + $0x10] sm:$0xff]
      %v207 = vld [vmem:[%s1 + $0x18] sm:$0xff]
      %v208 = vld [vmem:[%s1 + $0x20] sm:$0xff]
      %v209 = vld [vmem:[%s1 + $0x28] sm:$0xff]
      %v210 = vld [vmem:[%s1 + $0x30] sm:$0xff]
      %v211 = vld [vmem:[%s1 + $0x38] sm:$0xff]
      %v212 = vld [vmem:[%s1 + $0x40] sm:$0xff]
      %v213 = vld [vmem:[%s1 + $0x48] sm:$0xff]
      %v214 = vld [vmem:[%s1 + $0x50] sm:$0xff]
      %v215 = vld [vmem:[%s1 + $0x58] sm:$0xff]
      %v216 = vld [vmem:[%s2] sm:$0x1]
      %v218 = vperm.slane %v216, 0
      %vm220 = vcmask 785408
      %v222 = vsel %vm220, %v203, 0
      %224 = vmatpush.msra.mxu0 0.0
      %225 = vmatpush.msra.mxu0 0.0
      %226 = vmatpush.msra.mxu0 0.0
      %227 = vmatpush.msra.mxu0 0.0
      %228 = vmatpush.msra.mxu0 %v215
      %229 = vmatpush.msra.mxu0 %v214
      %230 = vmatpush.msra.mxu0 %v213
      %231 = vmatpush.msra.mxu0 %v212
      %232 = vmatpush.msra.mxu0 %v211
      %233 = vmatpush.msra.mxu0 %v210
      %234 = vmatpush.msra.mxu0 %v209
      %235 = vmatpush.msra.mxu0 %v208
      %236 = vmatpush.msra.mxu0 %v207
      %237 = vmatpush.msra.mxu0 %v206
      %238 = vmatpush.msra.mxu0 %v205
      %239 = vmatpush.msra.mxu0 %v204
      %240 = vmatmul.f32.gmra.mxu0 %v222
      %v241 = vpop.f32.mrf.mxu0
      %v242 = vadd.f32 %v218, %v241
      %243 = vdwg.mxu0
      %244 = vst.msk [vmem:[%s188] sm:$0xff] %vm202, %v242
      %p245 = scmp.lt.s32.totalorder %s18, 1
      %s246 = scalar_select %p245, %s18, 1
      %p247 = scmp.lt.s32.totalorder %s19, 0
      %s248 = scalar_select %p247, %s19, 0
      %s249 = sadd.s32 %s248, %s246
      %s250 = smul.addr %s249, 8
      %s251 = scalar_lea.vmem %s3, %s250
      // Predicated region
      $region33: #{decoder1d_forward.14} parent=31 // pred_check
        %p252 = pneg %p114
      $region34: #{decoder1d_forward.14} parent=31 // pred_check_branch
        %254 = sbr.rel (%p252) target = $region36
      $region35: #{decoder1d_forward.14} parent=31 // pred_region
        _
      $region36: #{decoder1d_forward.14} parent=31 // pred_fallthru
        _
    $region32: #{decoder1d_forward.14} parent=5 // pred_fallthru
      _
    %p255 = scmp.le.s32.totalorder 2, %s9
    // Predicated region
    $region37: #{decoder1d_forward.14} parent=5 // pred_check
      %p256 = pneg %p255
    $region38: #{decoder1d_forward.14} parent=5 // pred_check_branch
      %258 = sbr.rel (%p256) target = $region40
    $region39: #{decoder1d_forward.14} parent=5 // pred_region
      %s259 = ssub.s32 %s9, 2
      // Predicated region
      $region41: #{decoder1d_forward.14} parent=39 // pred_check
        %p260 = pneg %p120
      $region42: #{decoder1d_forward.14} parent=39 // pred_check_branch
        %262 = sbr.rel (%p260) target = $region44
      $region43: #{decoder1d_forward.14} parent=39 // pred_region
        %p263 = scmp.lt.s32.totalorder %s20, 1
        %s264 = scalar_select %p263, %s20, 1
        %p265 = scmp.lt.s32.totalorder %s21, 0
        %s266 = scalar_select %p265, %s21, 0
        %s267 = sadd.s32 %s266, %s264
        %s268 = smul.addr %s267, 8
        %s269 = scalar_lea.vmem %s3, %s268
      $region44: #{decoder1d_forward.14} parent=39 // pred_fallthru
        _
    $region40: #{decoder1d_forward.14} parent=5 // pred_fallthru
      _
  $region6: #{decoder1d_forward.14} parent=0 // loop_footer
    %s13 = sadd.s32 1, %s9
  $region7: #{decoder1d_forward.14} parent=0 // loop_footer_branch
    %8 = sbr.rel target = $region3
  $region8: #{decoder1d_forward.14} parent=0 // loop_exit
    _

// kernel: decoder1d_forward.16
$region0: #{decoder1d_forward.16}
  #allocation0 [shape = 'u32[]', space=smem, size = 0x4, offset = 0x4, fixed_abs, tag = 'smem constant byte address 0x4 - core index']
  #allocation1 [shape = 'u32[72,128]{1,0:T(1,128)}', space=vmem, size = 0x9000, scoped, tag = 'internal scratch']
  %s0 = inlined_call_operand.vmem [shape: f32[2,18,32], index: 0, kind: input, shape index: {}]
  %s1 = inlined_call_operand.vmem [shape: f32[96,16], index: 1, kind: input, shape index: {}]
  %s2 = inlined_call_operand.vmem [shape: f32[1,16], index: 2, kind: input, shape index: {}]
  %s3 = inlined_call_operand.vmem [shape: f32[16,32], index: 3, kind: input, shape index: {}]
  %s4 = inlined_call_operand.vmem [shape: f32[1,32], index: 4, kind: input, shape index: {}]
  %s5 = inlined_call_operand.vmem [shape: f32[2,16,32], index: 5, kind: output, shape index: {}]
  %s6 = sld [smem:[#allocation0]]
  $region53: #{decoder1d_forward.16} parent=0
    _
  %s8 = ssub.s32 1, %s6
  %s9 = scalar_select 0, %s8, %s6
  loop: start=0, step=1, limit=4
  $region2: #{decoder1d_forward.16} parent=0 // loop_pre_header
    _
  $region3: #{decoder1d_forward.16} parent=0 // loop_header
    %s11 = sphi 0, %s15
    %p12 = scmp.ge.s32.totalorder %s11, 4
    %s18 = sphi 0, %s30
    %s19 = sphi 0, %s26
    %s20 = sphi 0, %s18
    %s21 = sphi 0, %s19
    %s22 = sphi 0, %s20
    %s23 = sphi 0, %s21
    %s33 = sphi 0, %s35
    %s36 = sphi 0, %s33
    %s37 = sphi 0, %s36
    %s53 = sphi 0, %s37
    %s57 = sphi 0, %s57
    %s59 = sphi 0, %s57
    %s60 = sphi 0, %s59
    %s74 = sphi 0, %s60
    %s78 = sphi 0, %s78
    %s80 = sphi 0, %s78
    %s81 = sphi 0, %s80
    %s95 = sphi 0, %s81
    %s99 = sphi 0, %s99
    %s101 = sphi 0, %s99
    %s102 = sphi 0, %s101
    %s116 = sphi 0, %s102
    %s120 = sphi 0, %s120
    %s122 = sphi 0, %s120
    %s123 = sphi 0, %s122
    %s137 = sphi 0, %s123
    %s145 = sphi 0, %s147
    %s148 = sphi 0, %s145
    %s149 = sphi 0, %s148
    %s165 = sphi 0, %s149
  $region4: #{decoder1d_forward.16} parent=0 // loop_header_branch
    %14 = sbr.rel (%p12) target = $region8
  $region5: #{decoder1d_forward.16} parent=0 // loop_body
    %s16 = ssub.s32 %s11, 1
    %s17 = ssub.s32 %s11, 2
    %s24 = sadd.s32 1, %s19
    %p25 = scmp.ge.s32.totalorder %s24, 1
    %s26 = scalar_select %p25, 0, %s24
    %s27 = sadd.s32 1, %s18
    %s28 = scalar_select %p25, %s27, %s18
    %p29 = scmp.ge.s32.totalorder %s28, 2
    %s30 = scalar_select %p29, 0, %s28
    %s31 = ssub.s32 %s18, %s30
    %p32 = scmp.eq.s32.totalorder %s31, 0
    %s34 = sadd.s32 %s33, 1
    %s35 = scalar_select %p32, %s33, %s34
    %p38 = pneg %p32
    %p39 = scmp.eq.s32.totalorder %s11, 1
    %p40 = por %p38, %p39
    %p41 = scmp.ne.s32.totalorder %s33, %s36
    %p42 = scmp.eq.s32.totalorder %s11, 0
    %p43 = por %p41, %p42
    %p44 = scmp.ne.s32.totalorder %s33, %s36
    %p45 = scmp.eq.s32.totalorder %s16, 1
    %p46 = por %p44, %p45
    %p47 = scmp.ne.s32.totalorder %s36, %s37
    %p48 = scmp.eq.s32.totalorder %s16, 0
    %p49 = por %p47, %p48
    %p50 = scmp.ne.s32.totalorder %s36, %s37
    %p51 = scmp.eq.s32.totalorder %s17, 1
    %p52 = por %p50, %p51
    %p54 = scmp.ne.s32.totalorder %s37, %s53
    %p55 = scmp.eq.s32.totalorder %s17, 0
    %p56 = por %p54, %p55
    %s58 = sadd.s32 %s57, 1
    %p61 = scmp.eq.s32.totalorder %s11, 1
    %p62 = scmp.ne.s32.totalorder %s57, %s59
    %p63 = scmp.eq.s32.totalorder %s11, 0
    %p64 = por %p62, %p63
    %p65 = scmp.ne.s32.totalorder %s57, %s59
    %p66 = scmp.eq.s32.totalorder %s16, 1
    %p67 = por %p65, %p66
    %p68 = scmp.ne.s32.totalorder %s59, %s60
    %p69 = scmp.eq.s32.totalorder %s16, 0
    %p70 = por %p68, %p69
    %p71 = scmp.ne.s32.totalorder %s59, %s60
    %p72 = scmp.eq.s32.totalorder %s17, 1
    %p73 = por %p71, %p72
    %p75 = scmp.ne.s32.totalorder %s60, %s74
    %p76 = scmp.eq.s32.totalorder %s17, 0
    %p77 = por %p75, %p76
    %s79 = sadd.s32 %s78, 1
    %p82 = scmp.eq.s32.totalorder %s11, 1
    %p83 = scmp.ne.s32.totalorder %s78, %s80
    %p84 = scmp.eq.s32.totalorder %s11, 0
    %p85 = por %p83, %p84
    %p86 = scmp.ne.s32.totalorder %s78, %s80
    %p87 = scmp.eq.s32.totalorder %s16, 1
    %p88 = por %p86, %p87
    %p89 = scmp.ne.s32.totalorder %s80, %s81
    %p90 = scmp.eq.s32.totalorder %s16, 0
    %p91 = por %p89, %p90
    %p92 = scmp.ne.s32.totalorder %s80, %s81
    %p93 = scmp.eq.s32.totalorder %s17, 1
    %p94 = por %p92, %p93
    %p96 = scmp.ne.s32.totalorder %s81, %s95
    %p97 = scmp.eq.s32.totalorder %s17, 0
    %p98 = por %p96, %p97
    %s100 = sadd.s32 %s99, 1
    %p103 = scmp.eq.s32.totalorder %s11, 1
    %p104 = scmp.ne.s32.totalorder %s99, %s101
    %p105 = scmp.eq.s32.totalorder %s11, 0
    %p106 = por %p104, %p105
    %p107 = scmp.ne.s32.totalorder %s99, %s101
    %p108 = scmp.eq.s32.totalorder %s16, 1
    %p109 = por %p107, %p108
    %p110 = scmp.ne.s32.totalorder %s101, %s102
    %p111 = scmp.eq.s32.totalorder %s16, 0
    %p112 = por %p110, %p111
    %p113 = scmp.ne.s32.totalorder %s101, %s102
    %p114 = scmp.eq.s32.totalorder %s17, 1
    %p115 = por %p113, %p114
    %p117 = scmp.ne.s32.totalorder %s102, %s116
    %p118 = scmp.eq.s32.totalorder %s17, 0
    %p119 = por %p117, %p118
    %s121 = sadd.s32 %s120, 1
    %p124 = scmp.eq.s32.totalorder %s11, 1
    %p125 = scmp.ne.s32.totalorder %s120, %s122
    %p126 = scmp.eq.s32.totalorder %s11, 0
    %p127 = por %p125, %p126
    %p128 = scmp.ne.s32.totalorder %s120, %s122
    %p129 = scmp.eq.s32.totalorder %s16, 1
    %p130 = por %p128, %p129
    %p131 = scmp.ne.s32.totalorder %s122, %s123
    %p132 = scmp.eq.s32.totalorder %s16, 0
    %p133 = por %p131, %p132
    %p134 = scmp.ne.s32.totalorder %s122, %s123
    %p135 = scmp.eq.s32.totalorder %s17, 1
    %p136 = por %p134, %p135
    %p138 = scmp.ne.s32.totalorder %s123, %s137
    %p139 = scmp.eq.s32.totalorder %s17, 0
    %p140 = por %p138, %p139
    %s141 = ssub.s32 %s18, %s30
    %s142 = ssub.s32 %s19, %s26
    %s143 = sor.u32 %s141, %s142
    %p144 = scmp.eq.s32.totalorder %s143, 0
    %s146 = sadd.s32 %s145, 1
    %s147 = scalar_select %p144, %s145, %s146
    %p150 = pneg %p144
    %p151 = scmp.eq.s32.totalorder %s11, 1
    %p152 = por %p150, %p151
    %p153 = scmp.ne.s32.totalorder %s145, %s148
    %p154 = scmp.eq.s32.totalorder %s11, 0
    %p155 = por %p153, %p154
    %p156 = scmp.ne.s32.totalorder %s145, %s148
    %p157 = scmp.eq.s32.totalorder %s16, 1
    %p158 = por %p156, %p157
    %p159 = scmp.ne.s32.totalorder %s148, %s149
    %p160 = scmp.eq.s32.totalorder %s16, 0
    %p161 = por %p159, %p160
    %p162 = scmp.ne.s32.totalorder %s148, %s149
    %p163 = scmp.eq.s32.totalorder %s17, 1
    %p164 = por %p162, %p163
    %p166 = scmp.ne.s32.totalorder %s149, %s165
    %p167 = scmp.eq.s32.totalorder %s17, 0
    %p168 = por %p166, %p167
    %p169 = scmp.le.s32.totalorder 1, %s11
    %p170 = scmp.lt.s32.totalorder %s11, 3
    %p171 = pnand %p169, %p170
    %p172 = pneg %p171
    // Predicated region
    $region9: #{decoder1d_forward.16} parent=5 // pred_check
      _
    $region10: #{decoder1d_forward.16} parent=5 // pred_check_branch
      %174 = sbr.rel (%p171) target = $region12
    $region11: #{decoder1d_forward.16} parent=5 // pred_region
      %s175 = ssub.s32 %s11, 1
      // Predicated region
      $region13: #{decoder1d_forward.16} parent=11 // pred_check
        %p176 = pneg %p70
      $region14: #{decoder1d_forward.16} parent=11 // pred_check_branch
        %178 = sbr.rel (%p176) target = $region16
      $region15: #{decoder1d_forward.16} parent=11 // pred_region
        _
      $region16: #{decoder1d_forward.16} parent=11 // pred_fallthru
        _
      // Predicated region
      $region17: #{decoder1d_forward.16} parent=11 // pred_check
        %p179 = pneg %p91
      $region18: #{decoder1d_forward.16} parent=11 // pred_check_branch
        %181 = sbr.rel (%p179) target = $region20
      $region19: #{decoder1d_forward.16} parent=11 // pred_region
        _
      $region20: #{decoder1d_forward.16} parent=11 // pred_fallthru
        _
      // Predicated region
      $region21: #{decoder1d_forward.16} parent=11 // pred_check
        %p182 = pneg %p112
      $region22: #{decoder1d_forward.16} parent=11 // pred_check_branch
        %184 = sbr.rel (%p182) target = $region24
      $region23: #{decoder1d_forward.16} parent=11 // pred_region
        _
      $region24: #{decoder1d_forward.16} parent=11 // pred_fallthru
        _
      // Predicated region
      $region25: #{decoder1d_forward.16} parent=11 // pred_check
        %p185 = pneg %p133
      $region26: #{decoder1d_forward.16} parent=11 // pred_check_branch
        %187 = sbr.rel (%p185) target = $region28
      $region27: #{decoder1d_forward.16} parent=11 // pred_region
        _
      $region28: #{decoder1d_forward.16} parent=11 // pred_fallthru
        _
    $region12: #{decoder1d_forward.16} parent=5 // pred_fallthru
      _
    %p188 = scmp.lt.s32.totalorder %s11, 2
    // Predicated region
    $region29: #{decoder1d_forward.16} parent=5 // pred_check
      %p189 = pneg %p188
    $region30: #{decoder1d_forward.16} parent=5 // pred_check_branch
      %191 = sbr.rel (%p189) target = $region32
    $region31: #{decoder1d_forward.16} parent=5 // pred_region
      // Predicated region
      $region33: #{decoder1d_forward.16} parent=31 // pred_check
        %p192 = pneg %p43
      $region34: #{decoder1d_forward.16} parent=31 // pred_check_branch
        %194 = sbr.rel (%p192) target = $region36
      $region35: #{decoder1d_forward.16} parent=31 // pred_region
        %p195 = scmp.lt.s32.totalorder %s18, 1
        %s196 = scalar_select %p195, %s18, 1
        %s197 = smul.addr %s196, 3
        %s198 = smul.addr %s197, 8
        %s199 = scalar_lea.vmem %s0, %s198
      $region36: #{decoder1d_forward.16} parent=31 // pred_fallthru
        _
    $region32: #{decoder1d_forward.16} parent=5 // pred_fallthru
      _
    %p200 = scmp.le.s32.totalorder 1, %s11
    %p201 = scmp.lt.s32.totalorder %s11, 3
    %p202 = pnand %p200, %p201
    %p203 = pneg %p202
    // Predicated region
    $region37: #{decoder1d_forward.16} parent=5 // pred_check
      _
    $region38: #{decoder1d_forward.16} parent=5 // pred_check_branch
      %205 = sbr.rel (%p202) target = $region40
    $region39: #{decoder1d_forward.16} parent=5 // pred_region
      %s206 = ssub.s32 %s11, 1
      %p207 = scmp.lt.s32.totalorder %s20, 1
      %s208 = scalar_select %p207, %s20, 1
      %s209 = smul.addr %s208, 3
      %s210 = smul.addr %s209, 8
      %s211 = scalar_lea.vmem %s0, %s210
      %p212 = pneg %p49
      %p213 = pneg %p46
      %p214 = pneg %p70
      %p215 = pneg %p67
      %p216 = pneg %p91
      %p217 = pneg %p88
      %p218 = pneg %p112
      %p219 = pneg %p109
      %p220 = pneg %p133
      %p221 = pneg %p130
      %p222 = pneg %p161
      %p223 = pneg %p158
      %s224 = smul.u32 2, %s21
      %p225 = scmp.lt.s32.totalorder %s20, 1
      %s226 = scalar_select %p225, %s20, 1
      %p227 = scmp.lt.s32.totalorder %s224, 1
      %s228 = scalar_select %p227, %s224, 1
      %s229 = smul.addr %s226, 2
      %s230 = sadd.s32 %s228, %s229
      %s231 = smul.addr %s230, 8
      %s232 = scalar_lea.vmem %s5, %s231
      %p233 = scmp.lt.s32.totalorder %s20, 1
      %s234 = scalar_select %p233, %s20, 1
      %s235 = smul.addr %s234, 3
      %s236 = smul.addr %s235, 8
      %s237 = scalar_lea.vmem %s0, %s236
      %s238 = smul.u32 2, %s21
      %p239 = scmp.lt.s32.totalorder %s20, 1
      %s240 = scalar_select %p239, %s20, 1
      %p241 = scmp.lt.s32.totalorder %s238, 1
      %s242 = scalar_select %p241, %s238, 1
      %s243 = smul.addr %s240, 2
      %s244 = sadd.s32 %s242, %s243
      %s245 = smul.addr %s244, 8
      %s246 = scalar_lea.vmem %s5, %s245
      %s247 = smul.u32 2, %s21
      %v248 = vld [vmem:[%s237] sm:$0xff]
      %v249 = vld [vmem:[%s237 + $0x8] sm:$0xff]
      %v250 = vld [vmem:[%s237 + $0x1] sm:$0xff]
      %v251 = vld [vmem:[%s237 + $0x9] sm:$0xff]
      %v252 = vld [vmem:[%s237 + $0x2] sm:$0xff]
      %v253 = vld [vmem:[%s237 + $0xa] sm:$0xff]
      %256 = vrot.lane.b32.xlu0 %v250, 32
      %v257 = vpop.permute.xlu0 %256
      %258 = vrot.lane.b32.xlu0 %v251, 32
      %v259 = vpop.permute.xlu0 %258
      %264 = vrot.lane.b32.xlu0 %v252, 64
      %v265 = vpop.permute.xlu0 %264
      %266 = vrot.lane.b32.xlu0 %v253, 64
      %v267 = vpop.permute.xlu0 %266
      %vm270 = vcmask 261120
      %v271 = vsel %vm270, %v248, %v257
      %v272 = vsel %vm270, %v249, %v259
      %vm273 = vcmask 523264
      %v274 = vsel %vm273, %v271, %v265
      %v275 = vsel %vm273, %v272, %v267
      %v276 = vmax.f32 %v274, 0.0
      %v277 = vmax.f32 %v275, 0.0
      %v278 = vld [vmem:[%s1] sm:$0xff]
      %v279 = vld [vmem:[%s1 + $0x8] sm:$0xff]
      %v280 = vld [vmem:[%s1 + $0x10] sm:$0xff]
      %v281 = vld [vmem:[%s1 + $0x18] sm:$0xff]
      %v282 = vld [vmem:[%s1 + $0x20] sm:$0xff]
      %v283 = vld [vmem:[%s1 + $0x28] sm:$0xff]
      %v284 = vld [vmem:[%s1 + $0x30] sm:$0xff]
      %v285 = vld [vmem:[%s1 + $0x38] sm:$0xff]
      %v286 = vld [vmem:[%s1 + $0x40] sm:$0xff]
      %v287 = vld [vmem:[%s1 + $0x48] sm:$0xff]
      %v288 = vld [vmem:[%s1 + $0x50] sm:$0xff]
      %v289 = vld [vmem:[%s1 + $0x58] sm:$0xff]
      %v290 = vld [vmem:[%s2] sm:$0x1]
      %v292 = vperm.slane %v290, 0
      %vm294 = vcmask 785408
      %v296 = vsel %vm294, %v276, 0
      %v299 = vsel %vm294, %v277, 0
      %301 = vmatpush.msra.mxu0 0.0
      %302 = vmatpush.msra.mxu0 0.0
      %303 = vmatpush.msra.mxu0 0.0
      %304 = vmatpush.msra.mxu0 0.0
      %305 = vmatpush.msra.mxu0 %v289
      %306 = vmatpush.msra.mxu0 %v288
      %307 = vmatpush.msra.mxu0 %v287
      %308 = vmatpush.msra.mxu0 %v286
      %309 = vmatpush.msra.mxu0 %v285
      %310 = vmatpush.msra.mxu0 %v284
      %311 = vmatpush.msra.mxu0 %v283
      %312 = vmatpush.msra.mxu0 %v282
      %313 = vmatpush.msra.mxu0 %v281
      %314 = vmatpush.msra.mxu0 %v280
      %315 = vmatpush.msra.mxu0 %v279
      %316 = vmatpush.msra.mxu0 %v278
      %317 = vmatmul.f32.gmra.mxu0 %v296
      %v318 = vpop.f32.mrf.mxu0
      %v319 = vadd.f32 %v292, %v318
      %320 = vmatmul.f32.gmra.mxu0 %v299
      %v321 = vpop.f32.mrf.mxu0
      %v322 = vadd.f32 %v292, %v321
      %323 = vdwg.mxu0
      %v324 = vmax.f32 %v319, 0.0
      %v325 = vmax.f32 %v322, 0.0
      %v326 = vld [vmem:[%s3] sm:$0xff]
      %v327 = vld [vmem:[%s3 + $0x8] sm:$0xff]
      %v328 = vld [vmem:[%s4] sm:$0x1]
      %v330 = vperm.slane %v328, 0
      %vm332 = vcmask 130048
      %v334 = vsel %vm332, %v324, 0
      %v337 = vsel %vm332, %v325, 0
      %339 = vmatpush.msra.mxu0 0.0
      %340 = vmatpush.msra.mxu0 0.0
      %341 = vmatpush.msra.mxu0 0.0
      %342 = vmatpush.msra.mxu0 0.0
      %343 = vmatpush.msra.mxu0 0.0
      %344 = vmatpush.msra.mxu0 0.0
      %345 = vmatpush.msra.mxu0 0.0
      %346 = vmatpush.msra.mxu0 0.0
      %347 = vmatpush.msra.mxu0 0.0
      %348 = vmatpush.msra.mxu0 0.0
      %349 = vmatpush.msra.mxu0 0.0
      %350 = vmatpush.msra.mxu0 0.0
      %351 = vmatpush.msra.mxu0 0.0
      %352 = vmatpush.msra.mxu0 0.0
      %353 = vmatpush.msra.mxu0 %v327
      %354 = vmatpush.msra.mxu0 %v326
      %355 = vmatmul.f32.gmra.mxu0 %v334
      %v356 = vpop.f32.mrf.mxu0
      %v357 = vadd.f32 %v330, %v356
      %358 = vmatmul.f32.gmra.mxu0 %v337
      %v359 = vpop.f32.mrf.mxu0
      %v360 = vadd.f32 %v330, %v359
      %361 = vdwg.mxu0
      %v362 = vadd.f32 %v357, %v250
      %v363 = vadd.f32 %v360, %v251
      %364 = vst.msk [vmem:[%s246] sm:$0xff] %vm270, %v362
      %365 = vst.msk [vmem:[%s246 + $0x8] sm:$0xff] %vm270, %v363
      %s366 = smul.u32 2, %s21
      %p367 = scmp.lt.s32.totalorder %s20, 1
      %s368 = scalar_select %p367, %s20, 1
      %p369 = scmp.lt.s32.totalorder %s366, 1
      %s370 = scalar_select %p369, %s366, 1
      %s371 = smul.addr %s368, 2
      %s372 = sadd.s32 %s370, %s371
      %s373 = smul.addr %s372, 8
      %s374 = scalar_lea.vmem %s5, %s373
      // Predicated region
      $region41: #{decoder1d_forward.16} parent=39 // pred_check
        %p375 = pneg %p158
      $region42: #{decoder1d_forward.16} parent=39 // pred_check_branch
        %377 = sbr.rel (%p375) target = $region44
      $region43: #{decoder1d_forward.16} parent=39 // pred_region
        %s378 = smul.u32 2, %s21
      $region44: #{decoder1d_forward.16} parent=39 // pred_fallthru
        _
    $region40: #{decoder1d_forward.16} parent=5 // pred_fallthru
      _
    %p379 = scmp.le.s32.totalorder 2, %s11
    // Predicated region
    $region45: #{decoder1d_forward.16} parent=5 // pred_check
      %p380 = pneg %p379
    $region46: #{decoder1d_forward.16} parent=5 // pred_check_branch
      %382 = sbr.rel (%p380) target = $region48
    $region47: #{decoder1d_forward.16} parent=5 // pred_region
      %s383 = ssub.s32 %s11, 2
      // Predicated region
      $region49: #{decoder1d_forward.16} parent=47 // pred_check
        %p384 = pneg %p164
      $region50: #{decoder1d_forward.16} parent=47 // pred_check_branch
        %386 = sbr.rel (%p384) target = $region52
      $region51: #{decoder1d_forward.16} parent=47 // pred_region
        %s387 = smul.u32 2, %s23
        %p388 = scmp.lt.s32.totalorder %s22, 1
        %s389 = scalar_select %p388, %s22, 1
        %p390 = scmp.lt.s32.totalorder %s387, 1
        %s391 = scalar_select %p390, %s387, 1
        %s392 = smul.addr %s389, 2
        %s393 = sadd.s32 %s391, %s392
        %s394 = smul.addr %s393, 8
        %s395 = scalar_lea.vmem %s5, %s394
      $region52: #{decoder1d_forward.16} parent=47 // pred_fallthru
        _
    $region48: #{decoder1d_forward.16} parent=5 // pred_fallthru
      _
  $region6: #{decoder1d_forward.16} parent=0 // loop_footer
    %s15 = sadd.s32 1, %s11
  $region7: #{decoder1d_forward.16} parent=0 // loop_footer_branch
    %10 = sbr.rel target = $region3
  $region8: #{decoder1d_forward.16} parent=0 // loop_exit
    _

// kernel: decoder1d_forward.15
$region0: #{decoder1d_forward.15}
  #allocation0 [shape = 'u32[]', space=smem, size = 0x4, offset = 0x4, fixed_abs, tag = 'smem constant byte address 0x4 - core index']
  #allocation1 [shape = 'u32[72,128]{1,0:T(1,128)}', space=vmem, size = 0x9000, scoped, tag = 'internal scratch']
  %s0 = inlined_call_operand.vmem [shape: f32[2,18,40], index: 0, kind: input, shape index: {}]
  %s1 = inlined_call_operand.vmem [shape: f32[120,32], index: 1, kind: input, shape index: {}]
  %s2 = inlined_call_operand.vmem [shape: f32[1,32], index: 2, kind: input, shape index: {}]
  %s3 = inlined_call_operand.vmem [shape: f32[2,16,32], index: 3, kind: output, shape index: {}]
  %s4 = sld [smem:[#allocation0]]
  $region45: #{decoder1d_forward.15} parent=0
    _
  %s6 = ssub.s32 1, %s4
  %s7 = scalar_select 0, %s6, %s4
  loop: start=0, step=1, limit=4
  $region2: #{decoder1d_forward.15} parent=0 // loop_pre_header
    _
  $region3: #{decoder1d_forward.15} parent=0 // loop_header
    %s9 = sphi 0, %s13
    %p10 = scmp.ge.s32.totalorder %s9, 4
    %s16 = sphi 0, %s28
    %s17 = sphi 0, %s24
    %s18 = sphi 0, %s16
    %s19 = sphi 0, %s17
    %s20 = sphi 0, %s18
    %s21 = sphi 0, %s19
    %s31 = sphi 0, %s33
    %s34 = sphi 0, %s31
    %s35 = sphi 0, %s34
    %s51 = sphi 0, %s35
    %s55 = sphi 0, %s55
    %s57 = sphi 0, %s55
    %s58 = sphi 0, %s57
    %s72 = sphi 0, %s58
    %s76 = sphi 0, %s76
    %s78 = sphi 0, %s76
    %s79 = sphi 0, %s78
    %s93 = sphi 0, %s79
    %s101 = sphi 0, %s103
    %s104 = sphi 0, %s101
    %s105 = sphi 0, %s104
    %s121 = sphi 0, %s105
  $region4: #{decoder1d_forward.15} parent=0 // loop_header_branch
    %12 = sbr.rel (%p10) target = $region8
  $region5: #{decoder1d_forward.15} parent=0 // loop_body
    %s14 = ssub.s32 %s9, 1
    %s15 = ssub.s32 %s9, 2
    %s22 = sadd.s32 1, %s17
    %p23 = scmp.ge.s32.totalorder %s22, 1
    %s24 = scalar_select %p23, 0, %s22
    %s25 = sadd.s32 1, %s16
    %s26 = scalar_select %p23, %s25, %s16
    %p27 = scmp.ge.s32.totalorder %s26, 2
    %s28 = scalar_select %p27, 0, %s26
    %s29 = ssub.s32 %s16, %s28
    %p30 = scmp.eq.s32.totalorder %s29, 0
    %s32 = sadd.s32 %s31, 1
    %s33 = scalar_select %p30, %s31, %s32
    %p36 = pneg %p30
    %p37 = scmp.eq.s32.totalorder %s9, 1
    %p38 = por %p36, %p37
    %p39 = scmp.ne.s32.totalorder %s31, %s34
    %p40 = scmp.eq.s32.totalorder %s9, 0
    %p41 = por %p39, %p40
    %p42 = scmp.ne.s32.totalorder %s31, %s34
    %p43 = scmp.eq.s32.totalorder %s14, 1
    %p44 = por %p42, %p43
    %p45 = scmp.ne.s32.totalorder %s34, %s35
    %p46 = scmp.eq.s32.totalorder %s14, 0
    %p47 = por %p45, %p46
    %p48 = scmp.ne.s32.totalorder %s34, %s35
    %p49 = scmp.eq.s32.totalorder %s15, 1
    %p50 = por %p48, %p49
    %p52 = scmp.ne.s32.totalorder %s35, %s51
    %p53 = scmp.eq.s32.totalorder %s15, 0
    %p54 = por %p52, %p53
    %s56 = sadd.s32 %s55, 1
    %p59 = scmp.eq.s32.totalorder %s9, 1
    %p60 = scmp.ne.s32.totalorder %s55, %s57
    %p61 = scmp.eq.s32.totalorder %s9, 0
    %p62 = por %p60, %p61
    %p63 = scmp.ne.s32.totalorder %s55, %s57
    %p64 = scmp.eq.s32.totalorder %s14, 1
    %p65 = por %p63, %p64
    %p66 = scmp.ne.s32.totalorder %s57, %s58
    %p67 = scmp.eq.s32.totalorder %s14, 0
    %p68 = por %p66, %p67
    %p69 = scmp.ne.s32.totalorder %s57, %s58
    %p70 = scmp.eq.s32.totalorder %s15, 1
    %p71 = por %p69, %p70
    %p73 = scmp.ne.s32.totalorder %s58, %s72
    %p74 = scmp.eq.s32.totalorder %s15, 0
    %p75 = por %p73, %p74
    %s77 = sadd.s32 %s76, 1
    %p80 = scmp.eq.s32.totalorder %s9, 1
    %p81 = scmp.ne.s32.totalorder %s76, %s78
    %p82 = scmp.eq.s32.totalorder %s9, 0
    %p83 = por %p81, %p82
    %p84 = scmp.ne.s32.totalorder %s76, %s78
    %p85 = scmp.eq.s32.totalorder %s14, 1
    %p86 = por %p84, %p85
    %p87 = scmp.ne.s32.totalorder %s78, %s79
    %p88 = scmp.eq.s32.totalorder %s14, 0
    %p89 = por %p87, %p88
    %p90 = scmp.ne.s32.totalorder %s78, %s79
    %p91 = scmp.eq.s32.totalorder %s15, 1
    %p92 = por %p90, %p91
    %p94 = scmp.ne.s32.totalorder %s79, %s93
    %p95 = scmp.eq.s32.totalorder %s15, 0
    %p96 = por %p94, %p95
    %s97 = ssub.s32 %s16, %s28
    %s98 = ssub.s32 %s17, %s24
    %s99 = sor.u32 %s97, %s98
    %p100 = scmp.eq.s32.totalorder %s99, 0
    %s102 = sadd.s32 %s101, 1
    %s103 = scalar_select %p100, %s101, %s102
    %p106 = pneg %p100
    %p107 = scmp.eq.s32.totalorder %s9, 1
    %p108 = por %p106, %p107
    %p109 = scmp.ne.s32.totalorder %s101, %s104
    %p110 = scmp.eq.s32.totalorder %s9, 0
    %p111 = por %p109, %p110
    %p112 = scmp.ne.s32.totalorder %s101, %s104
    %p113 = scmp.eq.s32.totalorder %s14, 1
    %p114 = por %p112, %p113
    %p115 = scmp.ne.s32.totalorder %s104, %s105
    %p116 = scmp.eq.s32.totalorder %s14, 0
    %p117 = por %p115, %p116
    %p118 = scmp.ne.s32.totalorder %s104, %s105
    %p119 = scmp.eq.s32.totalorder %s15, 1
    %p120 = por %p118, %p119
    %p122 = scmp.ne.s32.totalorder %s105, %s121
    %p123 = scmp.eq.s32.totalorder %s15, 0
    %p124 = por %p122, %p123
    %p125 = scmp.le.s32.totalorder 1, %s9
    %p126 = scmp.lt.s32.totalorder %s9, 3
    %p127 = pnand %p125, %p126
    %p128 = pneg %p127
    // Predicated region
    $region9: #{decoder1d_forward.15} parent=5 // pred_check
      _
    $region10: #{decoder1d_forward.15} parent=5 // pred_check_branch
      %130 = sbr.rel (%p127) target = $region12
    $region11: #{decoder1d_forward.15} parent=5 // pred_region
      %s131 = ssub.s32 %s9, 1
      // Predicated region
      $region13: #{decoder1d_forward.15} parent=11 // pred_check
        %p132 = pneg %p68
      $region14: #{decoder1d_forward.15} parent=11 // pred_check_branch
        %134 = sbr.rel (%p132) target = $region16
      $region15: #{decoder1d_forward.15} parent=11 // pred_region
        _
      $region16: #{decoder1d_forward.15} parent=11 // pred_fallthru
        _
      // Predicated region
      $region17: #{decoder1d_forward.15} parent=11 // pred_check
        %p135 = pneg %p89
      $region18: #{decoder1d_forward.15} parent=11 // pred_check_branch
        %137 = sbr.rel (%p135) target = $region20
      $region19: #{decoder1d_forward.15} parent=11 // pred_region
        _
      $region20: #{decoder1d_forward.15} parent=11 // pred_fallthru
        _
    $region12: #{decoder1d_forward.15} parent=5 // pred_fallthru
      _
    %p138 = scmp.lt.s32.totalorder %s9, 2
    // Predicated region
    $region21: #{decoder1d_forward.15} parent=5 // pred_check
      %p139 = pneg %p138
    $region22: #{decoder1d_forward.15} parent=5 // pred_check_branch
      %141 = sbr.rel (%p139) target = $region24
    $region23: #{decoder1d_forward.15} parent=5 // pred_region
      // Predicated region
      $region25: #{decoder1d_forward.15} parent=23 // pred_check
        %p142 = pneg %p41
      $region26: #{decoder1d_forward.15} parent=23 // pred_check_branch
        %144 = sbr.rel (%p142) target = $region28
      $region27: #{decoder1d_forward.15} parent=23 // pred_region
        %p145 = scmp.lt.s32.totalorder %s16, 1
        %s146 = scalar_select %p145, %s16, 1
        %s147 = smul.addr %s146, 3
        %s148 = smul.addr %s147, 8
        %s149 = scalar_lea.vmem %s0, %s148
      $region28: #{decoder1d_forward.15} parent=23 // pred_fallthru
        _
    $region24: #{decoder1d_forward.15} parent=5 // pred_fallthru
      _
    %p150 = scmp.le.s32.totalorder 1, %s9
    %p151 = scmp.lt.s32.totalorder %s9, 3
    %p152 = pnand %p150, %p151
    %p153 = pneg %p152
    // Predicated region
    $region29: #{decoder1d_forward.15} parent=5 // pred_check
      _
    $region30: #{decoder1d_forward.15} parent=5 // pred_check_branch
      %155 = sbr.rel (%p152) target = $region32
    $region31: #{decoder1d_forward.15} parent=5 // pred_region
      %s156 = ssub.s32 %s9, 1
      %p157 = scmp.lt.s32.totalorder %s18, 1
      %s158 = scalar_select %p157, %s18, 1
      %s159 = smul.addr %s158, 3
      %s160 = smul.addr %s159, 8
      %s161 = scalar_lea.vmem %s0, %s160
      %p162 = pneg %p47
      %p163 = pneg %p44
      %p164 = pneg %p68
      %p165 = pneg %p65
      %p166 = pneg %p89
      %p167 = pneg %p86
      %p168 = pneg %p117
      %p169 = pneg %p114
      %s170 = smul.u32 2, %s19
      %p171 = scmp.lt.s32.totalorder %s18, 1
      %s172 = scalar_select %p171, %s18, 1
      %p173 = scmp.lt.s32.totalorder %s170, 1
      %s174 = scalar_select %p173, %s170, 1
      %s175 = smul.addr %s172, 2
      %s176 = sadd.s32 %s174, %s175
      %s177 = smul.addr %s176, 8
      %s178 = scalar_lea.vmem %s3, %s177
      %p179 = scmp.lt.s32.totalorder %s18, 1
      %s180 = scalar_select %p179, %s18, 1
      %s181 = smul.addr %s180, 3
      %s182 = smul.addr %s181, 8
      %s183 = scalar_lea.vmem %s0, %s182
      %s184 = smul.u32 2, %s19
      %p185 = scmp.lt.s32.totalorder %s18, 1
      %s186 = scalar_select %p185, %s18, 1
      %p187 = scmp.lt.s32.totalorder %s184, 1
      %s188 = scalar_select %p187, %s184, 1
      %s189 = smul.addr %s186, 2
      %s190 = sadd.s32 %s188, %s189
      %s191 = smul.addr %s190, 8
      %s192 = scalar_lea.vmem %s3, %s191
      %s193 = smul.u32 2, %s19
      %v194 = vld [vmem:[%s183] sm:$0xff]
      %v195 = vld [vmem:[%s183 + $0x8] sm:$0xff]
      %v196 = vld [vmem:[%s183 + $0x1] sm:$0xff]
      %v197 = vld [vmem:[%s183 + $0x9] sm:$0xff]
      %v198 = vld [vmem:[%s183 + $0x2] sm:$0xff]
      %v199 = vld [vmem:[%s183 + $0xa] sm:$0xff]
      %202 = vrot.lane.b32.xlu0 %v196, 40
      %v203 = vpop.permute.xlu0 %202
      %204 = vrot.lane.b32.xlu0 %v197, 40
      %v205 = vpop.permute.xlu0 %204
      %210 = vrot.lane.b32.xlu0 %v198, 80
      %v211 = vpop.permute.xlu0 %210
      %212 = vrot.lane.b32.xlu0 %v199, 80
      %v213 = vpop.permute.xlu0 %212
      %vm216 = vcmask 326656
      %v217 = vsel %vm216, %v194, %v203
      %v218 = vsel %vm216, %v195, %v205
      %vm219 = vcmask 654336
      %v220 = vsel %vm219, %v217, %v211
      %v221 = vsel %vm219, %v218, %v213
      %v222 = vld [vmem:[%s1] sm:$0xff]
      %v223 = vld [vmem:[%s1 + $0x8] sm:$0xff]
      %v224 = vld [vmem:[%s1 + $0x10] sm:$0xff]
      %v225 = vld [vmem:[%s1 + $0x18] sm:$0xff]
      %v226 = vld [vmem:[%s1 + $0x20] sm:$0xff]
      %v227 = vld [vmem:[%s1 + $0x28] sm:$0xff]
      %v228 = vld [vmem:[%s1 + $0x30] sm:$0xff]
      %v229 = vld [vmem:[%s1 + $0x38] sm:$0xff]
      %v230 = vld [vmem:[%s1 + $0x40] sm:$0xff]
      %v231 = vld [vmem:[%s1 + $0x48] sm:$0xff]
      %v232 = vld [vmem:[%s1 + $0x50] sm:$0xff]
      %v233 = vld [vmem:[%s1 + $0x58] sm:$0xff]
      %v234 = vld [vmem:[%s1 + $0x60] sm:$0xff]
      %v235 = vld [vmem:[%s1 + $0x68] sm:$0xff]
      %v236 = vld [vmem:[%s1 + $0x70] sm:$0xff]
      %v237 = vld [vmem:[%s2] sm:$0x1]
      %v239 = vperm.slane %v237, 0
      %vm241 = vcmask 982016
      %v243 = vsel %vm241, %v220, 0
      %v246 = vsel %vm241, %v221, 0
      %248 = vmatpush.msra.mxu0 0.0
      %249 = vmatpush.msra.mxu0 %v236
      %250 = vmatpush.msra.mxu0 %v235
      %251 = vmatpush.msra.mxu0 %v234
      %252 = vmatpush.msra.mxu0 %v233
      %253 = vmatpush.msra.mxu0 %v232
      %254 = vmatpush.msra.mxu0 %v231
      %255 = vmatpush.msra.mxu0 %v230
      %256 = vmatpush.msra.mxu0 %v229
      %257 = vmatpush.msra.mxu0 %v228
      %258 = vmatpush.msra.mxu0 %v227
      %259 = vmatpush.msra.mxu0 %v226
      %260 = vmatpush.msra.mxu0 %v225
      %261 = vmatpush.msra.mxu0 %v224
      %262 = vmatpush.msra.mxu0 %v223
      %263 = vmatpush.msra.mxu0 %v222
      %264 = vmatmul.f32.gmra.mxu0 %v243
      %v265 = vpop.f32.mrf.mxu0
      %v266 = vadd.f32 %v239, %v265
      %267 = vmatmul.f32.gmra.mxu0 %v246
      %v268 = vpop.f32.mrf.mxu0
      %v269 = vadd.f32 %v239, %v268
      %270 = vdwg.mxu0
      %vm271 = vcmask 261120
      %272 = vst.msk [vmem:[%s192] sm:$0xff] %vm271, %v266
      %273 = vst.msk [vmem:[%s192 + $0x8] sm:$0xff] %vm271, %v269
      %s274 = smul.u32 2, %s19
      %p275 = scmp.lt.s32.totalorder %s18, 1
      %s276 = scalar_select %p275, %s18, 1
      %p277 = scmp.lt.s32.totalorder %s274, 1
      %s278 = scalar_select %p277, %s274, 1
      %s279 = smul.addr %s276, 2
      %s280 = sadd.s32 %s278, %s279
      %s281 = smul.addr %s280, 8
      %s282 = scalar_lea.vmem %s3, %s281
      // Predicated region
      $region33: #{decoder1d_forward.15} parent=31 // pred_check
        %p283 = pneg %p114
      $region34: #{decoder1d_forward.15} parent=31 // pred_check_branch
        %285 = sbr.rel (%p283) target = $region36
      $region35: #{decoder1d_forward.15} parent=31 // pred_region
        %s286 = smul.u32 2, %s19
      $region36: #{decoder1d_forward.15} parent=31 // pred_fallthru
        _
    $region32: #{decoder1d_forward.15} parent=5 // pred_fallthru
      _
    %p287 = scmp.le.s32.totalorder 2, %s9
    // Predicated region
    $region37: #{decoder1d_forward.15} parent=5 // pred_check
      %p288 = pneg %p287
    $region38: #{decoder1d_forward.15} parent=5 // pred_check_branch
      %290 = sbr.rel (%p288) target = $region40
    $region39: #{decoder1d_forward.15} parent=5 // pred_region
      %s291 = ssub.s32 %s9, 2
      // Predicated region
      $region41: #{decoder1d_forward.15} parent=39 // pred_check
        %p292 = pneg %p120
      $region42: #{decoder1d_forward.15} parent=39 // pred_check_branch
        %294 = sbr.rel (%p292) target = $region44
      $region43: #{decoder1d_forward.15} parent=39 // pred_region
        %s295 = smul.u32 2, %s21
        %p296 = scmp.lt.s32.totalorder %s20, 1
        %s297 = scalar_select %p296, %s20, 1
        %p298 = scmp.lt.s32.totalorder %s295, 1
        %s299 = scalar_select %p298, %s295, 1
        %s300 = smul.addr %s297, 2
        %s301 = sadd.s32 %s299, %s300
        %s302 = smul.addr %s301, 8
        %s303 = scalar_lea.vmem %s3, %s302
      $region44: #{decoder1d_forward.15} parent=39 // pred_fallthru
        _
    $region40: #{decoder1d_forward.15} parent=5 // pred_fallthru
      _
  $region6: #{decoder1d_forward.15} parent=0 // loop_footer
    %s13 = sadd.s32 1, %s9
  $region7: #{decoder1d_forward.15} parent=0 // loop_footer_branch
    %8 = sbr.rel target = $region3
  $region8: #{decoder1d_forward.15} parent=0 // loop_exit
    _

// kernel: decoder1d_forward.18
$region0: #{decoder1d_forward.18}
  #allocation0 [shape = 'u32[]', space=smem, size = 0x4, offset = 0x4, fixed_abs, tag = 'smem constant byte address 0x4 - core index']
  #allocation1 [shape = 'u32[72,128]{1,0:T(1,128)}', space=vmem, size = 0x9000, scoped, tag = 'internal scratch']
  %s0 = inlined_call_operand.vmem [shape: f32[2,18,32], index: 0, kind: input, shape index: {}]
  %s1 = inlined_call_operand.vmem [shape: f32[96,32], index: 1, kind: input, shape index: {}]
  %s2 = inlined_call_operand.vmem [shape: f32[1,32], index: 2, kind: input, shape index: {}]
  %s3 = inlined_call_operand.vmem [shape: f32[2,16,32], index: 3, kind: output, shape index: {}]
  %s4 = sld [smem:[#allocation0]]
  $region45: #{decoder1d_forward.18} parent=0
    _
  %s6 = ssub.s32 1, %s4
  %s7 = scalar_select 0, %s6, %s4
  loop: start=0, step=1, limit=4
  $region2: #{decoder1d_forward.18} parent=0 // loop_pre_header
    _
  $region3: #{decoder1d_forward.18} parent=0 // loop_header
    %s9 = sphi 0, %s13
    %p10 = scmp.ge.s32.totalorder %s9, 4
    %s16 = sphi 0, %s28
    %s17 = sphi 0, %s24
    %s18 = sphi 0, %s16
    %s19 = sphi 0, %s17
    %s20 = sphi 0, %s18
    %s21 = sphi 0, %s19
    %s31 = sphi 0, %s33
    %s34 = sphi 0, %s31
    %s35 = sphi 0, %s34
    %s51 = sphi 0, %s35
    %s55 = sphi 0, %s55
    %s57 = sphi 0, %s55
    %s58 = sphi 0, %s57
    %s72 = sphi 0, %s58
    %s76 = sphi 0, %s76
    %s78 = sphi 0, %s76
    %s79 = sphi 0, %s78
    %s93 = sphi 0, %s79
    %s101 = sphi 0, %s103
    %s104 = sphi 0, %s101
    %s105 = sphi 0, %s104
    %s121 = sphi 0, %s105
  $region4: #{decoder1d_forward.18} parent=0 // loop_header_branch
    %12 = sbr.rel (%p10) target = $region8
  $region5: #{decoder1d_forward.18} parent=0 // loop_body
    %s14 = ssub.s32 %s9, 1
    %s15 = ssub.s32 %s9, 2
    %s22 = sadd.s32 1, %s17
    %p23 = scmp.ge.s32.totalorder %s22, 1
    %s24 = scalar_select %p23, 0, %s22
    %s25 = sadd.s32 1, %s16
    %s26 = scalar_select %p23, %s25, %s16
    %p27 = scmp.ge.s32.totalorder %s26, 2
    %s28 = scalar_select %p27, 0, %s26
    %s29 = ssub.s32 %s16, %s28
    %p30 = scmp.eq.s32.totalorder %s29, 0
    %s32 = sadd.s32 %s31, 1
    %s33 = scalar_select %p30, %s31, %s32
    %p36 = pneg %p30
    %p37 = scmp.eq.s32.totalorder %s9, 1
    %p38 = por %p36, %p37
    %p39 = scmp.ne.s32.totalorder %s31, %s34
    %p40 = scmp.eq.s32.totalorder %s9, 0
    %p41 = por %p39, %p40
    %p42 = scmp.ne.s32.totalorder %s31, %s34
    %p43 = scmp.eq.s32.totalorder %s14, 1
    %p44 = por %p42, %p43
    %p45 = scmp.ne.s32.totalorder %s34, %s35
    %p46 = scmp.eq.s32.totalorder %s14, 0
    %p47 = por %p45, %p46
    %p48 = scmp.ne.s32.totalorder %s34, %s35
    %p49 = scmp.eq.s32.totalorder %s15, 1
    %p50 = por %p48, %p49
    %p52 = scmp.ne.s32.totalorder %s35, %s51
    %p53 = scmp.eq.s32.totalorder %s15, 0
    %p54 = por %p52, %p53
    %s56 = sadd.s32 %s55, 1
    %p59 = scmp.eq.s32.totalorder %s9, 1
    %p60 = scmp.ne.s32.totalorder %s55, %s57
    %p61 = scmp.eq.s32.totalorder %s9, 0
    %p62 = por %p60, %p61
    %p63 = scmp.ne.s32.totalorder %s55, %s57
    %p64 = scmp.eq.s32.totalorder %s14, 1
    %p65 = por %p63, %p64
    %p66 = scmp.ne.s32.totalorder %s57, %s58
    %p67 = scmp.eq.s32.totalorder %s14, 0
    %p68 = por %p66, %p67
    %p69 = scmp.ne.s32.totalorder %s57, %s58
    %p70 = scmp.eq.s32.totalorder %s15, 1
    %p71 = por %p69, %p70
    %p73 = scmp.ne.s32.totalorder %s58, %s72
    %p74 = scmp.eq.s32.totalorder %s15, 0
    %p75 = por %p73, %p74
    %s77 = sadd.s32 %s76, 1
    %p80 = scmp.eq.s32.totalorder %s9, 1
    %p81 = scmp.ne.s32.totalorder %s76, %s78
    %p82 = scmp.eq.s32.totalorder %s9, 0
    %p83 = por %p81, %p82
    %p84 = scmp.ne.s32.totalorder %s76, %s78
    %p85 = scmp.eq.s32.totalorder %s14, 1
    %p86 = por %p84, %p85
    %p87 = scmp.ne.s32.totalorder %s78, %s79
    %p88 = scmp.eq.s32.totalorder %s14, 0
    %p89 = por %p87, %p88
    %p90 = scmp.ne.s32.totalorder %s78, %s79
    %p91 = scmp.eq.s32.totalorder %s15, 1
    %p92 = por %p90, %p91
    %p94 = scmp.ne.s32.totalorder %s79, %s93
    %p95 = scmp.eq.s32.totalorder %s15, 0
    %p96 = por %p94, %p95
    %s97 = ssub.s32 %s16, %s28
    %s98 = ssub.s32 %s17, %s24
    %s99 = sor.u32 %s97, %s98
    %p100 = scmp.eq.s32.totalorder %s99, 0
    %s102 = sadd.s32 %s101, 1
    %s103 = scalar_select %p100, %s101, %s102
    %p106 = pneg %p100
    %p107 = scmp.eq.s32.totalorder %s9, 1
    %p108 = por %p106, %p107
    %p109 = scmp.ne.s32.totalorder %s101, %s104
    %p110 = scmp.eq.s32.totalorder %s9, 0
    %p111 = por %p109, %p110
    %p112 = scmp.ne.s32.totalorder %s101, %s104
    %p113 = scmp.eq.s32.totalorder %s14, 1
    %p114 = por %p112, %p113
    %p115 = scmp.ne.s32.totalorder %s104, %s105
    %p116 = scmp.eq.s32.totalorder %s14, 0
    %p117 = por %p115, %p116
    %p118 = scmp.ne.s32.totalorder %s104, %s105
    %p119 = scmp.eq.s32.totalorder %s15, 1
    %p120 = por %p118, %p119
    %p122 = scmp.ne.s32.totalorder %s105, %s121
    %p123 = scmp.eq.s32.totalorder %s15, 0
    %p124 = por %p122, %p123
    %p125 = scmp.le.s32.totalorder 1, %s9
    %p126 = scmp.lt.s32.totalorder %s9, 3
    %p127 = pnand %p125, %p126
    %p128 = pneg %p127
    // Predicated region
    $region9: #{decoder1d_forward.18} parent=5 // pred_check
      _
    $region10: #{decoder1d_forward.18} parent=5 // pred_check_branch
      %130 = sbr.rel (%p127) target = $region12
    $region11: #{decoder1d_forward.18} parent=5 // pred_region
      %s131 = ssub.s32 %s9, 1
      // Predicated region
      $region13: #{decoder1d_forward.18} parent=11 // pred_check
        %p132 = pneg %p68
      $region14: #{decoder1d_forward.18} parent=11 // pred_check_branch
        %134 = sbr.rel (%p132) target = $region16
      $region15: #{decoder1d_forward.18} parent=11 // pred_region
        _
      $region16: #{decoder1d_forward.18} parent=11 // pred_fallthru
        _
      // Predicated region
      $region17: #{decoder1d_forward.18} parent=11 // pred_check
        %p135 = pneg %p89
      $region18: #{decoder1d_forward.18} parent=11 // pred_check_branch
        %137 = sbr.rel (%p135) target = $region20
      $region19: #{decoder1d_forward.18} parent=11 // pred_region
        _
      $region20: #{decoder1d_forward.18} parent=11 // pred_fallthru
        _
    $region12: #{decoder1d_forward.18} parent=5 // pred_fallthru
      _
    %p138 = scmp.lt.s32.totalorder %s9, 2
    // Predicated region
    $region21: #{decoder1d_forward.18} parent=5 // pred_check
      %p139 = pneg %p138
    $region22: #{decoder1d_forward.18} parent=5 // pred_check_branch
      %141 = sbr.rel (%p139) target = $region24
    $region23: #{decoder1d_forward.18} parent=5 // pred_region
      // Predicated region
      $region25: #{decoder1d_forward.18} parent=23 // pred_check
        %p142 = pneg %p41
      $region26: #{decoder1d_forward.18} parent=23 // pred_check_branch
        %144 = sbr.rel (%p142) target = $region28
      $region27: #{decoder1d_forward.18} parent=23 // pred_region
        %p145 = scmp.lt.s32.totalorder %s16, 1
        %s146 = scalar_select %p145, %s16, 1
        %s147 = smul.addr %s146, 3
        %s148 = smul.addr %s147, 8
        %s149 = scalar_lea.vmem %s0, %s148
      $region28: #{decoder1d_forward.18} parent=23 // pred_fallthru
        _
    $region24: #{decoder1d_forward.18} parent=5 // pred_fallthru
      _
    %p150 = scmp.le.s32.totalorder 1, %s9
    %p151 = scmp.lt.s32.totalorder %s9, 3
    %p152 = pnand %p150, %p151
    %p153 = pneg %p152
    // Predicated region
    $region29: #{decoder1d_forward.18} parent=5 // pred_check
      _
    $region30: #{decoder1d_forward.18} parent=5 // pred_check_branch
      %155 = sbr.rel (%p152) target = $region32
    $region31: #{decoder1d_forward.18} parent=5 // pred_region
      %s156 = ssub.s32 %s9, 1
      %p157 = scmp.lt.s32.totalorder %s18, 1
      %s158 = scalar_select %p157, %s18, 1
      %s159 = smul.addr %s158, 3
      %s160 = smul.addr %s159, 8
      %s161 = scalar_lea.vmem %s0, %s160
      %p162 = pneg %p47
      %p163 = pneg %p44
      %p164 = pneg %p68
      %p165 = pneg %p65
      %p166 = pneg %p89
      %p167 = pneg %p86
      %p168 = pneg %p117
      %p169 = pneg %p114
      %s170 = smul.u32 2, %s19
      %p171 = scmp.lt.s32.totalorder %s18, 1
      %s172 = scalar_select %p171, %s18, 1
      %p173 = scmp.lt.s32.totalorder %s170, 1
      %s174 = scalar_select %p173, %s170, 1
      %s175 = smul.addr %s172, 2
      %s176 = sadd.s32 %s174, %s175
      %s177 = smul.addr %s176, 8
      %s178 = scalar_lea.vmem %s3, %s177
      %p179 = scmp.lt.s32.totalorder %s18, 1
      %s180 = scalar_select %p179, %s18, 1
      %s181 = smul.addr %s180, 3
      %s182 = smul.addr %s181, 8
      %s183 = scalar_lea.vmem %s0, %s182
      %s184 = smul.u32 2, %s19
      %p185 = scmp.lt.s32.totalorder %s18, 1
      %s186 = scalar_select %p185, %s18, 1
      %p187 = scmp.lt.s32.totalorder %s184, 1
      %s188 = scalar_select %p187, %s184, 1
      %s189 = smul.addr %s186, 2
      %s190 = sadd.s32 %s188, %s189
      %s191 = smul.addr %s190, 8
      %s192 = scalar_lea.vmem %s3, %s191
      %s193 = smul.u32 2, %s19
      %v194 = vld [vmem:[%s183] sm:$0xff]
      %v195 = vld [vmem:[%s183 + $0x8] sm:$0xff]
      %v196 = vld [vmem:[%s183 + $0x1] sm:$0xff]
      %v197 = vld [vmem:[%s183 + $0x9] sm:$0xff]
      %v198 = vld [vmem:[%s183 + $0x2] sm:$0xff]
      %v199 = vld [vmem:[%s183 + $0xa] sm:$0xff]
      %202 = vrot.lane.b32.xlu0 %v196, 32
      %v203 = vpop.permute.xlu0 %202
      %204 = vrot.lane.b32.xlu0 %v197, 32
      %v205 = vpop.permute.xlu0 %204
      %210 = vrot.lane.b32.xlu0 %v198, 64
      %v211 = vpop.permute.xlu0 %210
      %212 = vrot.lane.b32.xlu0 %v199, 64
      %v213 = vpop.permute.xlu0 %212
      %vm216 = vcmask 261120
      %v217 = vsel %vm216, %v194, %v203
      %v218 = vsel %vm216, %v195, %v205
      %vm219 = vcmask 523264
      %v220 = vsel %vm219, %v217, %v211
      %v221 = vsel %vm219, %v218, %v213
      %v222 = vld [vmem:[%s1] sm:$0xff]
      %v223 = vld [vmem:[%s1 + $0x8] sm:$0xff]
      %v224 = vld [vmem:[%s1 + $0x10] sm:$0xff]
      %v225 = vld [vmem:[%s1 + $0x18] sm:$0xff]
      %v226 = vld [vmem:[%s1 + $0x20] sm:$0xff]
      %v227 = vld [vmem:[%s1 + $0x28] sm:$0xff]
      %v228 = vld [vmem:[%s1 + $0x30] sm:$0xff]
      %v229 = vld [vmem:[%s1 + $0x38] sm:$0xff]
      %v230 = vld [vmem:[%s1 + $0x40] sm:$0xff]
      %v231 = vld [vmem:[%s1 + $0x48] sm:$0xff]
      %v232 = vld [vmem:[%s1 + $0x50] sm:$0xff]
      %v233 = vld [vmem:[%s1 + $0x58] sm:$0xff]
      %v234 = vld [vmem:[%s2] sm:$0x1]
      %v236 = vperm.slane %v234, 0
      %vm238 = vcmask 785408
      %v240 = vsel %vm238, %v220, 0
      %v243 = vsel %vm238, %v221, 0
      %245 = vmatpush.msra.mxu0 0.0
      %246 = vmatpush.msra.mxu0 0.0
      %247 = vmatpush.msra.mxu0 0.0
      %248 = vmatpush.msra.mxu0 0.0
      %249 = vmatpush.msra.mxu0 %v233
      %250 = vmatpush.msra.mxu0 %v232
      %251 = vmatpush.msra.mxu0 %v231
      %252 = vmatpush.msra.mxu0 %v230
      %253 = vmatpush.msra.mxu0 %v229
      %254 = vmatpush.msra.mxu0 %v228
      %255 = vmatpush.msra.mxu0 %v227
      %256 = vmatpush.msra.mxu0 %v226
      %257 = vmatpush.msra.mxu0 %v225
      %258 = vmatpush.msra.mxu0 %v224
      %259 = vmatpush.msra.mxu0 %v223
      %260 = vmatpush.msra.mxu0 %v222
      %261 = vmatmul.f32.gmra.mxu0 %v240
      %v262 = vpop.f32.mrf.mxu0
      %v263 = vadd.f32 %v236, %v262
      %264 = vmatmul.f32.gmra.mxu0 %v243
      %v265 = vpop.f32.mrf.mxu0
      %v266 = vadd.f32 %v236, %v265
      %267 = vdwg.mxu0
      %v268 = vmax.f32 %v263, 0.0
      %v269 = vmax.f32 %v266, 0.0
      %270 = vst.msk [vmem:[%s192] sm:$0xff] %vm216, %v268
      %271 = vst.msk [vmem:[%s192 + $0x8] sm:$0xff] %vm216, %v269
      %s272 = smul.u32 2, %s19
      %p273 = scmp.lt.s32.totalorder %s18, 1
      %s274 = scalar_select %p273, %s18, 1
      %p275 = scmp.lt.s32.totalorder %s272, 1
      %s276 = scalar_select %p275, %s272, 1
      %s277 = smul.addr %s274, 2
      %s278 = sadd.s32 %s276, %s277
      %s279 = smul.addr %s278, 8
      %s280 = scalar_lea.vmem %s3, %s279
      // Predicated region
      $region33: #{decoder1d_forward.18} parent=31 // pred_check
        %p281 = pneg %p114
      $region34: #{decoder1d_forward.18} parent=31 // pred_check_branch
        %283 = sbr.rel (%p281) target = $region36
      $region35: #{decoder1d_forward.18} parent=31 // pred_region
        %s284 = smul.u32 2, %s19
      $region36: #{decoder1d_forward.18} parent=31 // pred_fallthru
        _
    $region32: #{decoder1d_forward.18} parent=5 // pred_fallthru
      _
    %p285 = scmp.le.s32.totalorder 2, %s9
    // Predicated region
    $region37: #{decoder1d_forward.18} parent=5 // pred_check
      %p286 = pneg %p285
    $region38: #{decoder1d_forward.18} parent=5 // pred_check_branch
      %288 = sbr.rel (%p286) target = $region40
    $region39: #{decoder1d_forward.18} parent=5 // pred_region
      %s289 = ssub.s32 %s9, 2
      // Predicated region
      $region41: #{decoder1d_forward.18} parent=39 // pred_check
        %p290 = pneg %p120
      $region42: #{decoder1d_forward.18} parent=39 // pred_check_branch
        %292 = sbr.rel (%p290) target = $region44
      $region43: #{decoder1d_forward.18} parent=39 // pred_region
        %s293 = smul.u32 2, %s21
        %p294 = scmp.lt.s32.totalorder %s20, 1
        %s295 = scalar_select %p294, %s20, 1
        %p296 = scmp.lt.s32.totalorder %s293, 1
        %s297 = scalar_select %p296, %s293, 1
        %s298 = smul.addr %s295, 2
        %s299 = sadd.s32 %s297, %s298
        %s300 = smul.addr %s299, 8
        %s301 = scalar_lea.vmem %s3, %s300
      $region44: #{decoder1d_forward.18} parent=39 // pred_fallthru
        _
    $region40: #{decoder1d_forward.18} parent=5 // pred_fallthru
      _
  $region6: #{decoder1d_forward.18} parent=0 // loop_footer
    %s13 = sadd.s32 1, %s9
  $region7: #{decoder1d_forward.18} parent=0 // loop_footer_branch
    %8 = sbr.rel target = $region3
  $region8: #{decoder1d_forward.18} parent=0 // loop_exit
    _

// kernel: decoder1d_forward.19
$region0: #{decoder1d_forward.19}
  #allocation0 [shape = 'u32[]', space=smem, size = 0x4, offset = 0x4, fixed_abs, tag = 'smem constant byte address 0x4 - core index']
  #allocation1 [shape = 'u32[72,128]{1,0:T(1,128)}', space=vmem, size = 0x9000, scoped, tag = 'internal scratch']
  %s0 = inlined_call_operand.vmem [shape: f32[2,34,16], index: 0, kind: input, shape index: {}]
  %s1 = inlined_call_operand.vmem [shape: f32[48,8], index: 1, kind: input, shape index: {}]
  %s2 = inlined_call_operand.vmem [shape: f32[1,8], index: 2, kind: input, shape index: {}]
  %s3 = inlined_call_operand.vmem [shape: f32[2,32,8], index: 3, kind: output, shape index: {}]
  %s4 = sld [smem:[#allocation0]]
  $region45: #{decoder1d_forward.19} parent=0
    _
  %s6 = ssub.s32 1, %s4
  %s7 = scalar_select 0, %s6, %s4
  loop: start=0, step=1, limit=4
  $region2: #{decoder1d_forward.19} parent=0 // loop_pre_header
    _
  $region3: #{decoder1d_forward.19} parent=0 // loop_header
    %s9 = sphi 0, %s13
    %p10 = scmp.ge.s32.totalorder %s9, 4
    %s16 = sphi 0, %s28
    %s17 = sphi 0, %s24
    %s18 = sphi 0, %s16
    %s19 = sphi 0, %s17
    %s20 = sphi 0, %s18
    %s21 = sphi 0, %s19
    %s31 = sphi 0, %s33
    %s34 = sphi 0, %s31
    %s35 = sphi 0, %s34
    %s51 = sphi 0, %s35
    %s55 = sphi 0, %s55
    %s57 = sphi 0, %s55
    %s58 = sphi 0, %s57
    %s72 = sphi 0, %s58
    %s76 = sphi 0, %s76
    %s78 = sphi 0, %s76
    %s79 = sphi 0, %s78
    %s93 = sphi 0, %s79
    %s101 = sphi 0, %s103
    %s104 = sphi 0, %s101
    %s105 = sphi 0, %s104
    %s121 = sphi 0, %s105
  $region4: #{decoder1d_forward.19} parent=0 // loop_header_branch
    %12 = sbr.rel (%p10) target = $region8
  $region5: #{decoder1d_forward.19} parent=0 // loop_body
    %s14 = ssub.s32 %s9, 1
    %s15 = ssub.s32 %s9, 2
    %s22 = sadd.s32 1, %s17
    %p23 = scmp.ge.s32.totalorder %s22, 1
    %s24 = scalar_select %p23, 0, %s22
    %s25 = sadd.s32 1, %s16
    %s26 = scalar_select %p23, %s25, %s16
    %p27 = scmp.ge.s32.totalorder %s26, 2
    %s28 = scalar_select %p27, 0, %s26
    %s29 = ssub.s32 %s16, %s28
    %p30 = scmp.eq.s32.totalorder %s29, 0
    %s32 = sadd.s32 %s31, 1
    %s33 = scalar_select %p30, %s31, %s32
    %p36 = pneg %p30
    %p37 = scmp.eq.s32.totalorder %s9, 1
    %p38 = por %p36, %p37
    %p39 = scmp.ne.s32.totalorder %s31, %s34
    %p40 = scmp.eq.s32.totalorder %s9, 0
    %p41 = por %p39, %p40
    %p42 = scmp.ne.s32.totalorder %s31, %s34
    %p43 = scmp.eq.s32.totalorder %s14, 1
    %p44 = por %p42, %p43
    %p45 = scmp.ne.s32.totalorder %s34, %s35
    %p46 = scmp.eq.s32.totalorder %s14, 0
    %p47 = por %p45, %p46
    %p48 = scmp.ne.s32.totalorder %s34, %s35
    %p49 = scmp.eq.s32.totalorder %s15, 1
    %p50 = por %p48, %p49
    %p52 = scmp.ne.s32.totalorder %s35, %s51
    %p53 = scmp.eq.s32.totalorder %s15, 0
    %p54 = por %p52, %p53
    %s56 = sadd.s32 %s55, 1
    %p59 = scmp.eq.s32.totalorder %s9, 1
    %p60 = scmp.ne.s32.totalorder %s55, %s57
    %p61 = scmp.eq.s32.totalorder %s9, 0
    %p62 = por %p60, %p61
    %p63 = scmp.ne.s32.totalorder %s55, %s57
    %p64 = scmp.eq.s32.totalorder %s14, 1
    %p65 = por %p63, %p64
    %p66 = scmp.ne.s32.totalorder %s57, %s58
    %p67 = scmp.eq.s32.totalorder %s14, 0
    %p68 = por %p66, %p67
    %p69 = scmp.ne.s32.totalorder %s57, %s58
    %p70 = scmp.eq.s32.totalorder %s15, 1
    %p71 = por %p69, %p70
    %p73 = scmp.ne.s32.totalorder %s58, %s72
    %p74 = scmp.eq.s32.totalorder %s15, 0
    %p75 = por %p73, %p74
    %s77 = sadd.s32 %s76, 1
    %p80 = scmp.eq.s32.totalorder %s9, 1
    %p81 = scmp.ne.s32.totalorder %s76, %s78
    %p82 = scmp.eq.s32.totalorder %s9, 0
    %p83 = por %p81, %p82
    %p84 = scmp.ne.s32.totalorder %s76, %s78
    %p85 = scmp.eq.s32.totalorder %s14, 1
    %p86 = por %p84, %p85
    %p87 = scmp.ne.s32.totalorder %s78, %s79
    %p88 = scmp.eq.s32.totalorder %s14, 0
    %p89 = por %p87, %p88
    %p90 = scmp.ne.s32.totalorder %s78, %s79
    %p91 = scmp.eq.s32.totalorder %s15, 1
    %p92 = por %p90, %p91
    %p94 = scmp.ne.s32.totalorder %s79, %s93
    %p95 = scmp.eq.s32.totalorder %s15, 0
    %p96 = por %p94, %p95
    %s97 = ssub.s32 %s16, %s28
    %s98 = ssub.s32 %s17, %s24
    %s99 = sor.u32 %s97, %s98
    %p100 = scmp.eq.s32.totalorder %s99, 0
    %s102 = sadd.s32 %s101, 1
    %s103 = scalar_select %p100, %s101, %s102
    %p106 = pneg %p100
    %p107 = scmp.eq.s32.totalorder %s9, 1
    %p108 = por %p106, %p107
    %p109 = scmp.ne.s32.totalorder %s101, %s104
    %p110 = scmp.eq.s32.totalorder %s9, 0
    %p111 = por %p109, %p110
    %p112 = scmp.ne.s32.totalorder %s101, %s104
    %p113 = scmp.eq.s32.totalorder %s14, 1
    %p114 = por %p112, %p113
    %p115 = scmp.ne.s32.totalorder %s104, %s105
    %p116 = scmp.eq.s32.totalorder %s14, 0
    %p117 = por %p115, %p116
    %p118 = scmp.ne.s32.totalorder %s104, %s105
    %p119 = scmp.eq.s32.totalorder %s15, 1
    %p120 = por %p118, %p119
    %p122 = scmp.ne.s32.totalorder %s105, %s121
    %p123 = scmp.eq.s32.totalorder %s15, 0
    %p124 = por %p122, %p123
    %p125 = scmp.le.s32.totalorder 1, %s9
    %p126 = scmp.lt.s32.totalorder %s9, 3
    %p127 = pnand %p125, %p126
    %p128 = pneg %p127
    // Predicated region
    $region9: #{decoder1d_forward.19} parent=5 // pred_check
      _
    $region10: #{decoder1d_forward.19} parent=5 // pred_check_branch
      %130 = sbr.rel (%p127) target = $region12
    $region11: #{decoder1d_forward.19} parent=5 // pred_region
      %s131 = ssub.s32 %s9, 1
      // Predicated region
      $region13: #{decoder1d_forward.19} parent=11 // pred_check
        %p132 = pneg %p68
      $region14: #{decoder1d_forward.19} parent=11 // pred_check_branch
        %134 = sbr.rel (%p132) target = $region16
      $region15: #{decoder1d_forward.19} parent=11 // pred_region
        _
      $region16: #{decoder1d_forward.19} parent=11 // pred_fallthru
        _
      // Predicated region
      $region17: #{decoder1d_forward.19} parent=11 // pred_check
        %p135 = pneg %p89
      $region18: #{decoder1d_forward.19} parent=11 // pred_check_branch
        %137 = sbr.rel (%p135) target = $region20
      $region19: #{decoder1d_forward.19} parent=11 // pred_region
        _
      $region20: #{decoder1d_forward.19} parent=11 // pred_fallthru
        _
    $region12: #{decoder1d_forward.19} parent=5 // pred_fallthru
      _
    %p138 = scmp.lt.s32.totalorder %s9, 2
    // Predicated region
    $region21: #{decoder1d_forward.19} parent=5 // pred_check
      %p139 = pneg %p138
    $region22: #{decoder1d_forward.19} parent=5 // pred_check_branch
      %141 = sbr.rel (%p139) target = $region24
    $region23: #{decoder1d_forward.19} parent=5 // pred_region
      // Predicated region
      $region25: #{decoder1d_forward.19} parent=23 // pred_check
        %p142 = pneg %p41
      $region26: #{decoder1d_forward.19} parent=23 // pred_check_branch
        %144 = sbr.rel (%p142) target = $region28
      $region27: #{decoder1d_forward.19} parent=23 // pred_region
        %p145 = scmp.lt.s32.totalorder %s16, 1
        %s146 = scalar_select %p145, %s16, 1
        %s147 = smul.addr %s146, 5
        %s148 = smul.addr %s147, 8
        %s149 = scalar_lea.vmem %s0, %s148
      $region28: #{decoder1d_forward.19} parent=23 // pred_fallthru
        _
    $region24: #{decoder1d_forward.19} parent=5 // pred_fallthru
      _
    %p150 = scmp.le.s32.totalorder 1, %s9
    %p151 = scmp.lt.s32.totalorder %s9, 3
    %p152 = pnand %p150, %p151
    %p153 = pneg %p152
    // Predicated region
    $region29: #{decoder1d_forward.19} parent=5 // pred_check
      _
    $region30: #{decoder1d_forward.19} parent=5 // pred_check_branch
      %155 = sbr.rel (%p152) target = $region32
    $region31: #{decoder1d_forward.19} parent=5 // pred_region
      %s156 = ssub.s32 %s9, 1
      %p157 = scmp.lt.s32.totalorder %s18, 1
      %s158 = scalar_select %p157, %s18, 1
      %s159 = smul.addr %s158, 5
      %s160 = smul.addr %s159, 8
      %s161 = scalar_lea.vmem %s0, %s160
      %p162 = pneg %p47
      %p163 = pneg %p44
      %p164 = pneg %p68
      %p165 = pneg %p65
      %p166 = pneg %p89
      %p167 = pneg %p86
      %p168 = pneg %p117
      %p169 = pneg %p114
      %s170 = smul.u32 4, %s19
      %p171 = scmp.lt.s32.totalorder %s18, 1
      %s172 = scalar_select %p171, %s18, 1
      %p173 = scmp.lt.s32.totalorder %s170, 3
      %s174 = scalar_select %p173, %s170, 3
      %s175 = smul.addr %s172, 4
      %s176 = sadd.s32 %s174, %s175
      %s177 = smul.addr %s176, 8
      %s178 = scalar_lea.vmem %s3, %s177
      %p179 = scmp.lt.s32.totalorder %s18, 1
      %s180 = scalar_select %p179, %s18, 1
      %s181 = smul.addr %s180, 5
      %s182 = smul.addr %s181, 8
      %s183 = scalar_lea.vmem %s0, %s182
      %s184 = smul.u32 4, %s19
      %p185 = scmp.lt.s32.totalorder %s18, 1
      %s186 = scalar_select %p185, %s18, 1
      %p187 = scmp.lt.s32.totalorder %s184, 3
      %s188 = scalar_select %p187, %s184, 3
      %s189 = smul.addr %s186, 4
      %s190 = sadd.s32 %s188, %s189
      %s191 = smul.addr %s190, 8
      %s192 = scalar_lea.vmem %s3, %s191
      %s193 = smul.u32 4, %s19
      %v194 = vld [vmem:[%s183] sm:$0xff]
      %v195 = vld [vmem:[%s183 + $0x8] sm:$0xff]
      %v196 = vld [vmem:[%s183 + $0x10] sm:$0xff]
      %v197 = vld [vmem:[%s183 + $0x18] sm:$0xff]
      %v198 = vld [vmem:[%s183 + $0x1] sm:$0xff]
      %v199 = vld [vmem:[%s183 + $0x9] sm:$0xff]
      %v200 = vld [vmem:[%s183 + $0x11] sm:$0xff]
      %v201 = vld [vmem:[%s183 + $0x19] sm:$0xff]
      %v202 = vld [vmem:[%s183 + $0x2] sm:$0xff]
      %v203 = vld [vmem:[%s183 + $0xa] sm:$0xff]
      %v204 = vld [vmem:[%s183 + $0x12] sm:$0xff]
      %v205 = vld [vmem:[%s183 + $0x1a] sm:$0xff]
      %210 = vrot.lane.b32.xlu0 %v198, 16
      %v211 = vpop.permute.xlu0 %210
      %212 = vrot.lane.b32.xlu0 %v199, 16
      %v213 = vpop.permute.xlu0 %212
      %214 = vrot.lane.b32.xlu0 %v200, 16
      %v215 = vpop.permute.xlu0 %214
      %216 = vrot.lane.b32.xlu0 %v201, 16
      %v217 = vpop.permute.xlu0 %216
      %226 = vrot.lane.b32.xlu0 %v202, 32
      %v227 = vpop.permute.xlu0 %226
      %228 = vrot.lane.b32.xlu0 %v203, 32
      %v229 = vpop.permute.xlu0 %228
      %230 = vrot.lane.b32.xlu0 %v204, 32
      %v231 = vpop.permute.xlu0 %230
      %232 = vrot.lane.b32.xlu0 %v205, 32
      %v233 = vpop.permute.xlu0 %232
      %vm238 = vcmask 130048
      %v239 = vsel %vm238, %v194, %v211
      %v240 = vsel %vm238, %v195, %v213
      %v241 = vsel %vm238, %v196, %v215
      %v242 = vsel %vm238, %v197, %v217
      %vm243 = vcmask 261120
      %v244 = vsel %vm243, %v239, %v227
      %v245 = vsel %vm243, %v240, %v229
      %v246 = vsel %vm243, %v241, %v231
      %v247 = vsel %vm243, %v242, %v233
      %v248 = vld [vmem:[%s1] sm:$0xff]
      %v249 = vld [vmem:[%s1 + $0x8] sm:$0xff]
      %v250 = vld [vmem:[%s1 + $0x10] sm:$0xff]
      %v251 = vld [vmem:[%s1 + $0x18] sm:$0xff]
      %v252 = vld [vmem:[%s1 + $0x20] sm:$0xff]
      %v253 = vld [vmem:[%s1 + $0x28] sm:$0xff]
      %v254 = vld [vmem:[%s2] sm:$0x1]
      %v256 = vperm.slane %v254, 0
      %vm258 = vcmask 392192
      %v260 = vsel %vm258, %v244, 0
      %v263 = vsel %vm258, %v245, 0
      %v266 = vsel %vm258, %v246, 0
      %v269 = vsel %vm258, %v247, 0
      %271 = vmatpush.msra.mxu0 0.0
      %272 = vmatpush.msra.mxu0 0.0
      %273 = vmatpush.msra.mxu0 0.0
      %274 = vmatpush.msra.mxu0 0.0
      %275 = vmatpush.msra.mxu0 0.0
      %276 = vmatpush.msra.mxu0 0.0
      %277 = vmatpush.msra.mxu0 0.0
      %278 = vmatpush.msra.mxu0 0.0
      %279 = vmatpush.msra.mxu0 0.0
      %280 = vmatpush.msra.mxu0 0.0
      %281 = vmatpush.msra.mxu0 %v253
      %282 = vmatpush.msra.mxu0 %v252
      %283 = vmatpush.msra.mxu0 %v251
      %284 = vmatpush.msra.mxu0 %v250
      %285 = vmatpush.msra.mxu0 %v249
      %286 = vmatpush.msra.mxu0 %v248
      %287 = vmatmul.f32.gmra.mxu0 %v260
      %v288 = vpop.f32.mrf.mxu0
      %v289 = vadd.f32 %v256, %v288
      %290 = vmatmul.f32.gmra.mxu0 %v263
      %v291 = vpop.f32.mrf.mxu0
      %v292 = vadd.f32 %v256, %v291
      %293 = vmatmul.f32.gmra.mxu0 %v266
      %v294 = vpop.f32.mrf.mxu0
      %v295 = vadd.f32 %v256, %v294
      %296 = vmatmul.f32.gmra.mxu0 %v269
      %v297 = vpop.f32.mrf.mxu0
      %v298 = vadd.f32 %v256, %v297
      %299 = vdwg.mxu0
      %vm300 = vcmask 64512
      %301 = vst.msk [vmem:[%s192] sm:$0xff] %vm300, %v289
      %302 = vst.msk [vmem:[%s192 + $0x8] sm:$0xff] %vm300, %v292
      %303 = vst.msk [vmem:[%s192 + $0x10] sm:$0xff] %vm300, %v295
      %304 = vst.msk [vmem:[%s192 + $0x18] sm:$0xff] %vm300, %v298
      %s305 = smul.u32 4, %s19
      %p306 = scmp.lt.s32.totalorder %s18, 1
      %s307 = scalar_select %p306, %s18, 1
      %p308 = scmp.lt.s32.totalorder %s305, 3
      %s309 = scalar_select %p308, %s305, 3
      %s310 = smul.addr %s307, 4
      %s311 = sadd.s32 %s309, %s310
      %s312 = smul.addr %s311, 8
      %s313 = scalar_lea.vmem %s3, %s312
      // Predicated region
      $region33: #{decoder1d_forward.19} parent=31 // pred_check
        %p314 = pneg %p114
      $region34: #{decoder1d_forward.19} parent=31 // pred_check_branch
        %316 = sbr.rel (%p314) target = $region36
      $region35: #{decoder1d_forward.19} parent=31 // pred_region
        %s317 = smul.u32 4, %s19
      $region36: #{decoder1d_forward.19} parent=31 // pred_fallthru
        _
    $region32: #{decoder1d_forward.19} parent=5 // pred_fallthru
      _
    %p318 = scmp.le.s32.totalorder 2, %s9
    // Predicated region
    $region37: #{decoder1d_forward.19} parent=5 // pred_check
      %p319 = pneg %p318
    $region38: #{decoder1d_forward.19} parent=5 // pred_check_branch
      %321 = sbr.rel (%p319) target = $region40
    $region39: #{decoder1d_forward.19} parent=5 // pred_region
      %s322 = ssub.s32 %s9, 2
      // Predicated region
      $region41: #{decoder1d_forward.19} parent=39 // pred_check
        %p323 = pneg %p120
      $region42: #{decoder1d_forward.19} parent=39 // pred_check_branch
        %325 = sbr.rel (%p323) target = $region44
      $region43: #{decoder1d_forward.19} parent=39 // pred_region
        %s326 = smul.u32 4, %s21
        %p327 = scmp.lt.s32.totalorder %s20, 1
        %s328 = scalar_select %p327, %s20, 1
        %p329 = scmp.lt.s32.totalorder %s326, 3
        %s330 = scalar_select %p329, %s326, 3
        %s331 = smul.addr %s328, 4
        %s332 = sadd.s32 %s330, %s331
        %s333 = smul.addr %s332, 8
        %s334 = scalar_lea.vmem %s3, %s333
      $region44: #{decoder1d_forward.19} parent=39 // pred_fallthru
        _
    $region40: #{decoder1d_forward.19} parent=5 // pred_fallthru
      _
  $region6: #{decoder1d_forward.19} parent=0 // loop_footer
    %s13 = sadd.s32 1, %s9
  $region7: #{decoder1d_forward.19} parent=0 // loop_footer_branch
    %8 = sbr.rel target = $region3
  $region8: #{decoder1d_forward.19} parent=0 // loop_exit
    _

</llo_original>
